<compile_context>
chip_gen: v5e
topology: v5e:2x2
jax: 0.10.0
libtpu: 0.0.40
codegen_flags: <defaults>
</compile_context>

<pallas_src>
import jax
import jax.numpy as jnp
from jax.experimental import pallas as pl
from jax.experimental.pallas import tpu as pltpu


# ----------------------------- Pallas kernels ------------------------------

def _conv1_pool_kernel(taps_ref, w_ref, b_ref, o_ref):
    """out = relu(max over 4 pooling taps of (tap @ w) + b); bf16 MXU, f32 acc."""
    w = w_ref[...]
    acc = jnp.dot(taps_ref[0], w, preferred_element_type=jnp.float32)
    for t in range(1, 4):
        acc = jnp.maximum(
            acc, jnp.dot(taps_ref[t], w, preferred_element_type=jnp.float32))
    o_ref[...] = jnp.maximum(acc + b_ref[...], 0.0).astype(o_ref.dtype)


def _conv2_fc_kernel(a_ref, w2_ref, b2_ref, w1_ref, b1_ref,
                     w2f_ref, b2f_ref, w3f_ref, b3f_ref, o_ref):
    """Fused conv2(5x5) + bias + ReLU + 2x2 max-pool + fc1(relu) + fc2(relu) + fc3.

    a_ref: (144*B, 8) f32 conv1 pooled output, rows ordered (p, q, r, c, b)
           where the conv1 pooled pixel is (b, 2r+p, 2c+q).
    """
    B = o_ref.shape[0]
    RW = 6 * B            # rows per r inside one (p, q) parity block
    PQ = 36 * B           # rows per (p, q) parity block
    a = a_ref[...]        # (144*B, 8) f32

    # 36 distinct shifted patches P[s][t]; rows ordered (ph, pw, b), cols cin.
    # P[s][t][(ph,pw,b)] == conv1_pooled[b, 2*ph + s, 2*pw + t, :]
    def patch(s, t):
        p, q, rs, cs = s % 2, t % 2, s // 2, t // 2
        base = (p * 2 + q) * PQ + cs * B
        rows = [a[base + (rs + ph) * RW: base + (rs + ph) * RW + 4 * B, :]
                for ph in range(4)]
        return jnp.concatenate(rows, axis=0).astype(jnp.bfloat16)   # (16B, 8)

    P = [[patch(s, t) for t in range(6)] for s in range(6)]

    # conv2 with the 2x2/2 max-pool folded in: one f32 accumulator per pooling
    # tap; for each kernel offset the 4 tap patches are stacked along M so a
    # single MXU dot serves all taps (25 dots total).
    accs = [jnp.zeros((16 * B, 16), jnp.float32) for _ in range(4)]
    for ki in range(5):
        for kj in range(5):
            lhs = jnp.concatenate(
                [P[di + ki][dj + kj] for di in (0, 1) for dj in (0, 1)], axis=0)
            res = jnp.dot(lhs, w2_ref[ki * 5 + kj],
                          preferred_element_type=jnp.float32)       # (64B, 16)
            for t in range(4):
                accs[t] = accs[t] + res[t * 16 * B:(t + 1) * 16 * B, :]
    pooled = jnp.maximum(jnp.maximum(accs[0], accs[1]),
                         jnp.maximum(accs[2], accs[3]))
    pooled = jnp.maximum(pooled + b2_ref[...], 0.0)                 # (16B, 16) f32

    # fc1: contraction over (pos, cin) done as 16 contiguous row-block matmuls
    # (rows are (pos, b)), so no sublane->lane relayout is ever needed.
    h = jnp.zeros((B, w1_ref.shape[2]), jnp.float32)
    for pos in range(16):
        h += jnp.dot(pooled[pos * B:(pos + 1) * B, :].astype(jnp.bfloat16),
                     w1_ref[pos], preferred_element_type=jnp.float32)
    h = jnp.maximum(h + b1_ref[...], 0.0).astype(jnp.bfloat16)      # (B, 128)

    # fc2 + fc3 (fc3 output padded to 128 lanes for an unmasked store).
    h = jnp.dot(h, w2f_ref[...], preferred_element_type=jnp.float32)
    h = jnp.maximum(h + b2f_ref[...], 0.0).astype(jnp.bfloat16)
    o = jnp.dot(h, w3f_ref[...], preferred_element_type=jnp.float32) + b3f_ref[...]
    o_ref[...] = o.astype(o_ref.dtype)


# ------------------------------ wrappers ------------------------------------

def conv1_relu_pool(x_img, w, b):
    """Fused conv1(5x5) + bias + ReLU + 2x2/2 max-pool.

    x_img: (B, 28, 28) f32 single-channel input.
    Returns (144*B, 8) f32 with rows ordered (p, q, r, c, b) where the pooled
    conv1 pixel is (b, 2r+p, 2c+q) -- the layout the fused conv2+fc kernel
    consumes with contiguous static slices only.
    """
    B, H, W = x_img.shape
    OH, OW = H - 4, W - 4
    assert OH % 4 == 0 and OW % 4 == 0

    # im2col (XLA glue, tiny at B=2), K = 25 -> 32.
    cols = [x_img[:, ki:ki + OH, kj:kj + OW] for ki in range(5) for kj in range(5)]
    patches = jnp.stack(cols, axis=-1)                              # (B,24,24,25)
    patches = jnp.pad(patches, ((0, 0), (0, 0), (0, 0), (0, 7)))    # (B,24,24,32)
    K = patches.shape[-1]

    # 4 pooling taps, rows reordered to the parity-decomposed layout (p,q,r,c,b).
    taps = []
    for di in (0, 1):
        for dj in (0, 1):
            blk = [jnp.transpose(patches[:, 2 * p + di::4, 2 * q + dj::4, :],
                                 (1, 2, 0, 3))                      # (6,6,B,K)
                   for p in (0, 1) for q in (0, 1)]
            taps.append(jnp.stack(blk, axis=0).reshape(-1, K))      # (144*B, K)
    taps = jnp.stack(taps, axis=0).astype(jnp.bfloat16)             # (4,144*B,K)

    M = taps.shape[1]
    if M % 32 == 0:
        tm, steps = M // 2, 2          # 2 "parallel" steps -> both v7x TCs
    else:
        tm, steps = M, 1

    return pl.pallas_call(
        _conv1_pool_kernel,
        out_shape=jax.ShapeDtypeStruct((M, 8), jnp.float32),
        grid=(steps,),
        in_specs=[pl.BlockSpec((4, tm, K), lambda m: (0, m, 0)),
                  pl.BlockSpec((K, 8), lambda m: (0, 0)),
                  pl.BlockSpec((1, 8), lambda m: (0, 0))],
        out_specs=pl.BlockSpec((tm, 8), lambda m: (m, 0)),
        compiler_params=pltpu.CompilerParams(dimension_semantics=("parallel",)),
    )(taps, w, b)


def conv2_fc_forward(a_flat, kp, batch):
    """One pallas_call for conv2+ReLU+pool+fc1+fc2+fc3."""
    ins = [a_flat, kp["conv2_w"], kp["conv2_b"], kp["fc1_w"], kp["fc1_b"],
           kp["fc2_w"], kp["fc2_b"], kp["fc3_w"], kp["fc3_b"]]

    def fs(arr):
        zeros = (0,) * arr.ndim

        def imap(i):
            return zeros
        return pl.BlockSpec(arr.shape, imap)

    out = pl.pallas_call(
        _conv2_fc_kernel,
        out_shape=jax.ShapeDtypeStruct((batch, 128), jnp.float32),
        grid=(1,),
        in_specs=[fs(x) for x in ins],
        out_specs=pl.BlockSpec((batch, 128), lambda i: (0, 0)),
        compiler_params=pltpu.CompilerParams(dimension_semantics=("arbitrary",)),
    )(*ins)
    return out[:, :10]


# --------------------------- parameter repack --------------------------------

def prepare_params(p):
    """One-time repack of torch-layout params into packed bf16 kernel layouts."""
    # conv1 (6,1,5,5) -> (32, 8): rows (ki,kj) padded 25->32, cout 6->8.
    w = jnp.transpose(p["conv1_w"], (2, 3, 1, 0)).reshape(25, 6)
    conv1_w = jnp.pad(w, ((0, 7), (0, 2))).astype(jnp.bfloat16)
    conv1_b = jnp.pad(p["conv1_b"], (0, 2)).reshape(1, 8).astype(jnp.float32)

    # conv2 (16,6,5,5) -> (25, 8, 16): k = ki*5+kj, cin padded 6->8.
    w = jnp.transpose(p["conv2_w"], (2, 3, 1, 0)).reshape(25, 6, 16)
    conv2_w = jnp.pad(w, ((0, 0), (0, 2), (0, 0))).astype(jnp.bfloat16)
    conv2_b = p["conv2_b"].reshape(1, 16).astype(jnp.float32)

    # fc1 (120,256), torch flatten order (c,h,w) -> (pos=h*4+w, cin, out) pad 120->128.
    w = p["fc1_w"].reshape(120, 16, 4, 4)                     # (out, c, h, w)
    w = jnp.transpose(w, (2, 3, 1, 0)).reshape(16, 16, 120)   # (pos, c, out)
    fc1_w = jnp.pad(w, ((0, 0), (0, 0), (0, 8))).astype(jnp.bfloat16)
    fc1_b = jnp.pad(p["fc1_b"], (0, 8)).reshape(1, 128).astype(jnp.float32)

    fc2_w = jnp.pad(p["fc2_w"].T, ((0, 8), (0, 44))).astype(jnp.bfloat16)    # (128,128)
    fc2_b = jnp.pad(p["fc2_b"], (0, 44)).reshape(1, 128).astype(jnp.float32)

    fc3_w = jnp.pad(p["fc3_w"].T, ((0, 44), (0, 118))).astype(jnp.bfloat16)  # (128,128)
    fc3_b = jnp.pad(p["fc3_b"], (0, 118)).reshape(1, 128).astype(jnp.float32)

    return dict(conv1_w=conv1_w, conv1_b=conv1_b,
                conv2_w=conv2_w, conv2_b=conv2_b,
                fc1_w=fc1_w, fc1_b=fc1_b,
                fc2_w=fc2_w, fc2_b=fc2_b,
                fc3_w=fc3_w, fc3_b=fc3_b)


# ------------------------------- forward --------------------------------------

def lenet_forward(x_nchw, kp):
    x = x_nchw[:, 0, :, :]                                    # (B, 28, 28)
    a = conv1_relu_pool(x, kp["conv1_w"], kp["conv1_b"])      # (144*B, 8)
    return conv2_fc_forward(a, kp, x_nchw.shape[0])           # (B, 10)


# ----------------------------- pure-JAX reference -----------------------------

def reference_forward(x_nchw, p):
    dn = ("NCHW", "OIHW", "NCHW")

    def pool(y):
        return jnp.maximum(
            jnp.maximum(y[:, :, 0::2, 0::2], y[:, :, 0::2, 1::2]),
            jnp.maximum(y[:, :, 1::2, 0::2], y[:, :, 1::2, 1::2]))

    y = jax.lax.conv_general_dilated(x_nchw, p["conv1_w"], (1, 1), "VALID",
                                     dimension_numbers=dn)
    y = pool(jax.nn.relu(y + p["conv1_b"][None, :, None, None]))
    y = jax.lax.conv_general_dilated(y, p["conv2_w"], (1, 1), "VALID",
                                     dimension_numbers=dn)
    y = pool(jax.nn.relu(y + p["conv2_b"][None, :, None, None]))
    y = y.reshape(y.shape[0], -1)
    y = jax.nn.relu(y @ p["fc1_w"].T + p["fc1_b"])
    y = jax.nn.relu(y @ p["fc2_w"].T + p["fc2_b"])
    return y @ p["fc3_w"].T + p["fc3_b"]


# --------------------------------- main ----------------------------------------

if __name__ == "__main__":
    key = jax.random.PRNGKey(0)
    ks = jax.random.split(key, 11)
    params = {
        # torch shapes: Conv2d weight (Cout, Cin, kh, kw), Linear weight (out, in)
        "conv1_w": 0.10 * jax.random.normal(ks[0], (6, 1, 5, 5), jnp.float32),
        "conv1_b": 0.10 * jax.random.normal(ks[1], (6,), jnp.float32),
        "conv2_w": 0.10 * jax.random.normal(ks[2], (16, 6, 5, 5), jnp.float32),
        "conv2_b": 0.10 * jax.random.normal(ks[3], (16,), jnp.float32),
        "fc1_w": 0.05 * jax.random.normal(ks[4], (120, 256), jnp.float32),
        "fc1_b": 0.05 * jax.random.normal(ks[5], (120,), jnp.float32),
        "fc2_w": 0.05 * jax.random.normal(ks[6], (84, 120), jnp.float32),
        "fc2_b": 0.05 * jax.random.normal(ks[7], (84,), jnp.float32),
        "fc3_w": 0.05 * jax.random.normal(ks[8], (10, 84), jnp.float32),
        "fc3_b": 0.05 * jax.random.normal(ks[9], (10,), jnp.float32),
    }
    # LeNet-5 requires 28x28 single-channel input (fc1 expects 16*4*4 = 256)
    x = jax.random.normal(ks[10], (2, 1, 28, 28), jnp.float32)

    kp = prepare_params(params)                 # one-time weight repack / pad / bf16
    out = jax.jit(lenet_forward)(x, kp)
    out = jax.block_until_ready(out)
    assert out.shape == (2, 10) and out.dtype == jnp.float32

    ref = jax.block_until_ready(jax.jit(reference_forward)(x, params))
    err = float(jnp.max(jnp.abs(out - ref)))
    # bf16 matmul operands (f32 accumulation) => ~1e-2-level absolute error vs f32 ref.
    assert err < 6e-2, f"max abs error vs reference: {err}"
    print("KERNEL_OK")
</pallas_src>

<mosaic_0001>
module attributes {stable_mosaic.version = 11 : i64} {
  func.func @_conv1_pool_kernel(%arg0: i32, %arg1: memref<4x144x32xbf16, #tpu.memory_space<vmem>>, %arg2: memref<32x8xbf16, #tpu.memory_space<vmem>>, %arg3: memref<1x8xf32, #tpu.memory_space<vmem>>, %arg4: memref<144x8xf32, #tpu.memory_space<vmem>>) attributes {dimension_semantics = [#tpu.dimension_semantics<parallel>], iteration_bounds = array<i64: 2>, scalar_prefetch = 0 : i64, scratch_operands = 0 : i64, tpu.core_type = #tpu.core_type<tc>, window_params = [{transform_indices = @transform_0, window_bounds = array<i64: 4, 144, 32>}, {pipeline_mode = #tpu.pipeline_mode<synchronous>, transform_indices = @transform_1, window_bounds = array<i64: 32, 8>}, {pipeline_mode = #tpu.pipeline_mode<synchronous>, transform_indices = @transform_2, window_bounds = array<i64: 1, 8>}, {transform_indices = @transform_3, window_bounds = array<i64: 144, 8>}]} {
    %c0 = arith.constant 0 : index
    %c0_0 = arith.constant 0 : index
    %0 = vector.load %arg2[%c0, %c0_0] : memref<32x8xbf16, #tpu.memory_space<vmem>>, vector<32x8xbf16>
    %c0_1 = arith.constant 0 : index
    %c0_2 = arith.constant 0 : index
    %c0_3 = arith.constant 0 : index
    %1 = vector.load %arg1[%c0_1, %c0_2, %c0_3] : memref<4x144x32xbf16, #tpu.memory_space<vmem>>, vector<1x144x32xbf16>
    %2 = vector.shape_cast %1 : vector<1x144x32xbf16> to vector<144x32xbf16>
    %cst = arith.constant dense<0.000000e+00> : vector<144x8xf32>
    %3 = tpu.matmul %2, %0, %cst {dimension_numbers = #tpu.dot_dimension_numbers<[1], [0], [0], [1], [0, 0, 1, 1], [], []>} : vector<144x32xbf16>, vector<32x8xbf16>, vector<144x8xf32> -> vector<144x8xf32>
    %c1 = arith.constant 1 : index
    %c0_4 = arith.constant 0 : index
    %c0_5 = arith.constant 0 : index
    %4 = vector.load %arg1[%c1, %c0_4, %c0_5] : memref<4x144x32xbf16, #tpu.memory_space<vmem>>, vector<1x144x32xbf16>
    %5 = vector.shape_cast %4 : vector<1x144x32xbf16> to vector<144x32xbf16>
    %cst_6 = arith.constant dense<0.000000e+00> : vector<144x8xf32>
    %6 = tpu.matmul %5, %0, %cst_6 {dimension_numbers = #tpu.dot_dimension_numbers<[1], [0], [0], [1], [0, 0, 1, 1], [], []>} : vector<144x32xbf16>, vector<32x8xbf16>, vector<144x8xf32> -> vector<144x8xf32>
    %7 = arith.maximumf %3, %6 : vector<144x8xf32>
    %c2 = arith.constant 2 : index
    %c0_7 = arith.constant 0 : index
    %c0_8 = arith.constant 0 : index
    %8 = vector.load %arg1[%c2, %c0_7, %c0_8] : memref<4x144x32xbf16, #tpu.memory_space<vmem>>, vector<1x144x32xbf16>
    %9 = vector.shape_cast %8 : vector<1x144x32xbf16> to vector<144x32xbf16>
    %cst_9 = arith.constant dense<0.000000e+00> : vector<144x8xf32>
    %10 = tpu.matmul %9, %0, %cst_9 {dimension_numbers = #tpu.dot_dimension_numbers<[1], [0], [0], [1], [0, 0, 1, 1], [], []>} : vector<144x32xbf16>, vector<32x8xbf16>, vector<144x8xf32> -> vector<144x8xf32>
    %11 = arith.maximumf %7, %10 : vector<144x8xf32>
    %c3 = arith.constant 3 : index
    %c0_10 = arith.constant 0 : index
    %c0_11 = arith.constant 0 : index
    %12 = vector.load %arg1[%c3, %c0_10, %c0_11] : memref<4x144x32xbf16, #tpu.memory_space<vmem>>, vector<1x144x32xbf16>
    %13 = vector.shape_cast %12 : vector<1x144x32xbf16> to vector<144x32xbf16>
    %cst_12 = arith.constant dense<0.000000e+00> : vector<144x8xf32>
    %14 = tpu.matmul %13, %0, %cst_12 {dimension_numbers = #tpu.dot_dimension_numbers<[1], [0], [0], [1], [0, 0, 1, 1], [], []>} : vector<144x32xbf16>, vector<32x8xbf16>, vector<144x8xf32> -> vector<144x8xf32>
    %15 = arith.maximumf %11, %14 : vector<144x8xf32>
    %c0_13 = arith.constant 0 : index
    %c0_14 = arith.constant 0 : index
    %16 = vector.load %arg3[%c0_13, %c0_14] : memref<1x8xf32, #tpu.memory_space<vmem>>, vector<1x8xf32>
    %17 = vector.broadcast %16 : vector<1x8xf32> to vector<144x8xf32>
    %18 = arith.addf %15, %17 : vector<144x8xf32>
    %cst_15 = arith.constant 0.000000e+00 : f32
    %19 = vector.broadcast %cst_15 : f32 to vector<144x8xf32>
    %20 = arith.maximumf %18, %19 : vector<144x8xf32>
    %c0_16 = arith.constant 0 : index
    %c0_17 = arith.constant 0 : index
    %21 = vector.load %arg4[%c0_16, %c0_17] : memref<144x8xf32, #tpu.memory_space<vmem>>, vector<144x8xf32>
    tpu.vector_store %arg4[%c0_16, %c0_17], %20 {strides = array<i32>} : memref<144x8xf32, #tpu.memory_space<vmem>>, vector<144x8xf32>,
    return
  }
  func.func @transform_0(%arg0: i32) -> (i32, i32, i32) {
    %c0_i32 = arith.constant 0 : i32
    %c0_i32_0 = arith.constant 0 : i32
    %c0_i32_1 = arith.constant 0 : i32
    return %c0_i32, %arg0, %c0_i32_0 : i32, i32, i32
  }
  func.func @transform_1(%arg0: i32) -> (i32, i32) {
    %c0_i32 = arith.constant 0 : i32
    %c0_i32_0 = arith.constant 0 : i32
    %c0_i32_1 = arith.constant 0 : i32
    return %c0_i32, %c0_i32_0 : i32, i32
  }
  func.func @transform_2(%arg0: i32) -> (i32, i32) {
    %c0_i32 = arith.constant 0 : i32
    %c0_i32_0 = arith.constant 0 : i32
    %c0_i32_1 = arith.constant 0 : i32
    return %c0_i32, %c0_i32_0 : i32, i32
  }
  func.func @transform_3(%arg0: i32) -> (i32, i32) {
    %c0_i32 = arith.constant 0 : i32
    %c0_i32_0 = arith.constant 0 : i32
    return %arg0, %c0_i32 : i32, i32
  }
}

module attributes {stable_mosaic.version = 11 : i64} {
  func.func @_conv2_fc_kernel(%arg0: i32, %arg1: memref<288x8xf32, #tpu.memory_space<vmem>>, %arg2: memref<25x8x16xbf16, #tpu.memory_space<vmem>>, %arg3: memref<1x16xf32, #tpu.memory_space<vmem>>, %arg4: memref<16x16x128xbf16, #tpu.memory_space<vmem>>, %arg5: memref<1x128xf32, #tpu.memory_space<vmem>>, %arg6: memref<128x128xbf16, #tpu.memory_space<vmem>>, %arg7: memref<1x128xf32, #tpu.memory_space<vmem>>, %arg8: memref<128x128xbf16, #tpu.memory_space<vmem>>, %arg9: memref<1x128xf32, #tpu.memory_space<vmem>>, %arg10: memref<2x128xf32, #tpu.memory_space<vmem>>) attributes {dimension_semantics = [#tpu.dimension_semantics<arbitrary>], iteration_bounds = array<i64: 1>, scalar_prefetch = 0 : i64, scratch_operands = 0 : i64, tpu.core_type = #tpu.core_type<tc>, window_params = [{pipeline_mode = #tpu.pipeline_mode<synchronous>, transform_indices = @transform_0, window_bounds = array<i64: 288, 8>}, {pipeline_mode = #tpu.pipeline_mode<synchronous>, transform_indices = @transform_1, window_bounds = array<i64: 25, 8, 16>}, {pipeline_mode = #tpu.pipeline_mode<synchronous>, transform_indices = @transform_2, window_bounds = array<i64: 1, 16>}, {pipeline_mode = #tpu.pipeline_mode<synchronous>, transform_indices = @transform_3, window_bounds = array<i64: 16, 16, 128>}, {pipeline_mode = #tpu.pipeline_mode<synchronous>, transform_indices = @transform_4, window_bounds = array<i64: 1, 128>}, {pipeline_mode = #tpu.pipeline_mode<synchronous>, transform_indices = @transform_5, window_bounds = array<i64: 128, 128>}, {pipeline_mode = #tpu.pipeline_mode<synchronous>, transform_indices = @transform_6, window_bounds = array<i64: 1, 128>}, {pipeline_mode = #tpu.pipeline_mode<synchronous>, transform_indices = @transform_7, window_bounds = array<i64: 128, 128>}, {pipeline_mode = #tpu.pipeline_mode<synchronous>, transform_indices = @transform_8, window_bounds = array<i64: 1, 128>}, {pipeline_mode = #tpu.pipeline_mode<synchronous>, transform_indices = @transform_9, window_bounds = array<i64: 2, 128>}]} {
    %c0 = arith.constant 0 : index
    %c0_0 = arith.constant 0 : index
    %0 = vector.load %arg1[%c0, %c0_0] : memref<288x8xf32, #tpu.memory_space<vmem>>, vector<288x8xf32>
    %1 = vector.extract_strided_slice %0 {offsets = [0, 0], sizes = [8, 8], strides = [1, 1]} : vector<288x8xf32> to vector<8x8xf32>
    %2 = vector.extract_strided_slice %0 {offsets = [12, 0], sizes = [8, 8], strides = [1, 1]} : vector<288x8xf32> to vector<8x8xf32>
    %3 = vector.extract_strided_slice %0 {offsets = [24, 0], sizes = [8, 8], strides = [1, 1]} : vector<288x8xf32> to vector<8x8xf32>
    %4 = vector.extract_strided_slice %0 {offsets = [36, 0], sizes = [8, 8], strides = [1, 1]} : vector<288x8xf32> to vector<8x8xf32>
    %5 = tpu.concatenate %1, %2, %3, %4 in 0 : vector<8x8xf32>, vector<8x8xf32>, vector<8x8xf32>, vector<8x8xf32> -> vector<32x8xf32>
    %6 = arith.truncf %5 : vector<32x8xf32> to vector<32x8xbf16>
    %7 = vector.extract_strided_slice %0 {offsets = [72, 0], sizes = [8, 8], strides = [1, 1]} : vector<288x8xf32> to vector<8x8xf32>
    %8 = vector.extract_strided_slice %0 {offsets = [84, 0], sizes = [8, 8], strides = [1, 1]} : vector<288x8xf32> to vector<8x8xf32>
    %9 = vector.extract_strided_slice %0 {offsets = [96, 0], sizes = [8, 8], strides = [1, 1]} : vector<288x8xf32> to vector<8x8xf32>
    %10 = vector.extract_strided_slice %0 {offsets = [108, 0], sizes = [8, 8], strides = [1, 1]} : vector<288x8xf32> to vector<8x8xf32>
    %11 = tpu.concatenate %7, %8, %9, %10 in 0 : vector<8x8xf32>, vector<8x8xf32>, vector<8x8xf32>, vector<8x8xf32> -> vector<32x8xf32>
    %12 = arith.truncf %11 : vector<32x8xf32> to vector<32x8xbf16>
    %13 = vector.extract_strided_slice %0 {offsets = [2, 0], sizes = [8, 8], strides = [1, 1]} : vector<288x8xf32> to vector<8x8xf32>
    %14 = vector.extract_strided_slice %0 {offsets = [14, 0], sizes = [8, 8], strides = [1, 1]} : vector<288x8xf32> to vector<8x8xf32>
    %15 = vector.extract_strided_slice %0 {offsets = [26, 0], sizes = [8, 8], strides = [1, 1]} : vector<288x8xf32> to vector<8x8xf32>
    %16 = vector.extract_strided_slice %0 {offsets = [38, 0], sizes = [8, 8], strides = [1, 1]} : vector<288x8xf32> to vector<8x8xf32>
    %17 = tpu.concatenate %13, %14, %15, %16 in 0 : vector<8x8xf32>, vector<8x8xf32>, vector<8x8xf32>, vector<8x8xf32> -> vector<32x8xf32>
    %18 = arith.truncf %17 : vector<32x8xf32> to vector<32x8xbf16>
    %19 = vector.extract_strided_slice %0 {offsets = [74, 0], sizes = [8, 8], strides = [1, 1]} : vector<288x8xf32> to vector<8x8xf32>
    %20 = vector.extract_strided_slice %0 {offsets = [86, 0], sizes = [8, 8], strides = [1, 1]} : vector<288x8xf32> to vector<8x8xf32>
    %21 = vector.extract_strided_slice %0 {offsets = [98, 0], sizes = [8, 8], strides = [1, 1]} : vector<288x8xf32> to vector<8x8xf32>
    %22 = vector.extract_strided_slice %0 {offsets = [110, 0], sizes = [8, 8], strides = [1, 1]} : vector<288x8xf32> to vector<8x8xf32>
    %23 = tpu.concatenate %19, %20, %21, %22 in 0 : vector<8x8xf32>, vector<8x8xf32>, vector<8x8xf32>, vector<8x8xf32> -> vector<32x8xf32>
    %24 = arith.truncf %23 : vector<32x8xf32> to vector<32x8xbf16>
    %25 = vector.extract_strided_slice %0 {offsets = [4, 0], sizes = [8, 8], strides = [1, 1]} : vector<288x8xf32> to vector<8x8xf32>
    %26 = vector.extract_strided_slice %0 {offsets = [16, 0], sizes = [8, 8], strides = [1, 1]} : vector<288x8xf32> to vector<8x8xf32>
    %27 = vector.extract_strided_slice %0 {offsets = [28, 0], sizes = [8, 8], strides = [1, 1]} : vector<288x8xf32> to vector<8x8xf32>
    %28 = vector.extract_strided_slice %0 {offsets = [40, 0], sizes = [8, 8], strides = [1, 1]} : vector<288x8xf32> to vector<8x8xf32>
    %29 = tpu.concatenate %25, %26, %27, %28 in 0 : vector<8x8xf32>, vector<8x8xf32>, vector<8x8xf32>, vector<8x8xf32> -> vector<32x8xf32>
    %30 = arith.truncf %29 : vector<32x8xf32> to vector<32x8xbf16>
    %31 = vector.extract_strided_slice %0 {offsets = [76, 0], sizes = [8, 8], strides = [1, 1]} : vector<288x8xf32> to vector<8x8xf32>
    %32 = vector.extract_strided_slice %0 {offsets = [88, 0], sizes = [8, 8], strides = [1, 1]} : vector<288x8xf32> to vector<8x8xf32>
    %33 = vector.extract_strided_slice %0 {offsets = [100, 0], sizes = [8, 8], strides = [1, 1]} : vector<288x8xf32> to vector<8x8xf32>
    %34 = vector.extract_strided_slice %0 {offsets = [112, 0], sizes = [8, 8], strides = [1, 1]} : vector<288x8xf32> to vector<8x8xf32>
    %35 = tpu.concatenate %31, %32, %33, %34 in 0 : vector<8x8xf32>, vector<8x8xf32>, vector<8x8xf32>, vector<8x8xf32> -> vector<32x8xf32>
    %36 = arith.truncf %35 : vector<32x8xf32> to vector<32x8xbf16>
    %37 = vector.extract_strided_slice %0 {offsets = [144, 0], sizes = [8, 8], strides = [1, 1]} : vector<288x8xf32> to vector<8x8xf32>
    %38 = vector.extract_strided_slice %0 {offsets = [156, 0], sizes = [8, 8], strides = [1, 1]} : vector<288x8xf32> to vector<8x8xf32>
    %39 = vector.extract_strided_slice %0 {offsets = [168, 0], sizes = [8, 8], strides = [1, 1]} : vector<288x8xf32> to vector<8x8xf32>
    %40 = vector.extract_strided_slice %0 {offsets = [180, 0], sizes = [8, 8], strides = [1, 1]} : vector<288x8xf32> to vector<8x8xf32>
    %41 = tpu.concatenate %37, %38, %39, %40 in 0 : vector<8x8xf32>, vector<8x8xf32>, vector<8x8xf32>, vector<8x8xf32> -> vector<32x8xf32>
    %42 = arith.truncf %41 : vector<32x8xf32> to vector<32x8xbf16>
    %43 = vector.extract_strided_slice %0 {offsets = [216, 0], sizes = [8, 8], strides = [1, 1]} : vector<288x8xf32> to vector<8x8xf32>
    %44 = vector.extract_strided_slice %0 {offsets = [228, 0], sizes = [8, 8], strides = [1, 1]} : vector<288x8xf32> to vector<8x8xf32>
    %45 = vector.extract_strided_slice %0 {offsets = [240, 0], sizes = [8, 8], strides = [1, 1]} : vector<288x8xf32> to vector<8x8xf32>
    %46 = vector.extract_strided_slice %0 {offsets = [252, 0], sizes = [8, 8], strides = [1, 1]} : vector<288x8xf32> to vector<8x8xf32>
    %47 = tpu.concatenate %43, %44, %45, %46 in 0 : vector<8x8xf32>, vector<8x8xf32>, vector<8x8xf32>, vector<8x8xf32> -> vector<32x8xf32>
    %48 = arith.truncf %47 : vector<32x8xf32> to vector<32x8xbf16>
    %49 = vector.extract_strided_slice %0 {offsets = [146, 0], sizes = [8, 8], strides = [1, 1]} : vector<288x8xf32> to vector<8x8xf32>
    %50 = vector.extract_strided_slice %0 {offsets = [158, 0], sizes = [8, 8], strides = [1, 1]} : vector<288x8xf32> to vector<8x8xf32>
    %51 = vector.extract_strided_slice %0 {offsets = [170, 0], sizes = [8, 8], strides = [1, 1]} : vector<288x8xf32> to vector<8x8xf32>
    %52 = vector.extract_strided_slice %0 {offsets = [182, 0], sizes = [8, 8], strides = [1, 1]} : vector<288x8xf32> to vector<8x8xf32>
    %53 = tpu.concatenate %49, %50, %51, %52 in 0 : vector<8x8xf32>, vector<8x8xf32>, vector<8x8xf32>, vector<8x8xf32> -> vector<32x8xf32>
    %54 = arith.truncf %53 : vector<32x8xf32> to vector<32x8xbf16>
    %55 = vector.extract_strided_slice %0 {offsets = [218, 0], sizes = [8, 8], strides = [1, 1]} : vector<288x8xf32> to vector<8x8xf32>
    %56 = vector.extract_strided_slice %0 {offsets = [230, 0], sizes = [8, 8], strides = [1, 1]} : vector<288x8xf32> to vector<8x8xf32>
    %57 = vector.extract_strided_slice %0 {offsets = [242, 0], sizes = [8, 8], strides = [1, 1]} : vector<288x8xf32> to vector<8x8xf32>
    %58 = vector.extract_strided_slice %0 {offsets = [254, 0], sizes = [8, 8], strides = [1, 1]} : vector<288x8xf32> to vector<8x8xf32>
    %59 = tpu.concatenate %55, %56, %57, %58 in 0 : vector<8x8xf32>, vector<8x8xf32>, vector<8x8xf32>, vector<8x8xf32> -> vector<32x8xf32>
    %60 = arith.truncf %59 : vector<32x8xf32> to vector<32x8xbf16>
    %61 = vector.extract_strided_slice %0 {offsets = [148, 0], sizes = [8, 8], strides = [1, 1]} : vector<288x8xf32> to vector<8x8xf32>
    %62 = vector.extract_strided_slice %0 {offsets = [160, 0], sizes = [8, 8], strides = [1, 1]} : vector<288x8xf32> to vector<8x8xf32>
    %63 = vector.extract_strided_slice %0 {offsets = [172, 0], sizes = [8, 8], strides = [1, 1]} : vector<288x8xf32> to vector<8x8xf32>
    %64 = vector.extract_strided_slice %0 {offsets = [184, 0], sizes = [8, 8], strides = [1, 1]} : vector<288x8xf32> to vector<8x8xf32>
    %65 = tpu.concatenate %61, %62, %63, %64 in 0 : vector<8x8xf32>, vector<8x8xf32>, vector<8x8xf32>, vector<8x8xf32> -> vector<32x8xf32>
    %66 = arith.truncf %65 : vector<32x8xf32> to vector<32x8xbf16>
    %67 = vector.extract_strided_slice %0 {offsets = [220, 0], sizes = [8, 8], strides = [1, 1]} : vector<288x8xf32> to vector<8x8xf32>
    %68 = vector.extract_strided_slice %0 {offsets = [232, 0], sizes = [8, 8], strides = [1, 1]} : vector<288x8xf32> to vector<8x8xf32>
    %69 = vector.extract_strided_slice %0 {offsets = [244, 0], sizes = [8, 8], strides = [1, 1]} : vector<288x8xf32> to vector<8x8xf32>
    %70 = vector.extract_strided_slice %0 {offsets = [256, 0], sizes = [8, 8], strides = [1, 1]} : vector<288x8xf32> to vector<8x8xf32>
    %71 = tpu.concatenate %67, %68, %69, %70 in 0 : vector<8x8xf32>, vector<8x8xf32>, vector<8x8xf32>, vector<8x8xf32> -> vector<32x8xf32>
    %72 = arith.truncf %71 : vector<32x8xf32> to vector<32x8xbf16>
    %73 = vector.extract_strided_slice %0 {offsets = [12, 0], sizes = [8, 8], strides = [1, 1]} : vector<288x8xf32> to vector<8x8xf32>
    %74 = vector.extract_strided_slice %0 {offsets = [24, 0], sizes = [8, 8], strides = [1, 1]} : vector<288x8xf32> to vector<8x8xf32>
    %75 = vector.extract_strided_slice %0 {offsets = [36, 0], sizes = [8, 8], strides = [1, 1]} : vector<288x8xf32> to vector<8x8xf32>
    %76 = vector.extract_strided_slice %0 {offsets = [48, 0], sizes = [8, 8], strides = [1, 1]} : vector<288x8xf32> to vector<8x8xf32>
    %77 = tpu.concatenate %73, %74, %75, %76 in 0 : vector<8x8xf32>, vector<8x8xf32>, vector<8x8xf32>, vector<8x8xf32> -> vector<32x8xf32>
    %78 = arith.truncf %77 : vector<32x8xf32> to vector<32x8xbf16>
    %79 = vector.extract_strided_slice %0 {offsets = [84, 0], sizes = [8, 8], strides = [1, 1]} : vector<288x8xf32> to vector<8x8xf32>
    %80 = vector.extract_strided_slice %0 {offsets = [96, 0], sizes = [8, 8], strides = [1, 1]} : vector<288x8xf32> to vector<8x8xf32>
    %81 = vector.extract_strided_slice %0 {offsets = [108, 0], sizes = [8, 8], strides = [1, 1]} : vector<288x8xf32> to vector<8x8xf32>
    %82 = vector.extract_strided_slice %0 {offsets = [120, 0], sizes = [8, 8], strides = [1, 1]} : vector<288x8xf32> to vector<8x8xf32>
    %83 = tpu.concatenate %79, %80, %81, %82 in 0 : vector<8x8xf32>, vector<8x8xf32>, vector<8x8xf32>, vector<8x8xf32> -> vector<32x8xf32>
    %84 = arith.truncf %83 : vector<32x8xf32> to vector<32x8xbf16>
    %85 = vector.extract_strided_slice %0 {offsets = [14, 0], sizes = [8, 8], strides = [1, 1]} : vector<288x8xf32> to vector<8x8xf32>
    %86 = vector.extract_strided_slice %0 {offsets = [26, 0], sizes = [8, 8], strides = [1, 1]} : vector<288x8xf32> to vector<8x8xf32>
    %87 = vector.extract_strided_slice %0 {offsets = [38, 0], sizes = [8, 8], strides = [1, 1]} : vector<288x8xf32> to vector<8x8xf32>
    %88 = vector.extract_strided_slice %0 {offsets = [50, 0], sizes = [8, 8], strides = [1, 1]} : vector<288x8xf32> to vector<8x8xf32>
    %89 = tpu.concatenate %85, %86, %87, %88 in 0 : vector<8x8xf32>, vector<8x8xf32>, vector<8x8xf32>, vector<8x8xf32> -> vector<32x8xf32>
    %90 = arith.truncf %89 : vector<32x8xf32> to vector<32x8xbf16>
    %91 = vector.extract_strided_slice %0 {offsets = [86, 0], sizes = [8, 8], strides = [1, 1]} : vector<288x8xf32> to vector<8x8xf32>
    %92 = vector.extract_strided_slice %0 {offsets = [98, 0], sizes = [8, 8], strides = [1, 1]} : vector<288x8xf32> to vector<8x8xf32>
    %93 = vector.extract_strided_slice %0 {offsets = [110, 0], sizes = [8, 8], strides = [1, 1]} : vector<288x8xf32> to vector<8x8xf32>
    %94 = vector.extract_strided_slice %0 {offsets = [122, 0], sizes = [8, 8], strides = [1, 1]} : vector<288x8xf32> to vector<8x8xf32>
    %95 = tpu.concatenate %91, %92, %93, %94 in 0 : vector<8x8xf32>, vector<8x8xf32>, vector<8x8xf32>, vector<8x8xf32> -> vector<32x8xf32>
    %96 = arith.truncf %95 : vector<32x8xf32> to vector<32x8xbf16>
    %97 = vector.extract_strided_slice %0 {offsets = [16, 0], sizes = [8, 8], strides = [1, 1]} : vector<288x8xf32> to vector<8x8xf32>
    %98 = vector.extract_strided_slice %0 {offsets = [28, 0], sizes = [8, 8], strides = [1, 1]} : vector<288x8xf32> to vector<8x8xf32>
    %99 = vector.extract_strided_slice %0 {offsets = [40, 0], sizes = [8, 8], strides = [1, 1]} : vector<288x8xf32> to vector<8x8xf32>
    %100 = vector.extract_strided_slice %0 {offsets = [52, 0], sizes = [8, 8], strides = [1, 1]} : vector<288x8xf32> to vector<8x8xf32>
    %101 = tpu.concatenate %97, %98, %99, %100 in 0 : vector<8x8xf32>, vector<8x8xf32>, vector<8x8xf32>, vector<8x8xf32> -> vector<32x8xf32>
    %102 = arith.truncf %101 : vector<32x8xf32> to vector<32x8xbf16>
    %103 = vector.extract_strided_slice %0 {offsets = [88, 0], sizes = [8, 8], strides = [1, 1]} : vector<288x8xf32> to vector<8x8xf32>
    %104 = vector.extract_strided_slice %0 {offsets = [100, 0], sizes = [8, 8], strides = [1, 1]} : vector<288x8xf32> to vector<8x8xf32>
    %105 = vector.extract_strided_slice %0 {offsets = [112, 0], sizes = [8, 8], strides = [1, 1]} : vector<288x8xf32> to vector<8x8xf32>
    %106 = vector.extract_strided_slice %0 {offsets = [124, 0], sizes = [8, 8], strides = [1, 1]} : vector<288x8xf32> to vector<8x8xf32>
    %107 = tpu.concatenate %103, %104, %105, %106 in 0 : vector<8x8xf32>, vector<8x8xf32>, vector<8x8xf32>, vector<8x8xf32> -> vector<32x8xf32>
    %108 = arith.truncf %107 : vector<32x8xf32> to vector<32x8xbf16>
    %109 = vector.extract_strided_slice %0 {offsets = [156, 0], sizes = [8, 8], strides = [1, 1]} : vector<288x8xf32> to vector<8x8xf32>
    %110 = vector.extract_strided_slice %0 {offsets = [168, 0], sizes = [8, 8], strides = [1, 1]} : vector<288x8xf32> to vector<8x8xf32>
    %111 = vector.extract_strided_slice %0 {offsets = [180, 0], sizes = [8, 8], strides = [1, 1]} : vector<288x8xf32> to vector<8x8xf32>
    %112 = vector.extract_strided_slice %0 {offsets = [192, 0], sizes = [8, 8], strides = [1, 1]} : vector<288x8xf32> to vector<8x8xf32>
    %113 = tpu.concatenate %109, %110, %111, %112 in 0 : vector<8x8xf32>, vector<8x8xf32>, vector<8x8xf32>, vector<8x8xf32> -> vector<32x8xf32>
    %114 = arith.truncf %113 : vector<32x8xf32> to vector<32x8xbf16>
    %115 = vector.extract_strided_slice %0 {offsets = [228, 0], sizes = [8, 8], strides = [1, 1]} : vector<288x8xf32> to vector<8x8xf32>
    %116 = vector.extract_strided_slice %0 {offsets = [240, 0], sizes = [8, 8], strides = [1, 1]} : vector<288x8xf32> to vector<8x8xf32>
    %117 = vector.extract_strided_slice %0 {offsets = [252, 0], sizes = [8, 8], strides = [1, 1]} : vector<288x8xf32> to vector<8x8xf32>
    %118 = vector.extract_strided_slice %0 {offsets = [264, 0], sizes = [8, 8], strides = [1, 1]} : vector<288x8xf32> to vector<8x8xf32>
    %119 = tpu.concatenate %115, %116, %117, %118 in 0 : vector<8x8xf32>, vector<8x8xf32>, vector<8x8xf32>, vector<8x8xf32> -> vector<32x8xf32>
    %120 = arith.truncf %119 : vector<32x8xf32> to vector<32x8xbf16>
    %121 = vector.extract_strided_slice %0 {offsets = [158, 0], sizes = [8, 8], strides = [1, 1]} : vector<288x8xf32> to vector<8x8xf32>
    %122 = vector.extract_strided_slice %0 {offsets = [170, 0], sizes = [8, 8], strides = [1, 1]} : vector<288x8xf32> to vector<8x8xf32>
    %123 = vector.extract_strided_slice %0 {offsets = [182, 0], sizes = [8, 8], strides = [1, 1]} : vector<288x8xf32> to vector<8x8xf32>
    %124 = vector.extract_strided_slice %0 {offsets = [194, 0], sizes = [8, 8], strides = [1, 1]} : vector<288x8xf32> to vector<8x8xf32>
    %125 = tpu.concatenate %121, %122, %123, %124 in 0 : vector<8x8xf32>, vector<8x8xf32>, vector<8x8xf32>, vector<8x8xf32> -> vector<32x8xf32>
    %126 = arith.truncf %125 : vector<32x8xf32> to vector<32x8xbf16>
    %127 = vector.extract_strided_slice %0 {offsets = [230, 0], sizes = [8, 8], strides = [1, 1]} : vector<288x8xf32> to vector<8x8xf32>
    %128 = vector.extract_strided_slice %0 {offsets = [242, 0], sizes = [8, 8], strides = [1, 1]} : vector<288x8xf32> to vector<8x8xf32>
    %129 = vector.extract_strided_slice %0 {offsets = [254, 0], sizes = [8, 8], strides = [1, 1]} : vector<288x8xf32> to vector<8x8xf32>
    %130 = vector.extract_strided_slice %0 {offsets = [266, 0], sizes = [8, 8], strides = [1, 1]} : vector<288x8xf32> to vector<8x8xf32>
    %131 = tpu.concatenate %127, %128, %129, %130 in 0 : vector<8x8xf32>, vector<8x8xf32>, vector<8x8xf32>, vector<8x8xf32> -> vector<32x8xf32>
    %132 = arith.truncf %131 : vector<32x8xf32> to vector<32x8xbf16>
    %133 = vector.extract_strided_slice %0 {offsets = [160, 0], sizes = [8, 8], strides = [1, 1]} : vector<288x8xf32> to vector<8x8xf32>
    %134 = vector.extract_strided_slice %0 {offsets = [172, 0], sizes = [8, 8], strides = [1, 1]} : vector<288x8xf32> to vector<8x8xf32>
    %135 = vector.extract_strided_slice %0 {offsets = [184, 0], sizes = [8, 8], strides = [1, 1]} : vector<288x8xf32> to vector<8x8xf32>
    %136 = vector.extract_strided_slice %0 {offsets = [196, 0], sizes = [8, 8], strides = [1, 1]} : vector<288x8xf32> to vector<8x8xf32>
    %137 = tpu.concatenate %133, %134, %135, %136 in 0 : vector<8x8xf32>, vector<8x8xf32>, vector<8x8xf32>, vector<8x8xf32> -> vector<32x8xf32>
    %138 = arith.truncf %137 : vector<32x8xf32> to vector<32x8xbf16>
    %139 = vector.extract_strided_slice %0 {offsets = [232, 0], sizes = [8, 8], strides = [1, 1]} : vector<288x8xf32> to vector<8x8xf32>
    %140 = vector.extract_strided_slice %0 {offsets = [244, 0], sizes = [8, 8], strides = [1, 1]} : vector<288x8xf32> to vector<8x8xf32>
    %141 = vector.extract_strided_slice %0 {offsets = [256, 0], sizes = [8, 8], strides = [1, 1]} : vector<288x8xf32> to vector<8x8xf32>
    %142 = vector.extract_strided_slice %0 {offsets = [268, 0], sizes = [8, 8], strides = [1, 1]} : vector<288x8xf32> to vector<8x8xf32>
    %143 = tpu.concatenate %139, %140, %141, %142 in 0 : vector<8x8xf32>, vector<8x8xf32>, vector<8x8xf32>, vector<8x8xf32> -> vector<32x8xf32>
    %144 = arith.truncf %143 : vector<32x8xf32> to vector<32x8xbf16>
    %145 = vector.extract_strided_slice %0 {offsets = [24, 0], sizes = [8, 8], strides = [1, 1]} : vector<288x8xf32> to vector<8x8xf32>
    %146 = vector.extract_strided_slice %0 {offsets = [36, 0], sizes = [8, 8], strides = [1, 1]} : vector<288x8xf32> to vector<8x8xf32>
    %147 = vector.extract_strided_slice %0 {offsets = [48, 0], sizes = [8, 8], strides = [1, 1]} : vector<288x8xf32> to vector<8x8xf32>
    %148 = vector.extract_strided_slice %0 {offsets = [60, 0], sizes = [8, 8], strides = [1, 1]} : vector<288x8xf32> to vector<8x8xf32>
    %149 = tpu.concatenate %145, %146, %147, %148 in 0 : vector<8x8xf32>, vector<8x8xf32>, vector<8x8xf32>, vector<8x8xf32> -> vector<32x8xf32>
    %150 = arith.truncf %149 : vector<32x8xf32> to vector<32x8xbf16>
    %151 = vector.extract_strided_slice %0 {offsets = [96, 0], sizes = [8, 8], strides = [1, 1]} : vector<288x8xf32> to vector<8x8xf32>
    %152 = vector.extract_strided_slice %0 {offsets = [108, 0], sizes = [8, 8], strides = [1, 1]} : vector<288x8xf32> to vector<8x8xf32>
    %153 = vector.extract_strided_slice %0 {offsets = [120, 0], sizes = [8, 8], strides = [1, 1]} : vector<288x8xf32> to vector<8x8xf32>
    %154 = vector.extract_strided_slice %0 {offsets = [132, 0], sizes = [8, 8], strides = [1, 1]} : vector<288x8xf32> to vector<8x8xf32>
    %155 = tpu.concatenate %151, %152, %153, %154 in 0 : vector<8x8xf32>, vector<8x8xf32>, vector<8x8xf32>, vector<8x8xf32> -> vector<32x8xf32>
    %156 = arith.truncf %155 : vector<32x8xf32> to vector<32x8xbf16>
    %157 = vector.extract_strided_slice %0 {offsets = [26, 0], sizes = [8, 8], strides = [1, 1]} : vector<288x8xf32> to vector<8x8xf32>
    %158 = vector.extract_strided_slice %0 {offsets = [38, 0], sizes = [8, 8], strides = [1, 1]} : vector<288x8xf32> to vector<8x8xf32>
    %159 = vector.extract_strided_slice %0 {offsets = [50, 0], sizes = [8, 8], strides = [1, 1]} : vector<288x8xf32> to vector<8x8xf32>
    %160 = vector.extract_strided_slice %0 {offsets = [62, 0], sizes = [8, 8], strides = [1, 1]} : vector<288x8xf32> to vector<8x8xf32>
    %161 = tpu.concatenate %157, %158, %159, %160 in 0 : vector<8x8xf32>, vector<8x8xf32>, vector<8x8xf32>, vector<8x8xf32> -> vector<32x8xf32>
    %162 = arith.truncf %161 : vector<32x8xf32> to vector<32x8xbf16>
    %163 = vector.extract_strided_slice %0 {offsets = [98, 0], sizes = [8, 8], strides = [1, 1]} : vector<288x8xf32> to vector<8x8xf32>
    %164 = vector.extract_strided_slice %0 {offsets = [110, 0], sizes = [8, 8], strides = [1, 1]} : vector<288x8xf32> to vector<8x8xf32>
    %165 = vector.extract_strided_slice %0 {offsets = [122, 0], sizes = [8, 8], strides = [1, 1]} : vector<288x8xf32> to vector<8x8xf32>
    %166 = vector.extract_strided_slice %0 {offsets = [134, 0], sizes = [8, 8], strides = [1, 1]} : vector<288x8xf32> to vector<8x8xf32>
    %167 = tpu.concatenate %163, %164, %165, %166 in 0 : vector<8x8xf32>, vector<8x8xf32>, vector<8x8xf32>, vector<8x8xf32> -> vector<32x8xf32>
    %168 = arith.truncf %167 : vector<32x8xf32> to vector<32x8xbf16>
    %169 = vector.extract_strided_slice %0 {offsets = [28, 0], sizes = [8, 8], strides = [1, 1]} : vector<288x8xf32> to vector<8x8xf32>
    %170 = vector.extract_strided_slice %0 {offsets = [40, 0], sizes = [8, 8], strides = [1, 1]} : vector<288x8xf32> to vector<8x8xf32>
    %171 = vector.extract_strided_slice %0 {offsets = [52, 0], sizes = [8, 8], strides = [1, 1]} : vector<288x8xf32> to vector<8x8xf32>
    %172 = vector.extract_strided_slice %0 {offsets = [64, 0], sizes = [8, 8], strides = [1, 1]} : vector<288x8xf32> to vector<8x8xf32>
    %173 = tpu.concatenate %169, %170, %171, %172 in 0 : vector<8x8xf32>, vector<8x8xf32>, vector<8x8xf32>, vector<8x8xf32> -> vector<32x8xf32>
    %174 = arith.truncf %173 : vector<32x8xf32> to vector<32x8xbf16>
    %175 = vector.extract_strided_slice %0 {offsets = [100, 0], sizes = [8, 8], strides = [1, 1]} : vector<288x8xf32> to vector<8x8xf32>
    %176 = vector.extract_strided_slice %0 {offsets = [112, 0], sizes = [8, 8], strides = [1, 1]} : vector<288x8xf32> to vector<8x8xf32>
    %177 = vector.extract_strided_slice %0 {offsets = [124, 0], sizes = [8, 8], strides = [1, 1]} : vector<288x8xf32> to vector<8x8xf32>
    %178 = vector.extract_strided_slice %0 {offsets = [136, 0], sizes = [8, 8], strides = [1, 1]} : vector<288x8xf32> to vector<8x8xf32>
    %179 = tpu.concatenate %175, %176, %177, %178 in 0 : vector<8x8xf32>, vector<8x8xf32>, vector<8x8xf32>, vector<8x8xf32> -> vector<32x8xf32>
    %180 = arith.truncf %179 : vector<32x8xf32> to vector<32x8xbf16>
    %181 = vector.extract_strided_slice %0 {offsets = [168, 0], sizes = [8, 8], strides = [1, 1]} : vector<288x8xf32> to vector<8x8xf32>
    %182 = vector.extract_strided_slice %0 {offsets = [180, 0], sizes = [8, 8], strides = [1, 1]} : vector<288x8xf32> to vector<8x8xf32>
    %183 = vector.extract_strided_slice %0 {offsets = [192, 0], sizes = [8, 8], strides = [1, 1]} : vector<288x8xf32> to vector<8x8xf32>
    %184 = vector.extract_strided_slice %0 {offsets = [204, 0], sizes = [8, 8], strides = [1, 1]} : vector<288x8xf32> to vector<8x8xf32>
    %185 = tpu.concatenate %181, %182, %183, %184 in 0 : vector<8x8xf32>, vector<8x8xf32>, vector<8x8xf32>, vector<8x8xf32> -> vector<32x8xf32>
    %186 = arith.truncf %185 : vector<32x8xf32> to vector<32x8xbf16>
    %187 = vector.extract_strided_slice %0 {offsets = [240, 0], sizes = [8, 8], strides = [1, 1]} : vector<288x8xf32> to vector<8x8xf32>
    %188 = vector.extract_strided_slice %0 {offsets = [252, 0], sizes = [8, 8], strides = [1, 1]} : vector<288x8xf32> to vector<8x8xf32>
    %189 = vector.extract_strided_slice %0 {offsets = [264, 0], sizes = [8, 8], strides = [1, 1]} : vector<288x8xf32> to vector<8x8xf32>
    %190 = vector.extract_strided_slice %0 {offsets = [276, 0], sizes = [8, 8], strides = [1, 1]} : vector<288x8xf32> to vector<8x8xf32>
    %191 = tpu.concatenate %187, %188, %189, %190 in 0 : vector<8x8xf32>, vector<8x8xf32>, vector<8x8xf32>, vector<8x8xf32> -> vector<32x8xf32>
    %192 = arith.truncf %191 : vector<32x8xf32> to vector<32x8xbf16>
    %193 = vector.extract_strided_slice %0 {offsets = [170, 0], sizes = [8, 8], strides = [1, 1]} : vector<288x8xf32> to vector<8x8xf32>
    %194 = vector.extract_strided_slice %0 {offsets = [182, 0], sizes = [8, 8], strides = [1, 1]} : vector<288x8xf32> to vector<8x8xf32>
    %195 = vector.extract_strided_slice %0 {offsets = [194, 0], sizes = [8, 8], strides = [1, 1]} : vector<288x8xf32> to vector<8x8xf32>
    %196 = vector.extract_strided_slice %0 {offsets = [206, 0], sizes = [8, 8], strides = [1, 1]} : vector<288x8xf32> to vector<8x8xf32>
    %197 = tpu.concatenate %193, %194, %195, %196 in 0 : vector<8x8xf32>, vector<8x8xf32>, vector<8x8xf32>, vector<8x8xf32> -> vector<32x8xf32>
    %198 = arith.truncf %197 : vector<32x8xf32> to vector<32x8xbf16>
    %199 = vector.extract_strided_slice %0 {offsets = [242, 0], sizes = [8, 8], strides = [1, 1]} : vector<288x8xf32> to vector<8x8xf32>
    %200 = vector.extract_strided_slice %0 {offsets = [254, 0], sizes = [8, 8], strides = [1, 1]} : vector<288x8xf32> to vector<8x8xf32>
    %201 = vector.extract_strided_slice %0 {offsets = [266, 0], sizes = [8, 8], strides = [1, 1]} : vector<288x8xf32> to vector<8x8xf32>
    %202 = vector.extract_strided_slice %0 {offsets = [278, 0], sizes = [8, 8], strides = [1, 1]} : vector<288x8xf32> to vector<8x8xf32>
    %203 = tpu.concatenate %199, %200, %201, %202 in 0 : vector<8x8xf32>, vector<8x8xf32>, vector<8x8xf32>, vector<8x8xf32> -> vector<32x8xf32>
    %204 = arith.truncf %203 : vector<32x8xf32> to vector<32x8xbf16>
    %205 = vector.extract_strided_slice %0 {offsets = [172, 0], sizes = [8, 8], strides = [1, 1]} : vector<288x8xf32> to vector<8x8xf32>
    %206 = vector.extract_strided_slice %0 {offsets = [184, 0], sizes = [8, 8], strides = [1, 1]} : vector<288x8xf32> to vector<8x8xf32>
    %207 = vector.extract_strided_slice %0 {offsets = [196, 0], sizes = [8, 8], strides = [1, 1]} : vector<288x8xf32> to vector<8x8xf32>
    %208 = vector.extract_strided_slice %0 {offsets = [208, 0], sizes = [8, 8], strides = [1, 1]} : vector<288x8xf32> to vector<8x8xf32>
    %209 = tpu.concatenate %205, %206, %207, %208 in 0 : vector<8x8xf32>, vector<8x8xf32>, vector<8x8xf32>, vector<8x8xf32> -> vector<32x8xf32>
    %210 = arith.truncf %209 : vector<32x8xf32> to vector<32x8xbf16>
    %211 = vector.extract_strided_slice %0 {offsets = [244, 0], sizes = [8, 8], strides = [1, 1]} : vector<288x8xf32> to vector<8x8xf32>
    %212 = vector.extract_strided_slice %0 {offsets = [256, 0], sizes = [8, 8], strides = [1, 1]} : vector<288x8xf32> to vector<8x8xf32>
    %213 = vector.extract_strided_slice %0 {offsets = [268, 0], sizes = [8, 8], strides = [1, 1]} : vector<288x8xf32> to vector<8x8xf32>
    %214 = vector.extract_strided_slice %0 {offsets = [280, 0], sizes = [8, 8], strides = [1, 1]} : vector<288x8xf32> to vector<8x8xf32>
    %215 = tpu.concatenate %211, %212, %213, %214 in 0 : vector<8x8xf32>, vector<8x8xf32>, vector<8x8xf32>, vector<8x8xf32> -> vector<32x8xf32>
    %216 = arith.truncf %215 : vector<32x8xf32> to vector<32x8xbf16>
    %cst = arith.constant 0.000000e+00 : f32
    %217 = vector.broadcast %cst : f32 to vector<32x16xf32>
    %cst_1 = arith.constant 0.000000e+00 : f32
    %218 = vector.broadcast %cst_1 : f32 to vector<32x16xf32>
    %cst_2 = arith.constant 0.000000e+00 : f32
    %219 = vector.broadcast %cst_2 : f32 to vector<32x16xf32>
    %cst_3 = arith.constant 0.000000e+00 : f32
    %220 = vector.broadcast %cst_3 : f32 to vector<32x16xf32>
    %221 = tpu.concatenate %6, %12, %42, %48 in 0 : vector<32x8xbf16>, vector<32x8xbf16>, vector<32x8xbf16>, vector<32x8xbf16> -> vector<128x8xbf16>
    %c0_4 = arith.constant 0 : index
    %c0_5 = arith.constant 0 : index
    %c0_6 = arith.constant 0 : index
    %222 = vector.load %arg2[%c0_4, %c0_5, %c0_6] : memref<25x8x16xbf16, #tpu.memory_space<vmem>>, vector<1x8x16xbf16>
    %223 = vector.shape_cast %222 : vector<1x8x16xbf16> to vector<8x16xbf16>
    %cst_7 = arith.constant dense<0.000000e+00> : vector<128x16xf32>
    %224 = tpu.matmul %221, %223, %cst_7 {dimension_numbers = #tpu.dot_dimension_numbers<[1], [0], [0], [1], [0, 0, 1, 1], [], []>} : vector<128x8xbf16>, vector<8x16xbf16>, vector<128x16xf32> -> vector<128x16xf32>
    %225 = vector.extract_strided_slice %224 {offsets = [0, 0], sizes = [32, 16], strides = [1, 1]} : vector<128x16xf32> to vector<32x16xf32>
    %226 = arith.addf %217, %225 : vector<32x16xf32>
    %227 = vector.extract_strided_slice %224 {offsets = [32, 0], sizes = [32, 16], strides = [1, 1]} : vector<128x16xf32> to vector<32x16xf32>
    %228 = arith.addf %218, %227 : vector<32x16xf32>
    %229 = vector.extract_strided_slice %224 {offsets = [64, 0], sizes = [32, 16], strides = [1, 1]} : vector<128x16xf32> to vector<32x16xf32>
    %230 = arith.addf %219, %229 : vector<32x16xf32>
    %231 = vector.extract_strided_slice %224 {offsets = [96, 0], sizes = [32, 16], strides = [1, 1]} : vector<128x16xf32> to vector<32x16xf32>
    %232 = arith.addf %220, %231 : vector<32x16xf32>
    %233 = tpu.concatenate %12, %18, %48, %54 in 0 : vector<32x8xbf16>, vector<32x8xbf16>, vector<32x8xbf16>, vector<32x8xbf16> -> vector<128x8xbf16>
    %c1 = arith.constant 1 : index
    %c0_8 = arith.constant 0 : index
    %c0_9 = arith.constant 0 : index
    %234 = vector.load %arg2[%c1, %c0_8, %c0_9] : memref<25x8x16xbf16, #tpu.memory_space<vmem>>, vector<1x8x16xbf16>
    %235 = vector.shape_cast %234 : vector<1x8x16xbf16> to vector<8x16xbf16>
    %cst_10 = arith.constant dense<0.000000e+00> : vector<128x16xf32>
    %236 = tpu.matmul %233, %235, %cst_10 {dimension_numbers = #tpu.dot_dimension_numbers<[1], [0], [0], [1], [0, 0, 1, 1], [], []>} : vector<128x8xbf16>, vector<8x16xbf16>, vector<128x16xf32> -> vector<128x16xf32>
    %237 = vector.extract_strided_slice %236 {offsets = [0, 0], sizes = [32, 16], strides = [1, 1]} : vector<128x16xf32> to vector<32x16xf32>
    %238 = arith.addf %226, %237 : vector<32x16xf32>
    %239 = vector.extract_strided_slice %236 {offsets = [32, 0], sizes = [32, 16], strides = [1, 1]} : vector<128x16xf32> to vector<32x16xf32>
    %240 = arith.addf %228, %239 : vector<32x16xf32>
    %241 = vector.extract_strided_slice %236 {offsets = [64, 0], sizes = [32, 16], strides = [1, 1]} : vector<128x16xf32> to vector<32x16xf32>
    %242 = arith.addf %230, %241 : vector<32x16xf32>
    %243 = vector.extract_strided_slice %236 {offsets = [96, 0], sizes = [32, 16], strides = [1, 1]} : vector<128x16xf32> to vector<32x16xf32>
    %244 = arith.addf %232, %243 : vector<32x16xf32>
    %245 = tpu.concatenate %18, %24, %54, %60 in 0 : vector<32x8xbf16>, vector<32x8xbf16>, vector<32x8xbf16>, vector<32x8xbf16> -> vector<128x8xbf16>
    %c2 = arith.constant 2 : index
    %c0_11 = arith.constant 0 : index
    %c0_12 = arith.constant 0 : index
    %246 = vector.load %arg2[%c2, %c0_11, %c0_12] : memref<25x8x16xbf16, #tpu.memory_space<vmem>>, vector<1x8x16xbf16>
    %247 = vector.shape_cast %246 : vector<1x8x16xbf16> to vector<8x16xbf16>
    %cst_13 = arith.constant dense<0.000000e+00> : vector<128x16xf32>
    %248 = tpu.matmul %245, %247, %cst_13 {dimension_numbers = #tpu.dot_dimension_numbers<[1], [0], [0], [1], [0, 0, 1, 1], [], []>} : vector<128x8xbf16>, vector<8x16xbf16>, vector<128x16xf32> -> vector<128x16xf32>
    %249 = vector.extract_strided_slice %248 {offsets = [0, 0], sizes = [32, 16], strides = [1, 1]} : vector<128x16xf32> to vector<32x16xf32>
    %250 = arith.addf %238, %249 : vector<32x16xf32>
    %251 = vector.extract_strided_slice %248 {offsets = [32, 0], sizes = [32, 16], strides = [1, 1]} : vector<128x16xf32> to vector<32x16xf32>
    %252 = arith.addf %240, %251 : vector<32x16xf32>
    %253 = vector.extract_strided_slice %248 {offsets = [64, 0], sizes = [32, 16], strides = [1, 1]} : vector<128x16xf32> to vector<32x16xf32>
    %254 = arith.addf %242, %253 : vector<32x16xf32>
    %255 = vector.extract_strided_slice %248 {offsets = [96, 0], sizes = [32, 16], strides = [1, 1]} : vector<128x16xf32> to vector<32x16xf32>
    %256 = arith.addf %244, %255 : vector<32x16xf32>
    %257 = tpu.concatenate %24, %30, %60, %66 in 0 : vector<32x8xbf16>, vector<32x8xbf16>, vector<32x8xbf16>, vector<32x8xbf16> -> vector<128x8xbf16>
    %c3 = arith.constant 3 : index
    %c0_14 = arith.constant 0 : index
    %c0_15 = arith.constant 0 : index
    %258 = vector.load %arg2[%c3, %c0_14, %c0_15] : memref<25x8x16xbf16, #tpu.memory_space<vmem>>, vector<1x8x16xbf16>
    %259 = vector.shape_cast %258 : vector<1x8x16xbf16> to vector<8x16xbf16>
    %cst_16 = arith.constant dense<0.000000e+00> : vector<128x16xf32>
    %260 = tpu.matmul %257, %259, %cst_16 {dimension_numbers = #tpu.dot_dimension_numbers<[1], [0], [0], [1], [0, 0, 1, 1], [], []>} : vector<128x8xbf16>, vector<8x16xbf16>, vector<128x16xf32> -> vector<128x16xf32>
    %261 = vector.extract_strided_slice %260 {offsets = [0, 0], sizes = [32, 16], strides = [1, 1]} : vector<128x16xf32> to vector<32x16xf32>
    %262 = arith.addf %250, %261 : vector<32x16xf32>
    %263 = vector.extract_strided_slice %260 {offsets = [32, 0], sizes = [32, 16], strides = [1, 1]} : vector<128x16xf32> to vector<32x16xf32>
    %264 = arith.addf %252, %263 : vector<32x16xf32>
    %265 = vector.extract_strided_slice %260 {offsets = [64, 0], sizes = [32, 16], strides = [1, 1]} : vector<128x16xf32> to vector<32x16xf32>
    %266 = arith.addf %254, %265 : vector<32x16xf32>
    %267 = vector.extract_strided_slice %260 {offsets = [96, 0], sizes = [32, 16], strides = [1, 1]} : vector<128x16xf32> to vector<32x16xf32>
    %268 = arith.addf %256, %267 : vector<32x16xf32>
    %269 = tpu.concatenate %30, %36, %66, %72 in 0 : vector<32x8xbf16>, vector<32x8xbf16>, vector<32x8xbf16>, vector<32x8xbf16> -> vector<128x8xbf16>
    %c4 = arith.constant 4 : index
    %c0_17 = arith.constant 0 : index
    %c0_18 = arith.constant 0 : index
    %270 = vector.load %arg2[%c4, %c0_17, %c0_18] : memref<25x8x16xbf16, #tpu.memory_space<vmem>>, vector<1x8x16xbf16>
    %271 = vector.shape_cast %270 : vector<1x8x16xbf16> to vector<8x16xbf16>
    %cst_19 = arith.constant dense<0.000000e+00> : vector<128x16xf32>
    %272 = tpu.matmul %269, %271, %cst_19 {dimension_numbers = #tpu.dot_dimension_numbers<[1], [0], [0], [1], [0, 0, 1, 1], [], []>} : vector<128x8xbf16>, vector<8x16xbf16>, vector<128x16xf32> -> vector<128x16xf32>
    %273 = vector.extract_strided_slice %272 {offsets = [0, 0], sizes = [32, 16], strides = [1, 1]} : vector<128x16xf32> to vector<32x16xf32>
    %274 = arith.addf %262, %273 : vector<32x16xf32>
    %275 = vector.extract_strided_slice %272 {offsets = [32, 0], sizes = [32, 16], strides = [1, 1]} : vector<128x16xf32> to vector<32x16xf32>
    %276 = arith.addf %264, %275 : vector<32x16xf32>
    %277 = vector.extract_strided_slice %272 {offsets = [64, 0], sizes = [32, 16], strides = [1, 1]} : vector<128x16xf32> to vector<32x16xf32>
    %278 = arith.addf %266, %277 : vector<32x16xf32>
    %279 = vector.extract_strided_slice %272 {offsets = [96, 0], sizes = [32, 16], strides = [1, 1]} : vector<128x16xf32> to vector<32x16xf32>
    %280 = arith.addf %268, %279 : vector<32x16xf32>
    %281 = tpu.concatenate %42, %48, %78, %84 in 0 : vector<32x8xbf16>, vector<32x8xbf16>, vector<32x8xbf16>, vector<32x8xbf16> -> vector<128x8xbf16>
    %c5 = arith.constant 5 : index
    %c0_20 = arith.constant 0 : index
    %c0_21 = arith.constant 0 : index
    %282 = vector.load %arg2[%c5, %c0_20, %c0_21] : memref<25x8x16xbf16, #tpu.memory_space<vmem>>, vector<1x8x16xbf16>
    %283 = vector.shape_cast %282 : vector<1x8x16xbf16> to vector<8x16xbf16>
    %cst_22 = arith.constant dense<0.000000e+00> : vector<128x16xf32>
    %284 = tpu.matmul %281, %283, %cst_22 {dimension_numbers = #tpu.dot_dimension_numbers<[1], [0], [0], [1], [0, 0, 1, 1], [], []>} : vector<128x8xbf16>, vector<8x16xbf16>, vector<128x16xf32> -> vector<128x16xf32>
    %285 = vector.extract_strided_slice %284 {offsets = [0, 0], sizes = [32, 16], strides = [1, 1]} : vector<128x16xf32> to vector<32x16xf32>
    %286 = arith.addf %274, %285 : vector<32x16xf32>
    %287 = vector.extract_strided_slice %284 {offsets = [32, 0], sizes = [32, 16], strides = [1, 1]} : vector<128x16xf32> to vector<32x16xf32>
    %288 = arith.addf %276, %287 : vector<32x16xf32>
    %289 = vector.extract_strided_slice %284 {offsets = [64, 0], sizes = [32, 16], strides = [1, 1]} : vector<128x16xf32> to vector<32x16xf32>
    %290 = arith.addf %278, %289 : vector<32x16xf32>
    %291 = vector.extract_strided_slice %284 {offsets = [96, 0], sizes = [32, 16], strides = [1, 1]} : vector<128x16xf32> to vector<32x16xf32>
    %292 = arith.addf %280, %291 : vector<32x16xf32>
    %293 = tpu.concatenate %48, %54, %84, %90 in 0 : vector<32x8xbf16>, vector<32x8xbf16>, vector<32x8xbf16>, vector<32x8xbf16> -> vector<128x8xbf16>
    %c6 = arith.constant 6 : index
    %c0_23 = arith.constant 0 : index
    %c0_24 = arith.constant 0 : index
    %294 = vector.load %arg2[%c6, %c0_23, %c0_24] : memref<25x8x16xbf16, #tpu.memory_space<vmem>>, vector<1x8x16xbf16>
    %295 = vector.shape_cast %294 : vector<1x8x16xbf16> to vector<8x16xbf16>
    %cst_25 = arith.constant dense<0.000000e+00> : vector<128x16xf32>
    %296 = tpu.matmul %293, %295, %cst_25 {dimension_numbers = #tpu.dot_dimension_numbers<[1], [0], [0], [1], [0, 0, 1, 1], [], []>} : vector<128x8xbf16>, vector<8x16xbf16>, vector<128x16xf32> -> vector<128x16xf32>
    %297 = vector.extract_strided_slice %296 {offsets = [0, 0], sizes = [32, 16], strides = [1, 1]} : vector<128x16xf32> to vector<32x16xf32>
    %298 = arith.addf %286, %297 : vector<32x16xf32>
    %299 = vector.extract_strided_slice %296 {offsets = [32, 0], sizes = [32, 16], strides = [1, 1]} : vector<128x16xf32> to vector<32x16xf32>
    %300 = arith.addf %288, %299 : vector<32x16xf32>
    %301 = vector.extract_strided_slice %296 {offsets = [64, 0], sizes = [32, 16], strides = [1, 1]} : vector<128x16xf32> to vector<32x16xf32>
    %302 = arith.addf %290, %301 : vector<32x16xf32>
    %303 = vector.extract_strided_slice %296 {offsets = [96, 0], sizes = [32, 16], strides = [1, 1]} : vector<128x16xf32> to vector<32x16xf32>
    %304 = arith.addf %292, %303 : vector<32x16xf32>
    %305 = tpu.concatenate %54, %60, %90, %96 in 0 : vector<32x8xbf16>, vector<32x8xbf16>, vector<32x8xbf16>, vector<32x8xbf16> -> vector<128x8xbf16>
    %c7 = arith.constant 7 : index
    %c0_26 = arith.constant 0 : index
    %c0_27 = arith.constant 0 : index
    %306 = vector.load %arg2[%c7, %c0_26, %c0_27] : memref<25x8x16xbf16, #tpu.memory_space<vmem>>, vector<1x8x16xbf16>
    %307 = vector.shape_cast %306 : vector<1x8x16xbf16> to vector<8x16xbf16>
    %cst_28 = arith.constant dense<0.000000e+00> : vector<128x16xf32>
    %308 = tpu.matmul %305, %307, %cst_28 {dimension_numbers = #tpu.dot_dimension_numbers<[1], [0], [0], [1], [0, 0, 1, 1], [], []>} : vector<128x8xbf16>, vector<8x16xbf16>, vector<128x16xf32> -> vector<128x16xf32>
    %309 = vector.extract_strided_slice %308 {offsets = [0, 0], sizes = [32, 16], strides = [1, 1]} : vector<128x16xf32> to vector<32x16xf32>
    %310 = arith.addf %298, %309 : vector<32x16xf32>
    %311 = vector.extract_strided_slice %308 {offsets = [32, 0], sizes = [32, 16], strides = [1, 1]} : vector<128x16xf32> to vector<32x16xf32>
    %312 = arith.addf %300, %311 : vector<32x16xf32>
    %313 = vector.extract_strided_slice %308 {offsets = [64, 0], sizes = [32, 16], strides = [1, 1]} : vector<128x16xf32> to vector<32x16xf32>
    %314 = arith.addf %302, %313 : vector<32x16xf32>
    %315 = vector.extract_strided_slice %308 {offsets = [96, 0], sizes = [32, 16], strides = [1, 1]} : vector<128x16xf32> to vector<32x16xf32>
    %316 = arith.addf %304, %315 : vector<32x16xf32>
    %317 = tpu.concatenate %60, %66, %96, %102 in 0 : vector<32x8xbf16>, vector<32x8xbf16>, vector<32x8xbf16>, vector<32x8xbf16> -> vector<128x8xbf16>
    %c8 = arith.constant 8 : index
    %c0_29 = arith.constant 0 : index
    %c0_30 = arith.constant 0 : index
    %318 = vector.load %arg2[%c8, %c0_29, %c0_30] : memref<25x8x16xbf16, #tpu.memory_space<vmem>>, vector<1x8x16xbf16>
    %319 = vector.shape_cast %318 : vector<1x8x16xbf16> to vector<8x16xbf16>
    %cst_31 = arith.constant dense<0.000000e+00> : vector<128x16xf32>
    %320 = tpu.matmul %317, %319, %cst_31 {dimension_numbers = #tpu.dot_dimension_numbers<[1], [0], [0], [1], [0, 0, 1, 1], [], []>} : vector<128x8xbf16>, vector<8x16xbf16>, vector<128x16xf32> -> vector<128x16xf32>
    %321 = vector.extract_strided_slice %320 {offsets = [0, 0], sizes = [32, 16], strides = [1, 1]} : vector<128x16xf32> to vector<32x16xf32>
    %322 = arith.addf %310, %321 : vector<32x16xf32>
    %323 = vector.extract_strided_slice %320 {offsets = [32, 0], sizes = [32, 16], strides = [1, 1]} : vector<128x16xf32> to vector<32x16xf32>
    %324 = arith.addf %312, %323 : vector<32x16xf32>
    %325 = vector.extract_strided_slice %320 {offsets = [64, 0], sizes = [32, 16], strides = [1, 1]} : vector<128x16xf32> to vector<32x16xf32>
    %326 = arith.addf %314, %325 : vector<32x16xf32>
    %327 = vector.extract_strided_slice %320 {offsets = [96, 0], sizes = [32, 16], strides = [1, 1]} : vector<128x16xf32> to vector<32x16xf32>
    %328 = arith.addf %316, %327 : vector<32x16xf32>
    %329 = tpu.concatenate %66, %72, %102, %108 in 0 : vector<32x8xbf16>, vector<32x8xbf16>, vector<32x8xbf16>, vector<32x8xbf16> -> vector<128x8xbf16>
    %c9 = arith.constant 9 : index
    %c0_32 = arith.constant 0 : index
    %c0_33 = arith.constant 0 : index
    %330 = vector.load %arg2[%c9, %c0_32, %c0_33] : memref<25x8x16xbf16, #tpu.memory_space<vmem>>, vector<1x8x16xbf16>
    %331 = vector.shape_cast %330 : vector<1x8x16xbf16> to vector<8x16xbf16>
    %cst_34 = arith.constant dense<0.000000e+00> : vector<128x16xf32>
    %332 = tpu.matmul %329, %331, %cst_34 {dimension_numbers = #tpu.dot_dimension_numbers<[1], [0], [0], [1], [0, 0, 1, 1], [], []>} : vector<128x8xbf16>, vector<8x16xbf16>, vector<128x16xf32> -> vector<128x16xf32>
    %333 = vector.extract_strided_slice %332 {offsets = [0, 0], sizes = [32, 16], strides = [1, 1]} : vector<128x16xf32> to vector<32x16xf32>
    %334 = arith.addf %322, %333 : vector<32x16xf32>
    %335 = vector.extract_strided_slice %332 {offsets = [32, 0], sizes = [32, 16], strides = [1, 1]} : vector<128x16xf32> to vector<32x16xf32>
    %336 = arith.addf %324, %335 : vector<32x16xf32>
    %337 = vector.extract_strided_slice %332 {offsets = [64, 0], sizes = [32, 16], strides = [1, 1]} : vector<128x16xf32> to vector<32x16xf32>
    %338 = arith.addf %326, %337 : vector<32x16xf32>
    %339 = vector.extract_strided_slice %332 {offsets = [96, 0], sizes = [32, 16], strides = [1, 1]} : vector<128x16xf32> to vector<32x16xf32>
    %340 = arith.addf %328, %339 : vector<32x16xf32>
    %341 = tpu.concatenate %78, %84, %114, %120 in 0 : vector<32x8xbf16>, vector<32x8xbf16>, vector<32x8xbf16>, vector<32x8xbf16> -> vector<128x8xbf16>
    %c10 = arith.constant 10 : index
    %c0_35 = arith.constant 0 : index
    %c0_36 = arith.constant 0 : index
    %342 = vector.load %arg2[%c10, %c0_35, %c0_36] : memref<25x8x16xbf16, #tpu.memory_space<vmem>>, vector<1x8x16xbf16>
    %343 = vector.shape_cast %342 : vector<1x8x16xbf16> to vector<8x16xbf16>
    %cst_37 = arith.constant dense<0.000000e+00> : vector<128x16xf32>
    %344 = tpu.matmul %341, %343, %cst_37 {dimension_numbers = #tpu.dot_dimension_numbers<[1], [0], [0], [1], [0, 0, 1, 1], [], []>} : vector<128x8xbf16>, vector<8x16xbf16>, vector<128x16xf32> -> vector<128x16xf32>
    %345 = vector.extract_strided_slice %344 {offsets = [0, 0], sizes = [32, 16], strides = [1, 1]} : vector<128x16xf32> to vector<32x16xf32>
    %346 = arith.addf %334, %345 : vector<32x16xf32>
    %347 = vector.extract_strided_slice %344 {offsets = [32, 0], sizes = [32, 16], strides = [1, 1]} : vector<128x16xf32> to vector<32x16xf32>
    %348 = arith.addf %336, %347 : vector<32x16xf32>
    %349 = vector.extract_strided_slice %344 {offsets = [64, 0], sizes = [32, 16], strides = [1, 1]} : vector<128x16xf32> to vector<32x16xf32>
    %350 = arith.addf %338, %349 : vector<32x16xf32>
    %351 = vector.extract_strided_slice %344 {offsets = [96, 0], sizes = [32, 16], strides = [1, 1]} : vector<128x16xf32> to vector<32x16xf32>
    %352 = arith.addf %340, %351 : vector<32x16xf32>
    %353 = tpu.concatenate %84, %90, %120, %126 in 0 : vector<32x8xbf16>, vector<32x8xbf16>, vector<32x8xbf16>, vector<32x8xbf16> -> vector<128x8xbf16>
    %c11 = arith.constant 11 : index
    %c0_38 = arith.constant 0 : index
    %c0_39 = arith.constant 0 : index
    %354 = vector.load %arg2[%c11, %c0_38, %c0_39] : memref<25x8x16xbf16, #tpu.memory_space<vmem>>, vector<1x8x16xbf16>
    %355 = vector.shape_cast %354 : vector<1x8x16xbf16> to vector<8x16xbf16>
    %cst_40 = arith.constant dense<0.000000e+00> : vector<128x16xf32>
    %356 = tpu.matmul %353, %355, %cst_40 {dimension_numbers = #tpu.dot_dimension_numbers<[1], [0], [0], [1], [0, 0, 1, 1], [], []>} : vector<128x8xbf16>, vector<8x16xbf16>, vector<128x16xf32> -> vector<128x16xf32>
    %357 = vector.extract_strided_slice %356 {offsets = [0, 0], sizes = [32, 16], strides = [1, 1]} : vector<128x16xf32> to vector<32x16xf32>
    %358 = arith.addf %346, %357 : vector<32x16xf32>
    %359 = vector.extract_strided_slice %356 {offsets = [32, 0], sizes = [32, 16], strides = [1, 1]} : vector<128x16xf32> to vector<32x16xf32>
    %360 = arith.addf %348, %359 : vector<32x16xf32>
    %361 = vector.extract_strided_slice %356 {offsets = [64, 0], sizes = [32, 16], strides = [1, 1]} : vector<128x16xf32> to vector<32x16xf32>
    %362 = arith.addf %350, %361 : vector<32x16xf32>
    %363 = vector.extract_strided_slice %356 {offsets = [96, 0], sizes = [32, 16], strides = [1, 1]} : vector<128x16xf32> to vector<32x16xf32>
    %364 = arith.addf %352, %363 : vector<32x16xf32>
    %365 = tpu.concatenate %90, %96, %126, %132 in 0 : vector<32x8xbf16>, vector<32x8xbf16>, vector<32x8xbf16>, vector<32x8xbf16> -> vector<128x8xbf16>
    %c12 = arith.constant 12 : index
    %c0_41 = arith.constant 0 : index
    %c0_42 = arith.constant 0 : index
    %366 = vector.load %arg2[%c12, %c0_41, %c0_42] : memref<25x8x16xbf16, #tpu.memory_space<vmem>>, vector<1x8x16xbf16>
    %367 = vector.shape_cast %366 : vector<1x8x16xbf16> to vector<8x16xbf16>
    %cst_43 = arith.constant dense<0.000000e+00> : vector<128x16xf32>
    %368 = tpu.matmul %365, %367, %cst_43 {dimension_numbers = #tpu.dot_dimension_numbers<[1], [0], [0], [1], [0, 0, 1, 1], [], []>} : vector<128x8xbf16>, vector<8x16xbf16>, vector<128x16xf32> -> vector<128x16xf32>
    %369 = vector.extract_strided_slice %368 {offsets = [0, 0], sizes = [32, 16], strides = [1, 1]} : vector<128x16xf32> to vector<32x16xf32>
    %370 = arith.addf %358, %369 : vector<32x16xf32>
    %371 = vector.extract_strided_slice %368 {offsets = [32, 0], sizes = [32, 16], strides = [1, 1]} : vector<128x16xf32> to vector<32x16xf32>
    %372 = arith.addf %360, %371 : vector<32x16xf32>
    %373 = vector.extract_strided_slice %368 {offsets = [64, 0], sizes = [32, 16], strides = [1, 1]} : vector<128x16xf32> to vector<32x16xf32>
    %374 = arith.addf %362, %373 : vector<32x16xf32>
    %375 = vector.extract_strided_slice %368 {offsets = [96, 0], sizes = [32, 16], strides = [1, 1]} : vector<128x16xf32> to vector<32x16xf32>
    %376 = arith.addf %364, %375 : vector<32x16xf32>
    %377 = tpu.concatenate %96, %102, %132, %138 in 0 : vector<32x8xbf16>, vector<32x8xbf16>, vector<32x8xbf16>, vector<32x8xbf16> -> vector<128x8xbf16>
    %c13 = arith.constant 13 : index
    %c0_44 = arith.constant 0 : index
    %c0_45 = arith.constant 0 : index
    %378 = vector.load %arg2[%c13, %c0_44, %c0_45] : memref<25x8x16xbf16, #tpu.memory_space<vmem>>, vector<1x8x16xbf16>
    %379 = vector.shape_cast %378 : vector<1x8x16xbf16> to vector<8x16xbf16>
    %cst_46 = arith.constant dense<0.000000e+00> : vector<128x16xf32>
    %380 = tpu.matmul %377, %379, %cst_46 {dimension_numbers = #tpu.dot_dimension_numbers<[1], [0], [0], [1], [0, 0, 1, 1], [], []>} : vector<128x8xbf16>, vector<8x16xbf16>, vector<128x16xf32> -> vector<128x16xf32>
    %381 = vector.extract_strided_slice %380 {offsets = [0, 0], sizes = [32, 16], strides = [1, 1]} : vector<128x16xf32> to vector<32x16xf32>
    %382 = arith.addf %370, %381 : vector<32x16xf32>
    %383 = vector.extract_strided_slice %380 {offsets = [32, 0], sizes = [32, 16], strides = [1, 1]} : vector<128x16xf32> to vector<32x16xf32>
    %384 = arith.addf %372, %383 : vector<32x16xf32>
    %385 = vector.extract_strided_slice %380 {offsets = [64, 0], sizes = [32, 16], strides = [1, 1]} : vector<128x16xf32> to vector<32x16xf32>
    %386 = arith.addf %374, %385 : vector<32x16xf32>
    %387 = vector.extract_strided_slice %380 {offsets = [96, 0], sizes = [32, 16], strides = [1, 1]} : vector<128x16xf32> to vector<32x16xf32>
    %388 = arith.addf %376, %387 : vector<32x16xf32>
    %389 = tpu.concatenate %102, %108, %138, %144 in 0 : vector<32x8xbf16>, vector<32x8xbf16>, vector<32x8xbf16>, vector<32x8xbf16> -> vector<128x8xbf16>
    %c14 = arith.constant 14 : index
    %c0_47 = arith.constant 0 : index
    %c0_48 = arith.constant 0 : index
    %390 = vector.load %arg2[%c14, %c0_47, %c0_48] : memref<25x8x16xbf16, #tpu.memory_space<vmem>>, vector<1x8x16xbf16>
    %391 = vector.shape_cast %390 : vector<1x8x16xbf16> to vector<8x16xbf16>
    %cst_49 = arith.constant dense<0.000000e+00> : vector<128x16xf32>
    %392 = tpu.matmul %389, %391, %cst_49 {dimension_numbers = #tpu.dot_dimension_numbers<[1], [0], [0], [1], [0, 0, 1, 1], [], []>} : vector<128x8xbf16>, vector<8x16xbf16>, vector<128x16xf32> -> vector<128x16xf32>
    %393 = vector.extract_strided_slice %392 {offsets = [0, 0], sizes = [32, 16], strides = [1, 1]} : vector<128x16xf32> to vector<32x16xf32>
    %394 = arith.addf %382, %393 : vector<32x16xf32>
    %395 = vector.extract_strided_slice %392 {offsets = [32, 0], sizes = [32, 16], strides = [1, 1]} : vector<128x16xf32> to vector<32x16xf32>
    %396 = arith.addf %384, %395 : vector<32x16xf32>
    %397 = vector.extract_strided_slice %392 {offsets = [64, 0], sizes = [32, 16], strides = [1, 1]} : vector<128x16xf32> to vector<32x16xf32>
    %398 = arith.addf %386, %397 : vector<32x16xf32>
    %399 = vector.extract_strided_slice %392 {offsets = [96, 0], sizes = [32, 16], strides = [1, 1]} : vector<128x16xf32> to vector<32x16xf32>
    %400 = arith.addf %388, %399 : vector<32x16xf32>
    %401 = tpu.concatenate %114, %120, %150, %156 in 0 : vector<32x8xbf16>, vector<32x8xbf16>, vector<32x8xbf16>, vector<32x8xbf16> -> vector<128x8xbf16>
    %c15 = arith.constant 15 : index
    %c0_50 = arith.constant 0 : index
    %c0_51 = arith.constant 0 : index
    %402 = vector.load %arg2[%c15, %c0_50, %c0_51] : memref<25x8x16xbf16, #tpu.memory_space<vmem>>, vector<1x8x16xbf16>
    %403 = vector.shape_cast %402 : vector<1x8x16xbf16> to vector<8x16xbf16>
    %cst_52 = arith.constant dense<0.000000e+00> : vector<128x16xf32>
    %404 = tpu.matmul %401, %403, %cst_52 {dimension_numbers = #tpu.dot_dimension_numbers<[1], [0], [0], [1], [0, 0, 1, 1], [], []>} : vector<128x8xbf16>, vector<8x16xbf16>, vector<128x16xf32> -> vector<128x16xf32>
    %405 = vector.extract_strided_slice %404 {offsets = [0, 0], sizes = [32, 16], strides = [1, 1]} : vector<128x16xf32> to vector<32x16xf32>
    %406 = arith.addf %394, %405 : vector<32x16xf32>
    %407 = vector.extract_strided_slice %404 {offsets = [32, 0], sizes = [32, 16], strides = [1, 1]} : vector<128x16xf32> to vector<32x16xf32>
    %408 = arith.addf %396, %407 : vector<32x16xf32>
    %409 = vector.extract_strided_slice %404 {offsets = [64, 0], sizes = [32, 16], strides = [1, 1]} : vector<128x16xf32> to vector<32x16xf32>
    %410 = arith.addf %398, %409 : vector<32x16xf32>
    %411 = vector.extract_strided_slice %404 {offsets = [96, 0], sizes = [32, 16], strides = [1, 1]} : vector<128x16xf32> to vector<32x16xf32>
    %412 = arith.addf %400, %411 : vector<32x16xf32>
    %413 = tpu.concatenate %120, %126, %156, %162 in 0 : vector<32x8xbf16>, vector<32x8xbf16>, vector<32x8xbf16>, vector<32x8xbf16> -> vector<128x8xbf16>
    %c16 = arith.constant 16 : index
    %c0_53 = arith.constant 0 : index
    %c0_54 = arith.constant 0 : index
    %414 = vector.load %arg2[%c16, %c0_53, %c0_54] : memref<25x8x16xbf16, #tpu.memory_space<vmem>>, vector<1x8x16xbf16>
    %415 = vector.shape_cast %414 : vector<1x8x16xbf16> to vector<8x16xbf16>
    %cst_55 = arith.constant dense<0.000000e+00> : vector<128x16xf32>
    %416 = tpu.matmul %413, %415, %cst_55 {dimension_numbers = #tpu.dot_dimension_numbers<[1], [0], [0], [1], [0, 0, 1, 1], [], []>} : vector<128x8xbf16>, vector<8x16xbf16>, vector<128x16xf32> -> vector<128x16xf32>
    %417 = vector.extract_strided_slice %416 {offsets = [0, 0], sizes = [32, 16], strides = [1, 1]} : vector<128x16xf32> to vector<32x16xf32>
    %418 = arith.addf %406, %417 : vector<32x16xf32>
    %419 = vector.extract_strided_slice %416 {offsets = [32, 0], sizes = [32, 16], strides = [1, 1]} : vector<128x16xf32> to vector<32x16xf32>
    %420 = arith.addf %408, %419 : vector<32x16xf32>
    %421 = vector.extract_strided_slice %416 {offsets = [64, 0], sizes = [32, 16], strides = [1, 1]} : vector<128x16xf32> to vector<32x16xf32>
    %422 = arith.addf %410, %421 : vector<32x16xf32>
    %423 = vector.extract_strided_slice %416 {offsets = [96, 0], sizes = [32, 16], strides = [1, 1]} : vector<128x16xf32> to vector<32x16xf32>
    %424 = arith.addf %412, %423 : vector<32x16xf32>
    %425 = tpu.concatenate %126, %132, %162, %168 in 0 : vector<32x8xbf16>, vector<32x8xbf16>, vector<32x8xbf16>, vector<32x8xbf16> -> vector<128x8xbf16>
    %c17 = arith.constant 17 : index
    %c0_56 = arith.constant 0 : index
    %c0_57 = arith.constant 0 : index
    %426 = vector.load %arg2[%c17, %c0_56, %c0_57] : memref<25x8x16xbf16, #tpu.memory_space<vmem>>, vector<1x8x16xbf16>
    %427 = vector.shape_cast %426 : vector<1x8x16xbf16> to vector<8x16xbf16>
    %cst_58 = arith.constant dense<0.000000e+00> : vector<128x16xf32>
    %428 = tpu.matmul %425, %427, %cst_58 {dimension_numbers = #tpu.dot_dimension_numbers<[1], [0], [0], [1], [0, 0, 1, 1], [], []>} : vector<128x8xbf16>, vector<8x16xbf16>, vector<128x16xf32> -> vector<128x16xf32>
    %429 = vector.extract_strided_slice %428 {offsets = [0, 0], sizes = [32, 16], strides = [1, 1]} : vector<128x16xf32> to vector<32x16xf32>
    %430 = arith.addf %418, %429 : vector<32x16xf32>
    %431 = vector.extract_strided_slice %428 {offsets = [32, 0], sizes = [32, 16], strides = [1, 1]} : vector<128x16xf32> to vector<32x16xf32>
    %432 = arith.addf %420, %431 : vector<32x16xf32>
    %433 = vector.extract_strided_slice %428 {offsets = [64, 0], sizes = [32, 16], strides = [1, 1]} : vector<128x16xf32> to vector<32x16xf32>
    %434 = arith.addf %422, %433 : vector<32x16xf32>
    %435 = vector.extract_strided_slice %428 {offsets = [96, 0], sizes = [32, 16], strides = [1, 1]} : vector<128x16xf32> to vector<32x16xf32>
    %436 = arith.addf %424, %435 : vector<32x16xf32>
    %437 = tpu.concatenate %132, %138, %168, %174 in 0 : vector<32x8xbf16>, vector<32x8xbf16>, vector<32x8xbf16>, vector<32x8xbf16> -> vector<128x8xbf16>
    %c18 = arith.constant 18 : index
    %c0_59 = arith.constant 0 : index
    %c0_60 = arith.constant 0 : index
    %438 = vector.load %arg2[%c18, %c0_59, %c0_60] : memref<25x8x16xbf16, #tpu.memory_space<vmem>>, vector<1x8x16xbf16>
    %439 = vector.shape_cast %438 : vector<1x8x16xbf16> to vector<8x16xbf16>
    %cst_61 = arith.constant dense<0.000000e+00> : vector<128x16xf32>
    %440 = tpu.matmul %437, %439, %cst_61 {dimension_numbers = #tpu.dot_dimension_numbers<[1], [0], [0], [1], [0, 0, 1, 1], [], []>} : vector<128x8xbf16>, vector<8x16xbf16>, vector<128x16xf32> -> vector<128x16xf32>
    %441 = vector.extract_strided_slice %440 {offsets = [0, 0], sizes = [32, 16], strides = [1, 1]} : vector<128x16xf32> to vector<32x16xf32>
    %442 = arith.addf %430, %441 : vector<32x16xf32>
    %443 = vector.extract_strided_slice %440 {offsets = [32, 0], sizes = [32, 16], strides = [1, 1]} : vector<128x16xf32> to vector<32x16xf32>
    %444 = arith.addf %432, %443 : vector<32x16xf32>
    %445 = vector.extract_strided_slice %440 {offsets = [64, 0], sizes = [32, 16], strides = [1, 1]} : vector<128x16xf32> to vector<32x16xf32>
    %446 = arith.addf %434, %445 : vector<32x16xf32>
    %447 = vector.extract_strided_slice %440 {offsets = [96, 0], sizes = [32, 16], strides = [1, 1]} : vector<128x16xf32> to vector<32x16xf32>
    %448 = arith.addf %436, %447 : vector<32x16xf32>
    %449 = tpu.concatenate %138, %144, %174, %180 in 0 : vector<32x8xbf16>, vector<32x8xbf16>, vector<32x8xbf16>, vector<32x8xbf16> -> vector<128x8xbf16>
    %c19 = arith.constant 19 : index
    %c0_62 = arith.constant 0 : index
    %c0_63 = arith.constant 0 : index
    %450 = vector.load %arg2[%c19, %c0_62, %c0_63] : memref<25x8x16xbf16, #tpu.memory_space<vmem>>, vector<1x8x16xbf16>
    %451 = vector.shape_cast %450 : vector<1x8x16xbf16> to vector<8x16xbf16>
    %cst_64 = arith.constant dense<0.000000e+00> : vector<128x16xf32>
    %452 = tpu.matmul %449, %451, %cst_64 {dimension_numbers = #tpu.dot_dimension_numbers<[1], [0], [0], [1], [0, 0, 1, 1], [], []>} : vector<128x8xbf16>, vector<8x16xbf16>, vector<128x16xf32> -> vector<128x16xf32>
    %453 = vector.extract_strided_slice %452 {offsets = [0, 0], sizes = [32, 16], strides = [1, 1]} : vector<128x16xf32> to vector<32x16xf32>
    %454 = arith.addf %442, %453 : vector<32x16xf32>
    %455 = vector.extract_strided_slice %452 {offsets = [32, 0], sizes = [32, 16], strides = [1, 1]} : vector<128x16xf32> to vector<32x16xf32>
    %456 = arith.addf %444, %455 : vector<32x16xf32>
    %457 = vector.extract_strided_slice %452 {offsets = [64, 0], sizes = [32, 16], strides = [1, 1]} : vector<128x16xf32> to vector<32x16xf32>
    %458 = arith.addf %446, %457 : vector<32x16xf32>
    %459 = vector.extract_strided_slice %452 {offsets = [96, 0], sizes = [32, 16], strides = [1, 1]} : vector<128x16xf32> to vector<32x16xf32>
    %460 = arith.addf %448, %459 : vector<32x16xf32>
    %461 = tpu.concatenate %150, %156, %186, %192 in 0 : vector<32x8xbf16>, vector<32x8xbf16>, vector<32x8xbf16>, vector<32x8xbf16> -> vector<128x8xbf16>
    %c20 = arith.constant 20 : index
    %c0_65 = arith.constant 0 : index
    %c0_66 = arith.constant 0 : index
    %462 = vector.load %arg2[%c20, %c0_65, %c0_66] : memref<25x8x16xbf16, #tpu.memory_space<vmem>>, vector<1x8x16xbf16>
    %463 = vector.shape_cast %462 : vector<1x8x16xbf16> to vector<8x16xbf16>
    %cst_67 = arith.constant dense<0.000000e+00> : vector<128x16xf32>
    %464 = tpu.matmul %461, %463, %cst_67 {dimension_numbers = #tpu.dot_dimension_numbers<[1], [0], [0], [1], [0, 0, 1, 1], [], []>} : vector<128x8xbf16>, vector<8x16xbf16>, vector<128x16xf32> -> vector<128x16xf32>
    %465 = vector.extract_strided_slice %464 {offsets = [0, 0], sizes = [32, 16], strides = [1, 1]} : vector<128x16xf32> to vector<32x16xf32>
    %466 = arith.addf %454, %465 : vector<32x16xf32>
    %467 = vector.extract_strided_slice %464 {offsets = [32, 0], sizes = [32, 16], strides = [1, 1]} : vector<128x16xf32> to vector<32x16xf32>
    %468 = arith.addf %456, %467 : vector<32x16xf32>
    %469 = vector.extract_strided_slice %464 {offsets = [64, 0], sizes = [32, 16], strides = [1, 1]} : vector<128x16xf32> to vector<32x16xf32>
    %470 = arith.addf %458, %469 : vector<32x16xf32>
    %471 = vector.extract_strided_slice %464 {offsets = [96, 0], sizes = [32, 16], strides = [1, 1]} : vector<128x16xf32> to vector<32x16xf32>
    %472 = arith.addf %460, %471 : vector<32x16xf32>
    %473 = tpu.concatenate %156, %162, %192, %198 in 0 : vector<32x8xbf16>, vector<32x8xbf16>, vector<32x8xbf16>, vector<32x8xbf16> -> vector<128x8xbf16>
    %c21 = arith.constant 21 : index
    %c0_68 = arith.constant 0 : index
    %c0_69 = arith.constant 0 : index
    %474 = vector.load %arg2[%c21, %c0_68, %c0_69] : memref<25x8x16xbf16, #tpu.memory_space<vmem>>, vector<1x8x16xbf16>
    %475 = vector.shape_cast %474 : vector<1x8x16xbf16> to vector<8x16xbf16>
    %cst_70 = arith.constant dense<0.000000e+00> : vector<128x16xf32>
    %476 = tpu.matmul %473, %475, %cst_70 {dimension_numbers = #tpu.dot_dimension_numbers<[1], [0], [0], [1], [0, 0, 1, 1], [], []>} : vector<128x8xbf16>, vector<8x16xbf16>, vector<128x16xf32> -> vector<128x16xf32>
    %477 = vector.extract_strided_slice %476 {offsets = [0, 0], sizes = [32, 16], strides = [1, 1]} : vector<128x16xf32> to vector<32x16xf32>
    %478 = arith.addf %466, %477 : vector<32x16xf32>
    %479 = vector.extract_strided_slice %476 {offsets = [32, 0], sizes = [32, 16], strides = [1, 1]} : vector<128x16xf32> to vector<32x16xf32>
    %480 = arith.addf %468, %479 : vector<32x16xf32>
    %481 = vector.extract_strided_slice %476 {offsets = [64, 0], sizes = [32, 16], strides = [1, 1]} : vector<128x16xf32> to vector<32x16xf32>
    %482 = arith.addf %470, %481 : vector<32x16xf32>
    %483 = vector.extract_strided_slice %476 {offsets = [96, 0], sizes = [32, 16], strides = [1, 1]} : vector<128x16xf32> to vector<32x16xf32>
    %484 = arith.addf %472, %483 : vector<32x16xf32>
    %485 = tpu.concatenate %162, %168, %198, %204 in 0 : vector<32x8xbf16>, vector<32x8xbf16>, vector<32x8xbf16>, vector<32x8xbf16> -> vector<128x8xbf16>
    %c22 = arith.constant 22 : index
    %c0_71 = arith.constant 0 : index
    %c0_72 = arith.constant 0 : index
    %486 = vector.load %arg2[%c22, %c0_71, %c0_72] : memref<25x8x16xbf16, #tpu.memory_space<vmem>>, vector<1x8x16xbf16>
    %487 = vector.shape_cast %486 : vector<1x8x16xbf16> to vector<8x16xbf16>
    %cst_73 = arith.constant dense<0.000000e+00> : vector<128x16xf32>
    %488 = tpu.matmul %485, %487, %cst_73 {dimension_numbers = #tpu.dot_dimension_numbers<[1], [0], [0], [1], [0, 0, 1, 1], [], []>} : vector<128x8xbf16>, vector<8x16xbf16>, vector<128x16xf32> -> vector<128x16xf32>
    %489 = vector.extract_strided_slice %488 {offsets = [0, 0], sizes = [32, 16], strides = [1, 1]} : vector<128x16xf32> to vector<32x16xf32>
    %490 = arith.addf %478, %489 : vector<32x16xf32>
    %491 = vector.extract_strided_slice %488 {offsets = [32, 0], sizes = [32, 16], strides = [1, 1]} : vector<128x16xf32> to vector<32x16xf32>
    %492 = arith.addf %480, %491 : vector<32x16xf32>
    %493 = vector.extract_strided_slice %488 {offsets = [64, 0], sizes = [32, 16], strides = [1, 1]} : vector<128x16xf32> to vector<32x16xf32>
    %494 = arith.addf %482, %493 : vector<32x16xf32>
    %495 = vector.extract_strided_slice %488 {offsets = [96, 0], sizes = [32, 16], strides = [1, 1]} : vector<128x16xf32> to vector<32x16xf32>
    %496 = arith.addf %484, %495 : vector<32x16xf32>
    %497 = tpu.concatenate %168, %174, %204, %210 in 0 : vector<32x8xbf16>, vector<32x8xbf16>, vector<32x8xbf16>, vector<32x8xbf16> -> vector<128x8xbf16>
    %c23 = arith.constant 23 : index
    %c0_74 = arith.constant 0 : index
    %c0_75 = arith.constant 0 : index
    %498 = vector.load %arg2[%c23, %c0_74, %c0_75] : memref<25x8x16xbf16, #tpu.memory_space<vmem>>, vector<1x8x16xbf16>
    %499 = vector.shape_cast %498 : vector<1x8x16xbf16> to vector<8x16xbf16>
    %cst_76 = arith.constant dense<0.000000e+00> : vector<128x16xf32>
    %500 = tpu.matmul %497, %499, %cst_76 {dimension_numbers = #tpu.dot_dimension_numbers<[1], [0], [0], [1], [0, 0, 1, 1], [], []>} : vector<128x8xbf16>, vector<8x16xbf16>, vector<128x16xf32> -> vector<128x16xf32>
    %501 = vector.extract_strided_slice %500 {offsets = [0, 0], sizes = [32, 16], strides = [1, 1]} : vector<128x16xf32> to vector<32x16xf32>
    %502 = arith.addf %490, %501 : vector<32x16xf32>
    %503 = vector.extract_strided_slice %500 {offsets = [32, 0], sizes = [32, 16], strides = [1, 1]} : vector<128x16xf32> to vector<32x16xf32>
    %504 = arith.addf %492, %503 : vector<32x16xf32>
    %505 = vector.extract_strided_slice %500 {offsets = [64, 0], sizes = [32, 16], strides = [1, 1]} : vector<128x16xf32> to vector<32x16xf32>
    %506 = arith.addf %494, %505 : vector<32x16xf32>
    %507 = vector.extract_strided_slice %500 {offsets = [96, 0], sizes = [32, 16], strides = [1, 1]} : vector<128x16xf32> to vector<32x16xf32>
    %508 = arith.addf %496, %507 : vector<32x16xf32>
    %509 = tpu.concatenate %174, %180, %210, %216 in 0 : vector<32x8xbf16>, vector<32x8xbf16>, vector<32x8xbf16>, vector<32x8xbf16> -> vector<128x8xbf16>
    %c24 = arith.constant 24 : index
    %c0_77 = arith.constant 0 : index
    %c0_78 = arith.constant 0 : index
    %510 = vector.load %arg2[%c24, %c0_77, %c0_78] : memref<25x8x16xbf16, #tpu.memory_space<vmem>>, vector<1x8x16xbf16>
    %511 = vector.shape_cast %510 : vector<1x8x16xbf16> to vector<8x16xbf16>
    %cst_79 = arith.constant dense<0.000000e+00> : vector<128x16xf32>
    %512 = tpu.matmul %509, %511, %cst_79 {dimension_numbers = #tpu.dot_dimension_numbers<[1], [0], [0], [1], [0, 0, 1, 1], [], []>} : vector<128x8xbf16>, vector<8x16xbf16>, vector<128x16xf32> -> vector<128x16xf32>
    %513 = vector.extract_strided_slice %512 {offsets = [0, 0], sizes = [32, 16], strides = [1, 1]} : vector<128x16xf32> to vector<32x16xf32>
    %514 = arith.addf %502, %513 : vector<32x16xf32>
    %515 = vector.extract_strided_slice %512 {offsets = [32, 0], sizes = [32, 16], strides = [1, 1]} : vector<128x16xf32> to vector<32x16xf32>
    %516 = arith.addf %504, %515 : vector<32x16xf32>
    %517 = vector.extract_strided_slice %512 {offsets = [64, 0], sizes = [32, 16], strides = [1, 1]} : vector<128x16xf32> to vector<32x16xf32>
    %518 = arith.addf %506, %517 : vector<32x16xf32>
    %519 = vector.extract_strided_slice %512 {offsets = [96, 0], sizes = [32, 16], strides = [1, 1]} : vector<128x16xf32> to vector<32x16xf32>
    %520 = arith.addf %508, %519 : vector<32x16xf32>
    %521 = arith.maximumf %514, %516 : vector<32x16xf32>
    %522 = arith.maximumf %518, %520 : vector<32x16xf32>
    %523 = arith.maximumf %521, %522 : vector<32x16xf32>
    %c0_80 = arith.constant 0 : index
    %c0_81 = arith.constant 0 : index
    %524 = vector.load %arg3[%c0_80, %c0_81] : memref<1x16xf32, #tpu.memory_space<vmem>>, vector<1x16xf32>
    %525 = vector.broadcast %524 : vector<1x16xf32> to vector<32x16xf32>
    %526 = arith.addf %523, %525 : vector<32x16xf32>
    %cst_82 = arith.constant 0.000000e+00 : f32
    %527 = vector.broadcast %cst_82 : f32 to vector<32x16xf32>
    %528 = arith.maximumf %526, %527 : vector<32x16xf32>
    %cst_83 = arith.constant 0.000000e+00 : f32
    %529 = vector.broadcast %cst_83 : f32 to vector<2x128xf32>
    %530 = vector.extract_strided_slice %528 {offsets = [0, 0], sizes = [2, 16], strides = [1, 1]} : vector<32x16xf32> to vector<2x16xf32>
    %531 = arith.truncf %530 : vector<2x16xf32> to vector<2x16xbf16>
    %c0_84 = arith.constant 0 : index
    %c0_85 = arith.constant 0 : index
    %c0_86 = arith.constant 0 : index
    %532 = vector.load %arg4[%c0_84, %c0_85, %c0_86] : memref<16x16x128xbf16, #tpu.memory_space<vmem>>, vector<1x16x128xbf16>
    %533 = vector.shape_cast %532 : vector<1x16x128xbf16> to vector<16x128xbf16>
    %cst_87 = arith.constant dense<0.000000e+00> : vector<2x128xf32>
    %534 = tpu.matmul %531, %533, %cst_87 {dimension_numbers = #tpu.dot_dimension_numbers<[1], [0], [0], [1], [0, 0, 1, 1], [], []>} : vector<2x16xbf16>, vector<16x128xbf16>, vector<2x128xf32> -> vector<2x128xf32>
    %535 = arith.addf %529, %534 : vector<2x128xf32>
    %536 = vector.extract_strided_slice %528 {offsets = [2, 0], sizes = [2, 16], strides = [1, 1]} : vector<32x16xf32> to vector<2x16xf32>
    %537 = arith.truncf %536 : vector<2x16xf32> to vector<2x16xbf16>
    %c1_88 = arith.constant 1 : index
    %c0_89 = arith.constant 0 : index
    %c0_90 = arith.constant 0 : index
    %538 = vector.load %arg4[%c1_88, %c0_89, %c0_90] : memref<16x16x128xbf16, #tpu.memory_space<vmem>>, vector<1x16x128xbf16>
    %539 = vector.shape_cast %538 : vector<1x16x128xbf16> to vector<16x128xbf16>
    %cst_91 = arith.constant dense<0.000000e+00> : vector<2x128xf32>
    %540 = tpu.matmul %537, %539, %cst_91 {dimension_numbers = #tpu.dot_dimension_numbers<[1], [0], [0], [1], [0, 0, 1, 1], [], []>} : vector<2x16xbf16>, vector<16x128xbf16>, vector<2x128xf32> -> vector<2x128xf32>
    %541 = arith.addf %535, %540 : vector<2x128xf32>
    %542 = vector.extract_strided_slice %528 {offsets = [4, 0], sizes = [2, 16], strides = [1, 1]} : vector<32x16xf32> to vector<2x16xf32>
    %543 = arith.truncf %542 : vector<2x16xf32> to vector<2x16xbf16>
    %c2_92 = arith.constant 2 : index
    %c0_93 = arith.constant 0 : index
    %c0_94 = arith.constant 0 : index
    %544 = vector.load %arg4[%c2_92, %c0_93, %c0_94] : memref<16x16x128xbf16, #tpu.memory_space<vmem>>, vector<1x16x128xbf16>
    %545 = vector.shape_cast %544 : vector<1x16x128xbf16> to vector<16x128xbf16>
    %cst_95 = arith.constant dense<0.000000e+00> : vector<2x128xf32>
    %546 = tpu.matmul %543, %545, %cst_95 {dimension_numbers = #tpu.dot_dimension_numbers<[1], [0], [0], [1], [0, 0, 1, 1], [], []>} : vector<2x16xbf16>, vector<16x128xbf16>, vector<2x128xf32> -> vector<2x128xf32>
    %547 = arith.addf %541, %546 : vector<2x128xf32>
    %548 = vector.extract_strided_slice %528 {offsets = [6, 0], sizes = [2, 16], strides = [1, 1]} : vector<32x16xf32> to vector<2x16xf32>
    %549 = arith.truncf %548 : vector<2x16xf32> to vector<2x16xbf16>
    %c3_96 = arith.constant 3 : index
    %c0_97 = arith.constant 0 : index
    %c0_98 = arith.constant 0 : index
    %550 = vector.load %arg4[%c3_96, %c0_97, %c0_98] : memref<16x16x128xbf16, #tpu.memory_space<vmem>>, vector<1x16x128xbf16>
    %551 = vector.shape_cast %550 : vector<1x16x128xbf16> to vector<16x128xbf16>
    %cst_99 = arith.constant dense<0.000000e+00> : vector<2x128xf32>
    %552 = tpu.matmul %549, %551, %cst_99 {dimension_numbers = #tpu.dot_dimension_numbers<[1], [0], [0], [1], [0, 0, 1, 1], [], []>} : vector<2x16xbf16>, vector<16x128xbf16>, vector<2x128xf32> -> vector<2x128xf32>
    %553 = arith.addf %547, %552 : vector<2x128xf32>
    %554 = vector.extract_strided_slice %528 {offsets = [8, 0], sizes = [2, 16], strides = [1, 1]} : vector<32x16xf32> to vector<2x16xf32>
    %555 = arith.truncf %554 : vector<2x16xf32> to vector<2x16xbf16>
    %c4_100 = arith.constant 4 : index
    %c0_101 = arith.constant 0 : index
    %c0_102 = arith.constant 0 : index
    %556 = vector.load %arg4[%c4_100, %c0_101, %c0_102] : memref<16x16x128xbf16, #tpu.memory_space<vmem>>, vector<1x16x128xbf16>
    %557 = vector.shape_cast %556 : vector<1x16x128xbf16> to vector<16x128xbf16>
    %cst_103 = arith.constant dense<0.000000e+00> : vector<2x128xf32>
    %558 = tpu.matmul %555, %557, %cst_103 {dimension_numbers = #tpu.dot_dimension_numbers<[1], [0], [0], [1], [0, 0, 1, 1], [], []>} : vector<2x16xbf16>, vector<16x128xbf16>, vector<2x128xf32> -> vector<2x128xf32>
    %559 = arith.addf %553, %558 : vector<2x128xf32>
    %560 = vector.extract_strided_slice %528 {offsets = [10, 0], sizes = [2, 16], strides = [1, 1]} : vector<32x16xf32> to vector<2x16xf32>
    %561 = arith.truncf %560 : vector<2x16xf32> to vector<2x16xbf16>
    %c5_104 = arith.constant 5 : index
    %c0_105 = arith.constant 0 : index
    %c0_106 = arith.constant 0 : index
    %562 = vector.load %arg4[%c5_104, %c0_105, %c0_106] : memref<16x16x128xbf16, #tpu.memory_space<vmem>>, vector<1x16x128xbf16>
    %563 = vector.shape_cast %562 : vector<1x16x128xbf16> to vector<16x128xbf16>
    %cst_107 = arith.constant dense<0.000000e+00> : vector<2x128xf32>
    %564 = tpu.matmul %561, %563, %cst_107 {dimension_numbers = #tpu.dot_dimension_numbers<[1], [0], [0], [1], [0, 0, 1, 1], [], []>} : vector<2x16xbf16>, vector<16x128xbf16>, vector<2x128xf32> -> vector<2x128xf32>
    %565 = arith.addf %559, %564 : vector<2x128xf32>
    %566 = vector.extract_strided_slice %528 {offsets = [12, 0], sizes = [2, 16], strides = [1, 1]} : vector<32x16xf32> to vector<2x16xf32>
    %567 = arith.truncf %566 : vector<2x16xf32> to vector<2x16xbf16>
    %c6_108 = arith.constant 6 : index
    %c0_109 = arith.constant 0 : index
    %c0_110 = arith.constant 0 : index
    %568 = vector.load %arg4[%c6_108, %c0_109, %c0_110] : memref<16x16x128xbf16, #tpu.memory_space<vmem>>, vector<1x16x128xbf16>
    %569 = vector.shape_cast %568 : vector<1x16x128xbf16> to vector<16x128xbf16>
    %cst_111 = arith.constant dense<0.000000e+00> : vector<2x128xf32>
    %570 = tpu.matmul %567, %569, %cst_111 {dimension_numbers = #tpu.dot_dimension_numbers<[1], [0], [0], [1], [0, 0, 1, 1], [], []>} : vector<2x16xbf16>, vector<16x128xbf16>, vector<2x128xf32> -> vector<2x128xf32>
    %571 = arith.addf %565, %570 : vector<2x128xf32>
    %572 = vector.extract_strided_slice %528 {offsets = [14, 0], sizes = [2, 16], strides = [1, 1]} : vector<32x16xf32> to vector<2x16xf32>
    %573 = arith.truncf %572 : vector<2x16xf32> to vector<2x16xbf16>
    %c7_112 = arith.constant 7 : index
    %c0_113 = arith.constant 0 : index
    %c0_114 = arith.constant 0 : index
    %574 = vector.load %arg4[%c7_112, %c0_113, %c0_114] : memref<16x16x128xbf16, #tpu.memory_space<vmem>>, vector<1x16x128xbf16>
    %575 = vector.shape_cast %574 : vector<1x16x128xbf16> to vector<16x128xbf16>
    %cst_115 = arith.constant dense<0.000000e+00> : vector<2x128xf32>
    %576 = tpu.matmul %573, %575, %cst_115 {dimension_numbers = #tpu.dot_dimension_numbers<[1], [0], [0], [1], [0, 0, 1, 1], [], []>} : vector<2x16xbf16>, vector<16x128xbf16>, vector<2x128xf32> -> vector<2x128xf32>
    %577 = arith.addf %571, %576 : vector<2x128xf32>
    %578 = vector.extract_strided_slice %528 {offsets = [16, 0], sizes = [2, 16], strides = [1, 1]} : vector<32x16xf32> to vector<2x16xf32>
    %579 = arith.truncf %578 : vector<2x16xf32> to vector<2x16xbf16>
    %c8_116 = arith.constant 8 : index
    %c0_117 = arith.constant 0 : index
    %c0_118 = arith.constant 0 : index
    %580 = vector.load %arg4[%c8_116, %c0_117, %c0_118] : memref<16x16x128xbf16, #tpu.memory_space<vmem>>, vector<1x16x128xbf16>
    %581 = vector.shape_cast %580 : vector<1x16x128xbf16> to vector<16x128xbf16>
    %cst_119 = arith.constant dense<0.000000e+00> : vector<2x128xf32>
    %582 = tpu.matmul %579, %581, %cst_119 {dimension_numbers = #tpu.dot_dimension_numbers<[1], [0], [0], [1], [0, 0, 1, 1], [], []>} : vector<2x16xbf16>, vector<16x128xbf16>, vector<2x128xf32> -> vector<2x128xf32>
    %583 = arith.addf %577, %582 : vector<2x128xf32>
    %584 = vector.extract_strided_slice %528 {offsets = [18, 0], sizes = [2, 16], strides = [1, 1]} : vector<32x16xf32> to vector<2x16xf32>
    %585 = arith.truncf %584 : vector<2x16xf32> to vector<2x16xbf16>
    %c9_120 = arith.constant 9 : index
    %c0_121 = arith.constant 0 : index
    %c0_122 = arith.constant 0 : index
    %586 = vector.load %arg4[%c9_120, %c0_121, %c0_122] : memref<16x16x128xbf16, #tpu.memory_space<vmem>>, vector<1x16x128xbf16>
    %587 = vector.shape_cast %586 : vector<1x16x128xbf16> to vector<16x128xbf16>
    %cst_123 = arith.constant dense<0.000000e+00> : vector<2x128xf32>
    %588 = tpu.matmul %585, %587, %cst_123 {dimension_numbers = #tpu.dot_dimension_numbers<[1], [0], [0], [1], [0, 0, 1, 1], [], []>} : vector<2x16xbf16>, vector<16x128xbf16>, vector<2x128xf32> -> vector<2x128xf32>
    %589 = arith.addf %583, %588 : vector<2x128xf32>
    %590 = vector.extract_strided_slice %528 {offsets = [20, 0], sizes = [2, 16], strides = [1, 1]} : vector<32x16xf32> to vector<2x16xf32>
    %591 = arith.truncf %590 : vector<2x16xf32> to vector<2x16xbf16>
    %c10_124 = arith.constant 10 : index
    %c0_125 = arith.constant 0 : index
    %c0_126 = arith.constant 0 : index
    %592 = vector.load %arg4[%c10_124, %c0_125, %c0_126] : memref<16x16x128xbf16, #tpu.memory_space<vmem>>, vector<1x16x128xbf16>
    %593 = vector.shape_cast %592 : vector<1x16x128xbf16> to vector<16x128xbf16>
    %cst_127 = arith.constant dense<0.000000e+00> : vector<2x128xf32>
    %594 = tpu.matmul %591, %593, %cst_127 {dimension_numbers = #tpu.dot_dimension_numbers<[1], [0], [0], [1], [0, 0, 1, 1], [], []>} : vector<2x16xbf16>, vector<16x128xbf16>, vector<2x128xf32> -> vector<2x128xf32>
    %595 = arith.addf %589, %594 : vector<2x128xf32>
    %596 = vector.extract_strided_slice %528 {offsets = [22, 0], sizes = [2, 16], strides = [1, 1]} : vector<32x16xf32> to vector<2x16xf32>
    %597 = arith.truncf %596 : vector<2x16xf32> to vector<2x16xbf16>
    %c11_128 = arith.constant 11 : index
    %c0_129 = arith.constant 0 : index
    %c0_130 = arith.constant 0 : index
    %598 = vector.load %arg4[%c11_128, %c0_129, %c0_130] : memref<16x16x128xbf16, #tpu.memory_space<vmem>>, vector<1x16x128xbf16>
    %599 = vector.shape_cast %598 : vector<1x16x128xbf16> to vector<16x128xbf16>
    %cst_131 = arith.constant dense<0.000000e+00> : vector<2x128xf32>
    %600 = tpu.matmul %597, %599, %cst_131 {dimension_numbers = #tpu.dot_dimension_numbers<[1], [0], [0], [1], [0, 0, 1, 1], [], []>} : vector<2x16xbf16>, vector<16x128xbf16>, vector<2x128xf32> -> vector<2x128xf32>
    %601 = arith.addf %595, %600 : vector<2x128xf32>
    %602 = vector.extract_strided_slice %528 {offsets = [24, 0], sizes = [2, 16], strides = [1, 1]} : vector<32x16xf32> to vector<2x16xf32>
    %603 = arith.truncf %602 : vector<2x16xf32> to vector<2x16xbf16>
    %c12_132 = arith.constant 12 : index
    %c0_133 = arith.constant 0 : index
    %c0_134 = arith.constant 0 : index
    %604 = vector.load %arg4[%c12_132, %c0_133, %c0_134] : memref<16x16x128xbf16, #tpu.memory_space<vmem>>, vector<1x16x128xbf16>
    %605 = vector.shape_cast %604 : vector<1x16x128xbf16> to vector<16x128xbf16>
    %cst_135 = arith.constant dense<0.000000e+00> : vector<2x128xf32>
    %606 = tpu.matmul %603, %605, %cst_135 {dimension_numbers = #tpu.dot_dimension_numbers<[1], [0], [0], [1], [0, 0, 1, 1], [], []>} : vector<2x16xbf16>, vector<16x128xbf16>, vector<2x128xf32> -> vector<2x128xf32>
    %607 = arith.addf %601, %606 : vector<2x128xf32>
    %608 = vector.extract_strided_slice %528 {offsets = [26, 0], sizes = [2, 16], strides = [1, 1]} : vector<32x16xf32> to vector<2x16xf32>
    %609 = arith.truncf %608 : vector<2x16xf32> to vector<2x16xbf16>
    %c13_136 = arith.constant 13 : index
    %c0_137 = arith.constant 0 : index
    %c0_138 = arith.constant 0 : index
    %610 = vector.load %arg4[%c13_136, %c0_137, %c0_138] : memref<16x16x128xbf16, #tpu.memory_space<vmem>>, vector<1x16x128xbf16>
    %611 = vector.shape_cast %610 : vector<1x16x128xbf16> to vector<16x128xbf16>
    %cst_139 = arith.constant dense<0.000000e+00> : vector<2x128xf32>
    %612 = tpu.matmul %609, %611, %cst_139 {dimension_numbers = #tpu.dot_dimension_numbers<[1], [0], [0], [1], [0, 0, 1, 1], [], []>} : vector<2x16xbf16>, vector<16x128xbf16>, vector<2x128xf32> -> vector<2x128xf32>
    %613 = arith.addf %607, %612 : vector<2x128xf32>
    %614 = vector.extract_strided_slice %528 {offsets = [28, 0], sizes = [2, 16], strides = [1, 1]} : vector<32x16xf32> to vector<2x16xf32>
    %615 = arith.truncf %614 : vector<2x16xf32> to vector<2x16xbf16>
    %c14_140 = arith.constant 14 : index
    %c0_141 = arith.constant 0 : index
    %c0_142 = arith.constant 0 : index
    %616 = vector.load %arg4[%c14_140, %c0_141, %c0_142] : memref<16x16x128xbf16, #tpu.memory_space<vmem>>, vector<1x16x128xbf16>
    %617 = vector.shape_cast %616 : vector<1x16x128xbf16> to vector<16x128xbf16>
    %cst_143 = arith.constant dense<0.000000e+00> : vector<2x128xf32>
    %618 = tpu.matmul %615, %617, %cst_143 {dimension_numbers = #tpu.dot_dimension_numbers<[1], [0], [0], [1], [0, 0, 1, 1], [], []>} : vector<2x16xbf16>, vector<16x128xbf16>, vector<2x128xf32> -> vector<2x128xf32>
    %619 = arith.addf %613, %618 : vector<2x128xf32>
    %620 = vector.extract_strided_slice %528 {offsets = [30, 0], sizes = [2, 16], strides = [1, 1]} : vector<32x16xf32> to vector<2x16xf32>
    %621 = arith.truncf %620 : vector<2x16xf32> to vector<2x16xbf16>
    %c15_144 = arith.constant 15 : index
    %c0_145 = arith.constant 0 : index
    %c0_146 = arith.constant 0 : index
    %622 = vector.load %arg4[%c15_144, %c0_145, %c0_146] : memref<16x16x128xbf16, #tpu.memory_space<vmem>>, vector<1x16x128xbf16>
    %623 = vector.shape_cast %622 : vector<1x16x128xbf16> to vector<16x128xbf16>
    %cst_147 = arith.constant dense<0.000000e+00> : vector<2x128xf32>
    %624 = tpu.matmul %621, %623, %cst_147 {dimension_numbers = #tpu.dot_dimension_numbers<[1], [0], [0], [1], [0, 0, 1, 1], [], []>} : vector<2x16xbf16>, vector<16x128xbf16>, vector<2x128xf32> -> vector<2x128xf32>
    %625 = arith.addf %619, %624 : vector<2x128xf32>
    %c0_148 = arith.constant 0 : index
    %c0_149 = arith.constant 0 : index
    %626 = vector.load %arg5[%c0_148, %c0_149] : memref<1x128xf32, #tpu.memory_space<vmem>>, vector<1x128xf32>
    %627 = vector.broadcast %626 : vector<1x128xf32> to vector<2x128xf32>
    %628 = arith.addf %625, %627 : vector<2x128xf32>
    %cst_150 = arith.constant 0.000000e+00 : f32
    %629 = vector.broadcast %cst_150 : f32 to vector<2x128xf32>
    %630 = arith.maximumf %628, %629 : vector<2x128xf32>
    %631 = arith.truncf %630 : vector<2x128xf32> to vector<2x128xbf16>
    %c0_151 = arith.constant 0 : index
    %c0_152 = arith.constant 0 : index
    %632 = vector.load %arg6[%c0_151, %c0_152] : memref<128x128xbf16, #tpu.memory_space<vmem>>, vector<128x128xbf16>
    %cst_153 = arith.constant dense<0.000000e+00> : vector<2x128xf32>
    %633 = tpu.matmul %631, %632, %cst_153 {dimension_numbers = #tpu.dot_dimension_numbers<[1], [0], [0], [1], [0, 0, 1, 1], [], []>} : vector<2x128xbf16>, vector<128x128xbf16>, vector<2x128xf32> -> vector<2x128xf32>
    %c0_154 = arith.constant 0 : index
    %c0_155 = arith.constant 0 : index
    %634 = vector.load %arg7[%c0_154, %c0_155] : memref<1x128xf32, #tpu.memory_space<vmem>>, vector<1x128xf32>
    %635 = vector.broadcast %634 : vector<1x128xf32> to vector<2x128xf32>
    %636 = arith.addf %633, %635 : vector<2x128xf32>
    %cst_156 = arith.constant 0.000000e+00 : f32
    %637 = vector.broadcast %cst_156 : f32 to vector<2x128xf32>
    %638 = arith.maximumf %636, %637 : vector<2x128xf32>
    %639 = arith.truncf %638 : vector<2x128xf32> to vector<2x128xbf16>
    %c0_157 = arith.constant 0 : index
    %c0_158 = arith.constant 0 : index
    %640 = vector.load %arg8[%c0_157, %c0_158] : memref<128x128xbf16, #tpu.memory_space<vmem>>, vector<128x128xbf16>
    %cst_159 = arith.constant dense<0.000000e+00> : vector<2x128xf32>
    %641 = tpu.matmul %639, %640, %cst_159 {dimension_numbers = #tpu.dot_dimension_numbers<[1], [0], [0], [1], [0, 0, 1, 1], [], []>} : vector<2x128xbf16>, vector<128x128xbf16>, vector<2x128xf32> -> vector<2x128xf32>
    %c0_160 = arith.constant 0 : index
    %c0_161 = arith.constant 0 : index
    %642 = vector.load %arg9[%c0_160, %c0_161] : memref<1x128xf32, #tpu.memory_space<vmem>>, vector<1x128xf32>
    %643 = vector.broadcast %642 : vector<1x128xf32> to vector<2x128xf32>
    %644 = arith.addf %641, %643 : vector<2x128xf32>
    %c0_162 = arith.constant 0 : index
    %c0_163 = arith.constant 0 : index
    %645 = vector.load %arg10[%c0_162, %c0_163] : memref<2x128xf32, #tpu.memory_space<vmem>>, vector<2x128xf32>
    tpu.vector_store %arg10[%c0_162, %c0_163], %644 {strides = array<i32>} : memref<2x128xf32, #tpu.memory_space<vmem>>, vector<2x128xf32>,
    return
  }
  func.func @transform_0(%arg0: i32) -> (i32, i32) {
    %c0_i32 = arith.constant 0 : i32
    %c0_i32_0 = arith.constant 0 : i32
    %c0_i32_1 = arith.constant 0 : i32
    return %c0_i32, %c0_i32_0 : i32, i32
  }
  func.func @transform_1(%arg0: i32) -> (i32, i32, i32) {
    %c0_i32 = arith.constant 0 : i32
    %c0_i32_0 = arith.constant 0 : i32
    %c0_i32_1 = arith.constant 0 : i32
    %c0_i32_2 = arith.constant 0 : i32
    return %c0_i32, %c0_i32_0, %c0_i32_1 : i32, i32, i32
  }
  func.func @transform_2(%arg0: i32) -> (i32, i32) {
    %c0_i32 = arith.constant 0 : i32
    %c0_i32_0 = arith.constant 0 : i32
    %c0_i32_1 = arith.constant 0 : i32
    return %c0_i32, %c0_i32_0 : i32, i32
  }
  func.func @transform_3(%arg0: i32) -> (i32, i32, i32) {
    %c0_i32 = arith.constant 0 : i32
    %c0_i32_0 = arith.constant 0 : i32
    %c0_i32_1 = arith.constant 0 : i32
    %c0_i32_2 = arith.constant 0 : i32
    return %c0_i32, %c0_i32_0, %c0_i32_1 : i32, i32, i32
  }
  func.func @transform_4(%arg0: i32) -> (i32, i32) {
    %c0_i32 = arith.constant 0 : i32
    %c0_i32_0 = arith.constant 0 : i32
    %c0_i32_1 = arith.constant 0 : i32
    return %c0_i32, %c0_i32_0 : i32, i32
  }
  func.func @transform_5(%arg0: i32) -> (i32, i32) {
    %c0_i32 = arith.constant 0 : i32
    %c0_i32_0 = arith.constant 0 : i32
    %c0_i32_1 = arith.constant 0 : i32
    return %c0_i32, %c0_i32_0 : i32, i32
  }
  func.func @transform_6(%arg0: i32) -> (i32, i32) {
    %c0_i32 = arith.constant 0 : i32
    %c0_i32_0 = arith.constant 0 : i32
    %c0_i32_1 = arith.constant 0 : i32
    return %c0_i32, %c0_i32_0 : i32, i32
  }
  func.func @transform_7(%arg0: i32) -> (i32, i32) {
    %c0_i32 = arith.constant 0 : i32
    %c0_i32_0 = arith.constant 0 : i32
    %c0_i32_1 = arith.constant 0 : i32
    return %c0_i32, %c0_i32_0 : i32, i32
  }
  func.func @transform_8(%arg0: i32) -> (i32, i32) {
    %c0_i32 = arith.constant 0 : i32
    %c0_i32_0 = arith.constant 0 : i32
    %c0_i32_1 = arith.constant 0 : i32
    return %c0_i32, %c0_i32_0 : i32, i32
  }
  func.func @transform_9(%arg0: i32) -> (i32, i32) {
    %c0_i32 = arith.constant 0 : i32
    %c0_i32_0 = arith.constant 0 : i32
    %c0_i32_1 = arith.constant 0 : i32
    return %c0_i32, %c0_i32_0 : i32, i32
  }
}

</mosaic_0001>

<llo_original>
// kernel: lenet_forward.2
$region0: #{lenet_forward.2}
  #allocation0 [shape = 'u32[]', space=smem, size = 0x4, offset = 0x4, fixed_abs, tag = 'smem constant byte address 0x4 - core index']
  #allocation1 [shape = 'u32[72,128]{1,0:T(1,128)}', space=vmem, size = 0x9000, scoped, tag = 'internal scratch']
  %s0 = inlined_call_operand.vmem [shape: bf16[4,288,32], index: 0, kind: input, shape index: {}]
  %s1 = inlined_call_operand.vmem [shape: bf16[32,8], index: 1, kind: input, shape index: {}]
  %s2 = inlined_call_operand.vmem [shape: f32[1,8], index: 2, kind: input, shape index: {}]
  %s3 = inlined_call_operand.vmem [shape: f32[288,8], index: 3, kind: output, shape index: {}]
  %s4 = sld [smem:[#allocation0]]
  $region86: #{lenet_forward.2} parent=0
    _
  %s6 = ssub.s32 1, %s4
  %s7 = scalar_select 0, %s6, %s4
  $region1: #{lenet_forward.2} parent=0
    #allocation2 [shape = 'u8[294912]{0}', space=vmem, size = 0x48000, scoped, tag = 'input window, operand 0']
    loop: start=0, step=1, limit=4
    $region2: #{lenet_forward.2} parent=1 // loop_pre_header
      _
    $region3: #{lenet_forward.2} parent=1 // loop_header
      %s9 = sphi 0, %s13
      %p10 = scmp.ge.s32.totalorder %s9, 4
      %s19 = sphi 0, %s21
      %s22 = sphi 0, %s19
      %s23 = sphi 0, %s22
      %s39 = sphi 0, %s23
      %s43 = sphi 0, %s43
      %s45 = sphi 0, %s43
      %s46 = sphi 0, %s45
      %s60 = sphi 0, %s46
      %s64 = sphi 0, %s64
      %s66 = sphi 0, %s64
      %s67 = sphi 0, %s66
      %s81 = sphi 0, %s67
      %s87 = sphi 0, %s89
      %s90 = sphi 0, %s87
      %s91 = sphi 0, %s90
      %s107 = sphi 0, %s91
    $region4: #{lenet_forward.2} parent=1 // loop_header_branch
      %12 = sbr.rel (%p10) target = $region8
    $region5: #{lenet_forward.2} parent=1 // loop_body
      %s14 = ssub.s32 %s9, 1
      %s15 = ssub.s32 %s9, 2
      %s16 = sadd.s32 %s9, 1
      %s17 = ssub.s32 %s9, %s16
      %p18 = scmp.eq.s32.totalorder %s17, 0
      %s20 = sadd.s32 %s19, 1
      %s21 = scalar_select %p18, %s19, %s20
      %p24 = pneg %p18
      %p25 = scmp.eq.s32.totalorder %s9, 1
      %p26 = por %p24, %p25
      %p27 = scmp.ne.s32.totalorder %s19, %s22
      %p28 = scmp.eq.s32.totalorder %s9, 0
      %p29 = por %p27, %p28
      %p30 = scmp.ne.s32.totalorder %s19, %s22
      %p31 = scmp.eq.s32.totalorder %s14, 1
      %p32 = por %p30, %p31
      %p33 = scmp.ne.s32.totalorder %s22, %s23
      %p34 = scmp.eq.s32.totalorder %s14, 0
      %p35 = por %p33, %p34
      %p36 = scmp.ne.s32.totalorder %s22, %s23
      %p37 = scmp.eq.s32.totalorder %s15, 1
      %p38 = por %p36, %p37
      %p40 = scmp.ne.s32.totalorder %s23, %s39
      %p41 = scmp.eq.s32.totalorder %s15, 0
      %p42 = por %p40, %p41
      %s44 = sadd.s32 %s43, 1
      %p47 = scmp.eq.s32.totalorder %s9, 1
      %p48 = scmp.ne.s32.totalorder %s43, %s45
      %p49 = scmp.eq.s32.totalorder %s9, 0
      %p50 = por %p48, %p49
      %p51 = scmp.ne.s32.totalorder %s43, %s45
      %p52 = scmp.eq.s32.totalorder %s14, 1
      %p53 = por %p51, %p52
      %p54 = scmp.ne.s32.totalorder %s45, %s46
      %p55 = scmp.eq.s32.totalorder %s14, 0
      %p56 = por %p54, %p55
      %p57 = scmp.ne.s32.totalorder %s45, %s46
      %p58 = scmp.eq.s32.totalorder %s15, 1
      %p59 = por %p57, %p58
      %p61 = scmp.ne.s32.totalorder %s46, %s60
      %p62 = scmp.eq.s32.totalorder %s15, 0
      %p63 = por %p61, %p62
      %s65 = sadd.s32 %s64, 1
      %p68 = scmp.eq.s32.totalorder %s9, 1
      %p69 = scmp.ne.s32.totalorder %s64, %s66
      %p70 = scmp.eq.s32.totalorder %s9, 0
      %p71 = por %p69, %p70
      %p72 = scmp.ne.s32.totalorder %s64, %s66
      %p73 = scmp.eq.s32.totalorder %s14, 1
      %p74 = por %p72, %p73
      %p75 = scmp.ne.s32.totalorder %s66, %s67
      %p76 = scmp.eq.s32.totalorder %s14, 0
      %p77 = por %p75, %p76
      %p78 = scmp.ne.s32.totalorder %s66, %s67
      %p79 = scmp.eq.s32.totalorder %s15, 1
      %p80 = por %p78, %p79
      %p82 = scmp.ne.s32.totalorder %s67, %s81
      %p83 = scmp.eq.s32.totalorder %s15, 0
      %p84 = por %p82, %p83
      %s85 = ssub.s32 %s9, %s16
      %p86 = scmp.eq.s32.totalorder %s85, 0
      %s88 = sadd.s32 %s87, 1
      %s89 = scalar_select %p86, %s87, %s88
      %p92 = pneg %p86
      %p93 = scmp.eq.s32.totalorder %s9, 1
      %p94 = por %p92, %p93
      %p95 = scmp.ne.s32.totalorder %s87, %s90
      %p96 = scmp.eq.s32.totalorder %s9, 0
      %p97 = por %p95, %p96
      %p98 = scmp.ne.s32.totalorder %s87, %s90
      %p99 = scmp.eq.s32.totalorder %s14, 1
      %p100 = por %p98, %p99
      %p101 = scmp.ne.s32.totalorder %s90, %s91
      %p102 = scmp.eq.s32.totalorder %s14, 0
      %p103 = por %p101, %p102
      %p104 = scmp.ne.s32.totalorder %s90, %s91
      %p105 = scmp.eq.s32.totalorder %s15, 1
      %p106 = por %p104, %p105
      %p108 = scmp.ne.s32.totalorder %s91, %s107
      %p109 = scmp.eq.s32.totalorder %s15, 0
      %p110 = por %p108, %p109
      %p111 = scmp.le.s32.totalorder 1, %s9
      %p112 = scmp.lt.s32.totalorder %s9, 3
      %p113 = pnand %p111, %p112
      %p114 = pneg %p113
      // Predicated region
      $region9: #{lenet_forward.2} parent=5 // pred_check
        _
      $region10: #{lenet_forward.2} parent=5 // pred_check_branch
        %116 = sbr.rel (%p113) target = $region12
      $region11: #{lenet_forward.2} parent=5 // pred_region
        %s117 = ssub.s32 %s9, 1
        // Predicated region
        $region13: #{lenet_forward.2} parent=11 // pred_check
          %p118 = pneg %p56
        $region14: #{lenet_forward.2} parent=11 // pred_check_branch
          %120 = sbr.rel (%p118) target = $region16
        $region15: #{lenet_forward.2} parent=11 // pred_region
          _
        $region16: #{lenet_forward.2} parent=11 // pred_fallthru
          _
        // Predicated region
        $region17: #{lenet_forward.2} parent=11 // pred_check
          %p121 = pneg %p77
        $region18: #{lenet_forward.2} parent=11 // pred_check_branch
          %123 = sbr.rel (%p121) target = $region20
        $region19: #{lenet_forward.2} parent=11 // pred_region
          _
        $region20: #{lenet_forward.2} parent=11 // pred_fallthru
          _
      $region12: #{lenet_forward.2} parent=5 // pred_fallthru
        _
      %p124 = scmp.lt.s32.totalorder %s9, 2
      // Predicated region
      $region21: #{lenet_forward.2} parent=5 // pred_check
        %p125 = pneg %p124
      $region22: #{lenet_forward.2} parent=5 // pred_check_branch
        %127 = sbr.rel (%p125) target = $region24
      $region23: #{lenet_forward.2} parent=5 // pred_region
        // Predicated region
        $region25: #{lenet_forward.2} parent=23 // pred_check
          %p128 = pneg %p29
        $region26: #{lenet_forward.2} parent=23 // pred_check_branch
          %130 = sbr.rel (%p128) target = $region28
        $region27: #{lenet_forward.2} parent=23 // pred_region
          %s131 = sand.u32 %s19, 1
          %s132 = sand.u32 %s19, 1
          %s133 = smul.addr %s132, 288
          %s134 = scalar_lea.vmem [#allocation2], %s133
          %s135 = smul.u32 18, %s9
          %s136 = smul.addr %s135, 4
          %s137 = scalar_lea.vmem %s0, %s136
          // Predicated region
          $region29: #{lenet_forward.2} parent=27 // pred_check
            _
          $region30: #{lenet_forward.2} parent=27 // pred_check_branch
            %139 = sbr.rel (0) target = $region32
          $region31: #{lenet_forward.2} parent=27 // pred_region
            // Predicated region
            $region33: #{lenet_forward.2} parent=31 // pred_check
              _
            $region34: #{lenet_forward.2} parent=31 // pred_check_branch
              %141 = sbr.rel target = $region36
            $region35: #{lenet_forward.2} parent=31 // pred_region
              // Predicated region
              $region48: #{lenet_forward.2} parent=35 // pred_check
                _
              $region49: #{lenet_forward.2} parent=35 // pred_check_branch
                %299 = sbr.rel (0) target = $region51
              $region50: #{lenet_forward.2} parent=35 // pred_region
                loop: start=0, step=1, limit=1
                $region52: #{lenet_forward.2} parent=50 // loop_pre_header
                  _
                $region53: #{lenet_forward.2} parent=50 // loop_header
                  %s301 = sphi 0, %s305
                  %p302 = scmp.ge.s32.totalorder %s301, 1
                  %s306 = sphi %s137, %s137
                  %s307 = sphi %s134, %s134
                $region54: #{lenet_forward.2} parent=50 // loop_header_branch
                  %304 = sbr.rel (%p302) target = $region58
                $region55: #{lenet_forward.2} parent=50 // loop_body
                  _
                $region56: #{lenet_forward.2} parent=50 // loop_footer
                  %s305 = sadd.s32 1, %s301
                $region57: #{lenet_forward.2} parent=50 // loop_footer_branch
                  %300 = sbr.rel target = $region53
                $region58: #{lenet_forward.2} parent=50 // loop_exit
                  _
                %s309 = ssub.s32 16, 1
                loop: start=0, step=1, limit=1
                $region59: #{lenet_forward.2} parent=50 // loop_pre_header
                  _
                $region60: #{lenet_forward.2} parent=50 // loop_header
                  %s311 = sphi 0, %s315
                  %p312 = scmp.ge.s32.totalorder %s311, 1
                  %s316 = sphi %s137, %s137
                  %s317 = sphi %s134, %s134
                $region61: #{lenet_forward.2} parent=50 // loop_header_branch
                  %314 = sbr.rel (%p312) target = $region65
                $region62: #{lenet_forward.2} parent=50 // loop_body
                  %v318 = vld [vmem:[%s316] sm:%s309]
                  %319 = vst [vmem:[%s317] sm:%s309] %v318
                  %v320 = vld [vmem:[%s316 + $0x4] sm:%s309]
                  %321 = vst [vmem:[%s317 + $0x4] sm:%s309] %v320
                  %v322 = vld [vmem:[%s316 + $0x8] sm:%s309]
                  %323 = vst [vmem:[%s317 + $0x8] sm:%s309] %v322
                  %v324 = vld [vmem:[%s316 + $0xc] sm:%s309]
                  %325 = vst [vmem:[%s317 + $0xc] sm:%s309] %v324
                  %v326 = vld [vmem:[%s316 + $0x10] sm:%s309]
                  %327 = vst [vmem:[%s317 + $0x10] sm:%s309] %v326
                  %v328 = vld [vmem:[%s316 + $0x14] sm:%s309]
                  %329 = vst [vmem:[%s317 + $0x14] sm:%s309] %v328
                  %v330 = vld [vmem:[%s316 + $0x18] sm:%s309]
                  %331 = vst [vmem:[%s317 + $0x18] sm:%s309] %v330
                  %v332 = vld [vmem:[%s316 + $0x1c] sm:%s309]
                  %333 = vst [vmem:[%s317 + $0x1c] sm:%s309] %v332
                  %v334 = vld [vmem:[%s316 + $0x20] sm:%s309]
                  %335 = vst [vmem:[%s317 + $0x20] sm:%s309] %v334
                  %v336 = vld [vmem:[%s316 + $0x24] sm:%s309]
                  %337 = vst [vmem:[%s317 + $0x24] sm:%s309] %v336
                  %v338 = vld [vmem:[%s316 + $0x28] sm:%s309]
                  %339 = vst [vmem:[%s317 + $0x28] sm:%s309] %v338
                  %v340 = vld [vmem:[%s316 + $0x2c] sm:%s309]
                  %341 = vst [vmem:[%s317 + $0x2c] sm:%s309] %v340
                  %v342 = vld [vmem:[%s316 + $0x30] sm:%s309]
                  %343 = vst [vmem:[%s317 + $0x30] sm:%s309] %v342
                  %v344 = vld [vmem:[%s316 + $0x34] sm:%s309]
                  %345 = vst [vmem:[%s317 + $0x34] sm:%s309] %v344
                  %v346 = vld [vmem:[%s316 + $0x38] sm:%s309]
                  %347 = vst [vmem:[%s317 + $0x38] sm:%s309] %v346
                  %v348 = vld [vmem:[%s316 + $0x3c] sm:%s309]
                  %349 = vst [vmem:[%s317 + $0x3c] sm:%s309] %v348
                  %v350 = vld [vmem:[%s316 + $0x40] sm:%s309]
                  %351 = vst [vmem:[%s317 + $0x40] sm:%s309] %v350
                  %v352 = vld [vmem:[%s316 + $0x44] sm:%s309]
                  %353 = vst [vmem:[%s317 + $0x44] sm:%s309] %v352
                  %v354 = vld [vmem:[%s316 + $0x90] sm:%s309]
                  %355 = vst [vmem:[%s317 + $0x48] sm:%s309] %v354
                  %v356 = vld [vmem:[%s316 + $0x94] sm:%s309]
                  %357 = vst [vmem:[%s317 + $0x4c] sm:%s309] %v356
                  %v358 = vld [vmem:[%s316 + $0x98] sm:%s309]
                  %359 = vst [vmem:[%s317 + $0x50] sm:%s309] %v358
                  %v360 = vld [vmem:[%s316 + $0x9c] sm:%s309]
                  %361 = vst [vmem:[%s317 + $0x54] sm:%s309] %v360
                  %v362 = vld [vmem:[%s316 + $0xa0] sm:%s309]
                  %363 = vst [vmem:[%s317 + $0x58] sm:%s309] %v362
                  %v364 = vld [vmem:[%s316 + $0xa4] sm:%s309]
                  %365 = vst [vmem:[%s317 + $0x5c] sm:%s309] %v364
                  %v366 = vld [vmem:[%s316 + $0xa8] sm:%s309]
                  %367 = vst [vmem:[%s317 + $0x60] sm:%s309] %v366
                  %v368 = vld [vmem:[%s316 + $0xac] sm:%s309]
                  %369 = vst [vmem:[%s317 + $0x64] sm:%s309] %v368
                  %v370 = vld [vmem:[%s316 + $0xb0] sm:%s309]
                  %371 = vst [vmem:[%s317 + $0x68] sm:%s309] %v370
                  %v372 = vld [vmem:[%s316 + $0xb4] sm:%s309]
                  %373 = vst [vmem:[%s317 + $0x6c] sm:%s309] %v372
                  %v374 = vld [vmem:[%s316 + $0xb8] sm:%s309]
                  %375 = vst [vmem:[%s317 + $0x70] sm:%s309] %v374
                  %v376 = vld [vmem:[%s316 + $0xbc] sm:%s309]
                  %377 = vst [vmem:[%s317 + $0x74] sm:%s309] %v376
                  %v378 = vld [vmem:[%s316 + $0xc0] sm:%s309]
                  %379 = vst [vmem:[%s317 + $0x78] sm:%s309] %v378
                  %v380 = vld [vmem:[%s316 + $0xc4] sm:%s309]
                  %381 = vst [vmem:[%s317 + $0x7c] sm:%s309] %v380
                  %v382 = vld [vmem:[%s316 + $0xc8] sm:%s309]
                  %383 = vst [vmem:[%s317 + $0x80] sm:%s309] %v382
                  %v384 = vld [vmem:[%s316 + $0xcc] sm:%s309]
                  %385 = vst [vmem:[%s317 + $0x84] sm:%s309] %v384
                  %v386 = vld [vmem:[%s316 + $0xd0] sm:%s309]
                  %387 = vst [vmem:[%s317 + $0x88] sm:%s309] %v386
                  %v388 = vld [vmem:[%s316 + $0xd4] sm:%s309]
                  %389 = vst [vmem:[%s317 + $0x8c] sm:%s309] %v388
                  %v390 = vld [vmem:[%s316 + $0x120] sm:%s309]
                  %391 = vst [vmem:[%s317 + $0x90] sm:%s309] %v390
                  %v392 = vld [vmem:[%s316 + $0x124] sm:%s309]
                  %393 = vst [vmem:[%s317 + $0x94] sm:%s309] %v392
                  %v394 = vld [vmem:[%s316 + $0x128] sm:%s309]
                  %395 = vst [vmem:[%s317 + $0x98] sm:%s309] %v394
                  %v396 = vld [vmem:[%s316 + $0x12c] sm:%s309]
                  %397 = vst [vmem:[%s317 + $0x9c] sm:%s309] %v396
                  %v398 = vld [vmem:[%s316 + $0x130] sm:%s309]
                  %399 = vst [vmem:[%s317 + $0xa0] sm:%s309] %v398
                  %v400 = vld [vmem:[%s316 + $0x134] sm:%s309]
                  %401 = vst [vmem:[%s317 + $0xa4] sm:%s309] %v400
                  %v402 = vld [vmem:[%s316 + $0x138] sm:%s309]
                  %403 = vst [vmem:[%s317 + $0xa8] sm:%s309] %v402
                  %v404 = vld [vmem:[%s316 + $0x13c] sm:%s309]
                  %405 = vst [vmem:[%s317 + $0xac] sm:%s309] %v404
                  %v406 = vld [vmem:[%s316 + $0x140] sm:%s309]
                  %407 = vst [vmem:[%s317 + $0xb0] sm:%s309] %v406
                  %v408 = vld [vmem:[%s316 + $0x144] sm:%s309]
                  %409 = vst [vmem:[%s317 + $0xb4] sm:%s309] %v408
                  %v410 = vld [vmem:[%s316 + $0x148] sm:%s309]
                  %411 = vst [vmem:[%s317 + $0xb8] sm:%s309] %v410
                  %v412 = vld [vmem:[%s316 + $0x14c] sm:%s309]
                  %413 = vst [vmem:[%s317 + $0xbc] sm:%s309] %v412
                  %v414 = vld [vmem:[%s316 + $0x150] sm:%s309]
                  %415 = vst [vmem:[%s317 + $0xc0] sm:%s309] %v414
                  %v416 = vld [vmem:[%s316 + $0x154] sm:%s309]
                  %417 = vst [vmem:[%s317 + $0xc4] sm:%s309] %v416
                  %v418 = vld [vmem:[%s316 + $0x158] sm:%s309]
                  %419 = vst [vmem:[%s317 + $0xc8] sm:%s309] %v418
                  %v420 = vld [vmem:[%s316 + $0x15c] sm:%s309]
                  %421 = vst [vmem:[%s317 + $0xcc] sm:%s309] %v420
                  %v422 = vld [vmem:[%s316 + $0x160] sm:%s309]
                  %423 = vst [vmem:[%s317 + $0xd0] sm:%s309] %v422
                  %v424 = vld [vmem:[%s316 + $0x164] sm:%s309]
                  %425 = vst [vmem:[%s317 + $0xd4] sm:%s309] %v424
                  %v426 = vld [vmem:[%s316 + $0x1b0] sm:%s309]
                  %427 = vst [vmem:[%s317 + $0xd8] sm:%s309] %v426
                  %v428 = vld [vmem:[%s316 + $0x1b4] sm:%s309]
                  %429 = vst [vmem:[%s317 + $0xdc] sm:%s309] %v428
                  %v430 = vld [vmem:[%s316 + $0x1b8] sm:%s309]
                  %431 = vst [vmem:[%s317 + $0xe0] sm:%s309] %v430
                  %v432 = vld [vmem:[%s316 + $0x1bc] sm:%s309]
                  %433 = vst [vmem:[%s317 + $0xe4] sm:%s309] %v432
                  %v434 = vld [vmem:[%s316 + $0x1c0] sm:%s309]
                  %435 = vst [vmem:[%s317 + $0xe8] sm:%s309] %v434
                  %v436 = vld [vmem:[%s316 + $0x1c4] sm:%s309]
                  %437 = vst [vmem:[%s317 + $0xec] sm:%s309] %v436
                  %v438 = vld [vmem:[%s316 + $0x1c8] sm:%s309]
                  %439 = vst [vmem:[%s317 + $0xf0] sm:%s309] %v438
                  %v440 = vld [vmem:[%s316 + $0x1cc] sm:%s309]
                  %441 = vst [vmem:[%s317 + $0xf4] sm:%s309] %v440
                  %v442 = vld [vmem:[%s316 + $0x1d0] sm:%s309]
                  %443 = vst [vmem:[%s317 + $0xf8] sm:%s309] %v442
                  %v444 = vld [vmem:[%s316 + $0x1d4] sm:%s309]
                  %445 = vst [vmem:[%s317 + $0xfc] sm:%s309] %v444
                  %v446 = vld [vmem:[%s316 + $0x1d8] sm:%s309]
                  %447 = vst [vmem:[%s317 + $0x100] sm:%s309] %v446
                  %v448 = vld [vmem:[%s316 + $0x1dc] sm:%s309]
                  %449 = vst [vmem:[%s317 + $0x104] sm:%s309] %v448
                  %v450 = vld [vmem:[%s316 + $0x1e0] sm:%s309]
                  %451 = vst [vmem:[%s317 + $0x108] sm:%s309] %v450
                  %v452 = vld [vmem:[%s316 + $0x1e4] sm:%s309]
                  %453 = vst [vmem:[%s317 + $0x10c] sm:%s309] %v452
                  %v454 = vld [vmem:[%s316 + $0x1e8] sm:%s309]
                  %455 = vst [vmem:[%s317 + $0x110] sm:%s309] %v454
                  %v456 = vld [vmem:[%s316 + $0x1ec] sm:%s309]
                  %457 = vst [vmem:[%s317 + $0x114] sm:%s309] %v456
                  %v458 = vld [vmem:[%s316 + $0x1f0] sm:%s309]
                  %459 = vst [vmem:[%s317 + $0x118] sm:%s309] %v458
                  %v460 = vld [vmem:[%s316 + $0x1f4] sm:%s309]
                  %461 = vst [vmem:[%s317 + $0x11c] sm:%s309] %v460
                $region63: #{lenet_forward.2} parent=50 // loop_footer
                  %s315 = sadd.s32 1, %s311
                $region64: #{lenet_forward.2} parent=50 // loop_footer_branch
                  %310 = sbr.rel target = $region60
                $region65: #{lenet_forward.2} parent=50 // loop_exit
                  _
              $region51: #{lenet_forward.2} parent=35 // pred_fallthru
                _
            $region36: #{lenet_forward.2} parent=31 // pred_fallthru
              _
            // Predicated region
            $region37: #{lenet_forward.2} parent=31 // pred_check
              _
            $region38: #{lenet_forward.2} parent=31 // pred_check_branch
              %143 = sbr.rel (0) target = $region40
            $region39: #{lenet_forward.2} parent=31 // pred_region
              %s145 = ssub.s32 16, 1
              loop: start=0, step=1, limit=1
              $region41: #{lenet_forward.2} parent=39 // loop_pre_header
                _
              $region42: #{lenet_forward.2} parent=39 // loop_header
                %s147 = sphi 0, %s151
                %p148 = scmp.ge.s32.totalorder %s147, 1
                %s152 = sphi %s137, %s137
                %s153 = sphi %s134, %s134
              $region43: #{lenet_forward.2} parent=39 // loop_header_branch
                %150 = sbr.rel (%p148) target = $region47
              $region44: #{lenet_forward.2} parent=39 // loop_body
                %v154 = vld [vmem:[%s152] sm:%s145]
                %155 = vst [vmem:[%s153] sm:%s145] %v154
                %v156 = vld [vmem:[%s152 + $0x4] sm:%s145]
                %157 = vst [vmem:[%s153 + $0x4] sm:%s145] %v156
                %v158 = vld [vmem:[%s152 + $0x8] sm:%s145]
                %159 = vst [vmem:[%s153 + $0x8] sm:%s145] %v158
                %v160 = vld [vmem:[%s152 + $0xc] sm:%s145]
                %161 = vst [vmem:[%s153 + $0xc] sm:%s145] %v160
                %v162 = vld [vmem:[%s152 + $0x10] sm:%s145]
                %163 = vst [vmem:[%s153 + $0x10] sm:%s145] %v162
                %v164 = vld [vmem:[%s152 + $0x14] sm:%s145]
                %165 = vst [vmem:[%s153 + $0x14] sm:%s145] %v164
                %v166 = vld [vmem:[%s152 + $0x18] sm:%s145]
                %167 = vst [vmem:[%s153 + $0x18] sm:%s145] %v166
                %v168 = vld [vmem:[%s152 + $0x1c] sm:%s145]
                %169 = vst [vmem:[%s153 + $0x1c] sm:%s145] %v168
                %v170 = vld [vmem:[%s152 + $0x20] sm:%s145]
                %171 = vst [vmem:[%s153 + $0x20] sm:%s145] %v170
                %v172 = vld [vmem:[%s152 + $0x24] sm:%s145]
                %173 = vst [vmem:[%s153 + $0x24] sm:%s145] %v172
                %v174 = vld [vmem:[%s152 + $0x28] sm:%s145]
                %175 = vst [vmem:[%s153 + $0x28] sm:%s145] %v174
                %v176 = vld [vmem:[%s152 + $0x2c] sm:%s145]
                %177 = vst [vmem:[%s153 + $0x2c] sm:%s145] %v176
                %v178 = vld [vmem:[%s152 + $0x30] sm:%s145]
                %179 = vst [vmem:[%s153 + $0x30] sm:%s145] %v178
                %v180 = vld [vmem:[%s152 + $0x34] sm:%s145]
                %181 = vst [vmem:[%s153 + $0x34] sm:%s145] %v180
                %v182 = vld [vmem:[%s152 + $0x38] sm:%s145]
                %183 = vst [vmem:[%s153 + $0x38] sm:%s145] %v182
                %v184 = vld [vmem:[%s152 + $0x3c] sm:%s145]
                %185 = vst [vmem:[%s153 + $0x3c] sm:%s145] %v184
                %v186 = vld [vmem:[%s152 + $0x40] sm:%s145]
                %187 = vst [vmem:[%s153 + $0x40] sm:%s145] %v186
                %v188 = vld [vmem:[%s152 + $0x44] sm:%s145]
                %189 = vst [vmem:[%s153 + $0x44] sm:%s145] %v188
                %v190 = vld [vmem:[%s152 + $0x90] sm:%s145]
                %191 = vst [vmem:[%s153 + $0x48] sm:%s145] %v190
                %v192 = vld [vmem:[%s152 + $0x94] sm:%s145]
                %193 = vst [vmem:[%s153 + $0x4c] sm:%s145] %v192
                %v194 = vld [vmem:[%s152 + $0x98] sm:%s145]
                %195 = vst [vmem:[%s153 + $0x50] sm:%s145] %v194
                %v196 = vld [vmem:[%s152 + $0x9c] sm:%s145]
                %197 = vst [vmem:[%s153 + $0x54] sm:%s145] %v196
                %v198 = vld [vmem:[%s152 + $0xa0] sm:%s145]
                %199 = vst [vmem:[%s153 + $0x58] sm:%s145] %v198
                %v200 = vld [vmem:[%s152 + $0xa4] sm:%s145]
                %201 = vst [vmem:[%s153 + $0x5c] sm:%s145] %v200
                %v202 = vld [vmem:[%s152 + $0xa8] sm:%s145]
                %203 = vst [vmem:[%s153 + $0x60] sm:%s145] %v202
                %v204 = vld [vmem:[%s152 + $0xac] sm:%s145]
                %205 = vst [vmem:[%s153 + $0x64] sm:%s145] %v204
                %v206 = vld [vmem:[%s152 + $0xb0] sm:%s145]
                %207 = vst [vmem:[%s153 + $0x68] sm:%s145] %v206
                %v208 = vld [vmem:[%s152 + $0xb4] sm:%s145]
                %209 = vst [vmem:[%s153 + $0x6c] sm:%s145] %v208
                %v210 = vld [vmem:[%s152 + $0xb8] sm:%s145]
                %211 = vst [vmem:[%s153 + $0x70] sm:%s145] %v210
                %v212 = vld [vmem:[%s152 + $0xbc] sm:%s145]
                %213 = vst [vmem:[%s153 + $0x74] sm:%s145] %v212
                %v214 = vld [vmem:[%s152 + $0xc0] sm:%s145]
                %215 = vst [vmem:[%s153 + $0x78] sm:%s145] %v214
                %v216 = vld [vmem:[%s152 + $0xc4] sm:%s145]
                %217 = vst [vmem:[%s153 + $0x7c] sm:%s145] %v216
                %v218 = vld [vmem:[%s152 + $0xc8] sm:%s145]
                %219 = vst [vmem:[%s153 + $0x80] sm:%s145] %v218
                %v220 = vld [vmem:[%s152 + $0xcc] sm:%s145]
                %221 = vst [vmem:[%s153 + $0x84] sm:%s145] %v220
                %v222 = vld [vmem:[%s152 + $0xd0] sm:%s145]
                %223 = vst [vmem:[%s153 + $0x88] sm:%s145] %v222
                %v224 = vld [vmem:[%s152 + $0xd4] sm:%s145]
                %225 = vst [vmem:[%s153 + $0x8c] sm:%s145] %v224
                %v226 = vld [vmem:[%s152 + $0x120] sm:%s145]
                %227 = vst [vmem:[%s153 + $0x90] sm:%s145] %v226
                %v228 = vld [vmem:[%s152 + $0x124] sm:%s145]
                %229 = vst [vmem:[%s153 + $0x94] sm:%s145] %v228
                %v230 = vld [vmem:[%s152 + $0x128] sm:%s145]
                %231 = vst [vmem:[%s153 + $0x98] sm:%s145] %v230
                %v232 = vld [vmem:[%s152 + $0x12c] sm:%s145]
                %233 = vst [vmem:[%s153 + $0x9c] sm:%s145] %v232
                %v234 = vld [vmem:[%s152 + $0x130] sm:%s145]
                %235 = vst [vmem:[%s153 + $0xa0] sm:%s145] %v234
                %v236 = vld [vmem:[%s152 + $0x134] sm:%s145]
                %237 = vst [vmem:[%s153 + $0xa4] sm:%s145] %v236
                %v238 = vld [vmem:[%s152 + $0x138] sm:%s145]
                %239 = vst [vmem:[%s153 + $0xa8] sm:%s145] %v238
                %v240 = vld [vmem:[%s152 + $0x13c] sm:%s145]
                %241 = vst [vmem:[%s153 + $0xac] sm:%s145] %v240
                %v242 = vld [vmem:[%s152 + $0x140] sm:%s145]
                %243 = vst [vmem:[%s153 + $0xb0] sm:%s145] %v242
                %v244 = vld [vmem:[%s152 + $0x144] sm:%s145]
                %245 = vst [vmem:[%s153 + $0xb4] sm:%s145] %v244
                %v246 = vld [vmem:[%s152 + $0x148] sm:%s145]
                %247 = vst [vmem:[%s153 + $0xb8] sm:%s145] %v246
                %v248 = vld [vmem:[%s152 + $0x14c] sm:%s145]
                %249 = vst [vmem:[%s153 + $0xbc] sm:%s145] %v248
                %v250 = vld [vmem:[%s152 + $0x150] sm:%s145]
                %251 = vst [vmem:[%s153 + $0xc0] sm:%s145] %v250
                %v252 = vld [vmem:[%s152 + $0x154] sm:%s145]
                %253 = vst [vmem:[%s153 + $0xc4] sm:%s145] %v252
                %v254 = vld [vmem:[%s152 + $0x158] sm:%s145]
                %255 = vst [vmem:[%s153 + $0xc8] sm:%s145] %v254
                %v256 = vld [vmem:[%s152 + $0x15c] sm:%s145]
                %257 = vst [vmem:[%s153 + $0xcc] sm:%s145] %v256
                %v258 = vld [vmem:[%s152 + $0x160] sm:%s145]
                %259 = vst [vmem:[%s153 + $0xd0] sm:%s145] %v258
                %v260 = vld [vmem:[%s152 + $0x164] sm:%s145]
                %261 = vst [vmem:[%s153 + $0xd4] sm:%s145] %v260
                %v262 = vld [vmem:[%s152 + $0x1b0] sm:%s145]
                %263 = vst [vmem:[%s153 + $0xd8] sm:%s145] %v262
                %v264 = vld [vmem:[%s152 + $0x1b4] sm:%s145]
                %265 = vst [vmem:[%s153 + $0xdc] sm:%s145] %v264
                %v266 = vld [vmem:[%s152 + $0x1b8] sm:%s145]
                %267 = vst [vmem:[%s153 + $0xe0] sm:%s145] %v266
                %v268 = vld [vmem:[%s152 + $0x1bc] sm:%s145]
                %269 = vst [vmem:[%s153 + $0xe4] sm:%s145] %v268
                %v270 = vld [vmem:[%s152 + $0x1c0] sm:%s145]
                %271 = vst [vmem:[%s153 + $0xe8] sm:%s145] %v270
                %v272 = vld [vmem:[%s152 + $0x1c4] sm:%s145]
                %273 = vst [vmem:[%s153 + $0xec] sm:%s145] %v272
                %v274 = vld [vmem:[%s152 + $0x1c8] sm:%s145]
                %275 = vst [vmem:[%s153 + $0xf0] sm:%s145] %v274
                %v276 = vld [vmem:[%s152 + $0x1cc] sm:%s145]
                %277 = vst [vmem:[%s153 + $0xf4] sm:%s145] %v276
                %v278 = vld [vmem:[%s152 + $0x1d0] sm:%s145]
                %279 = vst [vmem:[%s153 + $0xf8] sm:%s145] %v278
                %v280 = vld [vmem:[%s152 + $0x1d4] sm:%s145]
                %281 = vst [vmem:[%s153 + $0xfc] sm:%s145] %v280
                %v282 = vld [vmem:[%s152 + $0x1d8] sm:%s145]
                %283 = vst [vmem:[%s153 + $0x100] sm:%s145] %v282
                %v284 = vld [vmem:[%s152 + $0x1dc] sm:%s145]
                %285 = vst [vmem:[%s153 + $0x104] sm:%s145] %v284
                %v286 = vld [vmem:[%s152 + $0x1e0] sm:%s145]
                %287 = vst [vmem:[%s153 + $0x108] sm:%s145] %v286
                %v288 = vld [vmem:[%s152 + $0x1e4] sm:%s145]
                %289 = vst [vmem:[%s153 + $0x10c] sm:%s145] %v288
                %v290 = vld [vmem:[%s152 + $0x1e8] sm:%s145]
                %291 = vst [vmem:[%s153 + $0x110] sm:%s145] %v290
                %v292 = vld [vmem:[%s152 + $0x1ec] sm:%s145]
                %293 = vst [vmem:[%s153 + $0x114] sm:%s145] %v292
                %v294 = vld [vmem:[%s152 + $0x1f0] sm:%s145]
                %295 = vst [vmem:[%s153 + $0x118] sm:%s145] %v294
                %v296 = vld [vmem:[%s152 + $0x1f4] sm:%s145]
                %297 = vst [vmem:[%s153 + $0x11c] sm:%s145] %v296
              $region45: #{lenet_forward.2} parent=39 // loop_footer
                %s151 = sadd.s32 1, %s147
              $region46: #{lenet_forward.2} parent=39 // loop_footer_branch
                %146 = sbr.rel target = $region42
              $region47: #{lenet_forward.2} parent=39 // loop_exit
                _
            $region40: #{lenet_forward.2} parent=31 // pred_fallthru
              _
          $region32: #{lenet_forward.2} parent=27 // pred_fallthru
            _
          %462 = vnop
        $region28: #{lenet_forward.2} parent=23 // pred_fallthru
          _
      $region24: #{lenet_forward.2} parent=5 // pred_fallthru
        _
      %p463 = scmp.le.s32.totalorder 1, %s9
      %p464 = scmp.lt.s32.totalorder %s9, 3
      %p465 = pnand %p463, %p464
      %p466 = pneg %p465
      // Predicated region
      $region66: #{lenet_forward.2} parent=5 // pred_check
        _
      $region67: #{lenet_forward.2} parent=5 // pred_check_branch
        %468 = sbr.rel (%p465) target = $region69
      $region68: #{lenet_forward.2} parent=5 // pred_region
        %s469 = ssub.s32 %s9, 1
        %s470 = sand.u32 %s22, 1
        %s471 = sand.u32 %s22, 1
        %s472 = smul.addr %s471, 288
        %s473 = scalar_lea.vmem [#allocation2], %s472
        // Predicated region
        $region70: #{lenet_forward.2} parent=68 // pred_check
          %p474 = pneg %p35
        $region71: #{lenet_forward.2} parent=68 // pred_check_branch
          %476 = sbr.rel (%p474) target = $region73
        $region72: #{lenet_forward.2} parent=68 // pred_region
          _
        $region73: #{lenet_forward.2} parent=68 // pred_fallthru
          _
        %s477 = sand.u32 %s22, 1
        %s478 = sand.u32 %s22, 1
        %s479 = smul.addr %s478, 288
        %s480 = scalar_lea.vmem [#allocation2], %s479
        %p481 = pneg %p35
        %p482 = pneg %p32
        %p483 = pneg %p56
        %p484 = pneg %p53
        %p485 = pneg %p77
        %p486 = pneg %p74
        %p487 = pneg %p103
        %p488 = pneg %p100
        %s489 = smul.u32 18, %s14
        %p490 = scmp.lt.s32.totalorder %s489, 35
        %s491 = scalar_select %p490, %s489, 35
        %s492 = smul.addr %s491, 8
        %s493 = scalar_lea.vmem %s3, %s492
        %s494 = smul.u32 18, %s14
        %s495 = smul.u32 18, %s14
        %p496 = scmp.lt.s32.totalorder %s495, 35
        %s497 = scalar_select %p496, %s495, 35
        %s498 = smul.addr %s497, 8
        %s499 = scalar_lea.vmem %s3, %s498
        %s500 = smul.u32 18, %s14
        %v502 = vld [vmem:[%s1] sm:$0xf]
        %v503 = vld [vmem:[%s1 + $0x4] sm:$0xf]
        %v504 = vld [vmem:[%s1 + $0x8] sm:$0xf]
        %v505 = vld [vmem:[%s1 + $0xc] sm:$0xf]
        %v506 = vld [vmem:[%s473] sm:$0xf]
        %v507 = vld [vmem:[%s473 + $0x4] sm:$0xf]
        %v508 = vld [vmem:[%s473 + $0x8] sm:$0xf]
        %v509 = vld [vmem:[%s473 + $0xc] sm:$0xf]
        %v510 = vld [vmem:[%s473 + $0x10] sm:$0xf]
        %v511 = vld [vmem:[%s473 + $0x14] sm:$0xf]
        %v512 = vld [vmem:[%s473 + $0x18] sm:$0xf]
        %v513 = vld [vmem:[%s473 + $0x1c] sm:$0xf]
        %v514 = vld [vmem:[%s473 + $0x20] sm:$0xf]
        %v515 = vld [vmem:[%s473 + $0x24] sm:$0xf]
        %v516 = vld [vmem:[%s473 + $0x28] sm:$0xf]
        %v517 = vld [vmem:[%s473 + $0x2c] sm:$0xf]
        %v518 = vld [vmem:[%s473 + $0x30] sm:$0xf]
        %v519 = vld [vmem:[%s473 + $0x34] sm:$0xf]
        %v520 = vld [vmem:[%s473 + $0x38] sm:$0xf]
        %v521 = vld [vmem:[%s473 + $0x3c] sm:$0xf]
        %v522 = vld [vmem:[%s473 + $0x40] sm:$0xf]
        %v523 = vld [vmem:[%s473 + $0x44] sm:$0xf]
        %v542 = vunpack.c.l.b16 %v506
        %v543 = vunpack.c.l.b16 %v507
        %v544 = vunpack.c.l.b16 %v508
        %v545 = vunpack.c.l.b16 %v509
        %v546 = vunpack.c.l.b16 %v510
        %v547 = vunpack.c.l.b16 %v511
        %v548 = vunpack.c.l.b16 %v512
        %v549 = vunpack.c.l.b16 %v513
        %v550 = vunpack.c.l.b16 %v514
        %v551 = vunpack.c.l.b16 %v515
        %v552 = vunpack.c.l.b16 %v516
        %v553 = vunpack.c.l.b16 %v517
        %v554 = vunpack.c.l.b16 %v518
        %v555 = vunpack.c.l.b16 %v519
        %v556 = vunpack.c.l.b16 %v520
        %v557 = vunpack.c.l.b16 %v521
        %v558 = vunpack.c.l.b16 %v522
        %v559 = vunpack.c.l.b16 %v523
        %v560 = vpack.c.b16 %v543, %v542
        %v561 = vpack.c.b16 %v545, %v544
        %v562 = vpack.c.b16 %v547, %v546
        %v563 = vpack.c.b16 %v549, %v548
        %v564 = vpack.c.b16 %v551, %v550
        %v565 = vpack.c.b16 %v553, %v552
        %v566 = vpack.c.b16 %v555, %v554
        %v567 = vpack.c.b16 %v557, %v556
        %v568 = vpack.c.b16 %v559, %v558
        %v573 = vunpack.c.l.b16 %v502
        %v574 = vunpack.c.l.b16 %v503
        %v575 = vunpack.c.l.b16 %v504
        %v576 = vunpack.c.l.b16 %v505
        %v577 = vpack.c.b16 %v574, %v573
        %v578 = vpack.c.b16 %v576, %v575
        %vm581 = vcmask 261120
        %v583 = vsel %vm581, %v560, 0
        %v586 = vsel %vm581, %v561, 0
        %v589 = vsel %vm581, %v562, 0
        %v592 = vsel %vm581, %v563, 0
        %v595 = vsel %vm581, %v564, 0
        %v598 = vsel %vm581, %v565, 0
        %v601 = vsel %vm581, %v566, 0
        %v604 = vsel %vm581, %v567, 0
        %v607 = vsel %vm581, %v568, 0
        %609 = vmatpush.bf16.msra.mxu0 0
        %610 = vmatpush.bf16.msra.mxu0 0
        %611 = vmatpush.bf16.msra.mxu0 0
        %612 = vmatpush.bf16.msra.mxu0 0
        %613 = vmatpush.bf16.msra.mxu0 0
        %614 = vmatpush.bf16.msra.mxu0 0
        %615 = vmatpush.bf16.msra.mxu0 %v578
        %616 = vmatpush.bf16.msra.mxu0 %v577
        %617 = vmatmul.bf16.gmra.mxu0 %v583
        %v618 = vpop.f32.mrf.mxu0
        %v619 = vadd.f32 0.0, %v618
        %v620 = vpop.f32.mrf.mxu0
        %v621 = vadd.f32 0.0, %v620
        %622 = vmatmul.bf16.gmra.mxu0 %v586
        %v623 = vpop.f32.mrf.mxu0
        %v624 = vadd.f32 0.0, %v623
        %v625 = vpop.f32.mrf.mxu0
        %v626 = vadd.f32 0.0, %v625
        %627 = vmatmul.bf16.gmra.mxu0 %v589
        %v628 = vpop.f32.mrf.mxu0
        %v629 = vadd.f32 0.0, %v628
        %v630 = vpop.f32.mrf.mxu0
        %v631 = vadd.f32 0.0, %v630
        %632 = vmatmul.bf16.gmra.mxu0 %v592
        %v633 = vpop.f32.mrf.mxu0
        %v634 = vadd.f32 0.0, %v633
        %v635 = vpop.f32.mrf.mxu0
        %v636 = vadd.f32 0.0, %v635
        %637 = vmatmul.bf16.gmra.mxu0 %v595
        %v638 = vpop.f32.mrf.mxu0
        %v639 = vadd.f32 0.0, %v638
        %v640 = vpop.f32.mrf.mxu0
        %v641 = vadd.f32 0.0, %v640
        %642 = vmatmul.bf16.gmra.mxu0 %v598
        %v643 = vpop.f32.mrf.mxu0
        %v644 = vadd.f32 0.0, %v643
        %v645 = vpop.f32.mrf.mxu0
        %v646 = vadd.f32 0.0, %v645
        %647 = vmatmul.bf16.gmra.mxu0 %v601
        %v648 = vpop.f32.mrf.mxu0
        %v649 = vadd.f32 0.0, %v648
        %v650 = vpop.f32.mrf.mxu0
        %v651 = vadd.f32 0.0, %v650
        %652 = vmatmul.bf16.gmra.mxu0 %v604
        %v653 = vpop.f32.mrf.mxu0
        %v654 = vadd.f32 0.0, %v653
        %v655 = vpop.f32.mrf.mxu0
        %v656 = vadd.f32 0.0, %v655
        %657 = vmatmul.bf16.gmra.mxu0 %v607
        %v658 = vpop.f32.mrf.mxu0
        %v659 = vadd.f32 0.0, %v658
        %v660 = vpop.f32.mrf.mxu0
        %v661 = vadd.f32 0.0, %v660
        %662 = vdwg.mxu0
        %s663 = scalar_lea.vmem %s473, 72 [#allocation2]
        %v664 = vld [vmem:[%s663] sm:$0xf]
        %v665 = vld [vmem:[%s663 + $0x4] sm:$0xf]
        %v666 = vld [vmem:[%s663 + $0x8] sm:$0xf]
        %v667 = vld [vmem:[%s663 + $0xc] sm:$0xf]
        %v668 = vld [vmem:[%s663 + $0x10] sm:$0xf]
        %v669 = vld [vmem:[%s663 + $0x14] sm:$0xf]
        %v670 = vld [vmem:[%s663 + $0x18] sm:$0xf]
        %v671 = vld [vmem:[%s663 + $0x1c] sm:$0xf]
        %v672 = vld [vmem:[%s663 + $0x20] sm:$0xf]
        %v673 = vld [vmem:[%s663 + $0x24] sm:$0xf]
        %v674 = vld [vmem:[%s663 + $0x28] sm:$0xf]
        %v675 = vld [vmem:[%s663 + $0x2c] sm:$0xf]
        %v676 = vld [vmem:[%s663 + $0x30] sm:$0xf]
        %v677 = vld [vmem:[%s663 + $0x34] sm:$0xf]
        %v678 = vld [vmem:[%s663 + $0x38] sm:$0xf]
        %v679 = vld [vmem:[%s663 + $0x3c] sm:$0xf]
        %v680 = vld [vmem:[%s663 + $0x40] sm:$0xf]
        %v681 = vld [vmem:[%s663 + $0x44] sm:$0xf]
        %v700 = vunpack.c.l.b16 %v664
        %v701 = vunpack.c.l.b16 %v665
        %v702 = vunpack.c.l.b16 %v666
        %v703 = vunpack.c.l.b16 %v667
        %v704 = vunpack.c.l.b16 %v668
        %v705 = vunpack.c.l.b16 %v669
        %v706 = vunpack.c.l.b16 %v670
        %v707 = vunpack.c.l.b16 %v671
        %v708 = vunpack.c.l.b16 %v672
        %v709 = vunpack.c.l.b16 %v673
        %v710 = vunpack.c.l.b16 %v674
        %v711 = vunpack.c.l.b16 %v675
        %v712 = vunpack.c.l.b16 %v676
        %v713 = vunpack.c.l.b16 %v677
        %v714 = vunpack.c.l.b16 %v678
        %v715 = vunpack.c.l.b16 %v679
        %v716 = vunpack.c.l.b16 %v680
        %v717 = vunpack.c.l.b16 %v681
        %v718 = vpack.c.b16 %v701, %v700
        %v719 = vpack.c.b16 %v703, %v702
        %v720 = vpack.c.b16 %v705, %v704
        %v721 = vpack.c.b16 %v707, %v706
        %v722 = vpack.c.b16 %v709, %v708
        %v723 = vpack.c.b16 %v711, %v710
        %v724 = vpack.c.b16 %v713, %v712
        %v725 = vpack.c.b16 %v715, %v714
        %v726 = vpack.c.b16 %v717, %v716
        %v728 = vsel %vm581, %v718, 0
        %v731 = vsel %vm581, %v719, 0
        %v734 = vsel %vm581, %v720, 0
        %v737 = vsel %vm581, %v721, 0
        %v740 = vsel %vm581, %v722, 0
        %v743 = vsel %vm581, %v723, 0
        %v746 = vsel %vm581, %v724, 0
        %v749 = vsel %vm581, %v725, 0
        %v752 = vsel %vm581, %v726, 0
        %754 = vmatpush.bf16.msra.mxu0 0
        %755 = vmatpush.bf16.msra.mxu0 0
        %756 = vmatpush.bf16.msra.mxu0 0
        %757 = vmatpush.bf16.msra.mxu0 0
        %758 = vmatpush.bf16.msra.mxu0 0
        %759 = vmatpush.bf16.msra.mxu0 0
        %760 = vmatpush.bf16.msra.mxu0 %v578
        %761 = vmatpush.bf16.msra.mxu0 %v577
        %762 = vmatmul.bf16.gmra.mxu0 %v728
        %v763 = vpop.f32.mrf.mxu0
        %v764 = vadd.f32 0.0, %v763
        %v765 = vpop.f32.mrf.mxu0
        %v766 = vadd.f32 0.0, %v765
        %767 = vmatmul.bf16.gmra.mxu0 %v731
        %v768 = vpop.f32.mrf.mxu0
        %v769 = vadd.f32 0.0, %v768
        %v770 = vpop.f32.mrf.mxu0
        %v771 = vadd.f32 0.0, %v770
        %772 = vmatmul.bf16.gmra.mxu0 %v734
        %v773 = vpop.f32.mrf.mxu0
        %v774 = vadd.f32 0.0, %v773
        %v775 = vpop.f32.mrf.mxu0
        %v776 = vadd.f32 0.0, %v775
        %777 = vmatmul.bf16.gmra.mxu0 %v737
        %v778 = vpop.f32.mrf.mxu0
        %v779 = vadd.f32 0.0, %v778
        %v780 = vpop.f32.mrf.mxu0
        %v781 = vadd.f32 0.0, %v780
        %782 = vmatmul.bf16.gmra.mxu0 %v740
        %v783 = vpop.f32.mrf.mxu0
        %v784 = vadd.f32 0.0, %v783
        %v785 = vpop.f32.mrf.mxu0
        %v786 = vadd.f32 0.0, %v785
        %787 = vmatmul.bf16.gmra.mxu0 %v743
        %v788 = vpop.f32.mrf.mxu0
        %v789 = vadd.f32 0.0, %v788
        %v790 = vpop.f32.mrf.mxu0
        %v791 = vadd.f32 0.0, %v790
        %792 = vmatmul.bf16.gmra.mxu0 %v746
        %v793 = vpop.f32.mrf.mxu0
        %v794 = vadd.f32 0.0, %v793
        %v795 = vpop.f32.mrf.mxu0
        %v796 = vadd.f32 0.0, %v795
        %797 = vmatmul.bf16.gmra.mxu0 %v749
        %v798 = vpop.f32.mrf.mxu0
        %v799 = vadd.f32 0.0, %v798
        %v800 = vpop.f32.mrf.mxu0
        %v801 = vadd.f32 0.0, %v800
        %802 = vmatmul.bf16.gmra.mxu0 %v752
        %v803 = vpop.f32.mrf.mxu0
        %v804 = vadd.f32 0.0, %v803
        %v805 = vpop.f32.mrf.mxu0
        %v806 = vadd.f32 0.0, %v805
        %807 = vdwg.mxu0
        %v808 = vmax.f32 %v619, %v764
        %v809 = vmax.f32 %v621, %v766
        %v810 = vmax.f32 %v624, %v769
        %v811 = vmax.f32 %v626, %v771
        %v812 = vmax.f32 %v629, %v774
        %v813 = vmax.f32 %v631, %v776
        %v814 = vmax.f32 %v634, %v779
        %v815 = vmax.f32 %v636, %v781
        %v816 = vmax.f32 %v639, %v784
        %v817 = vmax.f32 %v641, %v786
        %v818 = vmax.f32 %v644, %v789
        %v819 = vmax.f32 %v646, %v791
        %v820 = vmax.f32 %v649, %v794
        %v821 = vmax.f32 %v651, %v796
        %v822 = vmax.f32 %v654, %v799
        %v823 = vmax.f32 %v656, %v801
        %v824 = vmax.f32 %v659, %v804
        %v825 = vmax.f32 %v661, %v806
        %s826 = scalar_lea.vmem %s473, 144 [#allocation2]
        %v827 = vld [vmem:[%s826] sm:$0xf]
        %v828 = vld [vmem:[%s826 + $0x4] sm:$0xf]
        %v829 = vld [vmem:[%s826 + $0x8] sm:$0xf]
        %v830 = vld [vmem:[%s826 + $0xc] sm:$0xf]
        %v831 = vld [vmem:[%s826 + $0x10] sm:$0xf]
        %v832 = vld [vmem:[%s826 + $0x14] sm:$0xf]
        %v833 = vld [vmem:[%s826 + $0x18] sm:$0xf]
        %v834 = vld [vmem:[%s826 + $0x1c] sm:$0xf]
        %v835 = vld [vmem:[%s826 + $0x20] sm:$0xf]
        %v836 = vld [vmem:[%s826 + $0x24] sm:$0xf]
        %v837 = vld [vmem:[%s826 + $0x28] sm:$0xf]
        %v838 = vld [vmem:[%s826 + $0x2c] sm:$0xf]
        %v839 = vld [vmem:[%s826 + $0x30] sm:$0xf]
        %v840 = vld [vmem:[%s826 + $0x34] sm:$0xf]
        %v841 = vld [vmem:[%s826 + $0x38] sm:$0xf]
        %v842 = vld [vmem:[%s826 + $0x3c] sm:$0xf]
        %v843 = vld [vmem:[%s826 + $0x40] sm:$0xf]
        %v844 = vld [vmem:[%s826 + $0x44] sm:$0xf]
        %v863 = vunpack.c.l.b16 %v827
        %v864 = vunpack.c.l.b16 %v828
        %v865 = vunpack.c.l.b16 %v829
        %v866 = vunpack.c.l.b16 %v830
        %v867 = vunpack.c.l.b16 %v831
        %v868 = vunpack.c.l.b16 %v832
        %v869 = vunpack.c.l.b16 %v833
        %v870 = vunpack.c.l.b16 %v834
        %v871 = vunpack.c.l.b16 %v835
        %v872 = vunpack.c.l.b16 %v836
        %v873 = vunpack.c.l.b16 %v837
        %v874 = vunpack.c.l.b16 %v838
        %v875 = vunpack.c.l.b16 %v839
        %v876 = vunpack.c.l.b16 %v840
        %v877 = vunpack.c.l.b16 %v841
        %v878 = vunpack.c.l.b16 %v842
        %v879 = vunpack.c.l.b16 %v843
        %v880 = vunpack.c.l.b16 %v844
        %v881 = vpack.c.b16 %v864, %v863
        %v882 = vpack.c.b16 %v866, %v865
        %v883 = vpack.c.b16 %v868, %v867
        %v884 = vpack.c.b16 %v870, %v869
        %v885 = vpack.c.b16 %v872, %v871
        %v886 = vpack.c.b16 %v874, %v873
        %v887 = vpack.c.b16 %v876, %v875
        %v888 = vpack.c.b16 %v878, %v877
        %v889 = vpack.c.b16 %v880, %v879
        %v891 = vsel %vm581, %v881, 0
        %v894 = vsel %vm581, %v882, 0
        %v897 = vsel %vm581, %v883, 0
        %v900 = vsel %vm581, %v884, 0
        %v903 = vsel %vm581, %v885, 0
        %v906 = vsel %vm581, %v886, 0
        %v909 = vsel %vm581, %v887, 0
        %v912 = vsel %vm581, %v888, 0
        %v915 = vsel %vm581, %v889, 0
        %917 = vmatpush.bf16.msra.mxu0 0
        %918 = vmatpush.bf16.msra.mxu0 0
        %919 = vmatpush.bf16.msra.mxu0 0
        %920 = vmatpush.bf16.msra.mxu0 0
        %921 = vmatpush.bf16.msra.mxu0 0
        %922 = vmatpush.bf16.msra.mxu0 0
        %923 = vmatpush.bf16.msra.mxu0 %v578
        %924 = vmatpush.bf16.msra.mxu0 %v577
        %925 = vmatmul.bf16.gmra.mxu0 %v891
        %v926 = vpop.f32.mrf.mxu0
        %v927 = vadd.f32 0.0, %v926
        %v928 = vpop.f32.mrf.mxu0
        %v929 = vadd.f32 0.0, %v928
        %930 = vmatmul.bf16.gmra.mxu0 %v894
        %v931 = vpop.f32.mrf.mxu0
        %v932 = vadd.f32 0.0, %v931
        %v933 = vpop.f32.mrf.mxu0
        %v934 = vadd.f32 0.0, %v933
        %935 = vmatmul.bf16.gmra.mxu0 %v897
        %v936 = vpop.f32.mrf.mxu0
        %v937 = vadd.f32 0.0, %v936
        %v938 = vpop.f32.mrf.mxu0
        %v939 = vadd.f32 0.0, %v938
        %940 = vmatmul.bf16.gmra.mxu0 %v900
        %v941 = vpop.f32.mrf.mxu0
        %v942 = vadd.f32 0.0, %v941
        %v943 = vpop.f32.mrf.mxu0
        %v944 = vadd.f32 0.0, %v943
        %945 = vmatmul.bf16.gmra.mxu0 %v903
        %v946 = vpop.f32.mrf.mxu0
        %v947 = vadd.f32 0.0, %v946
        %v948 = vpop.f32.mrf.mxu0
        %v949 = vadd.f32 0.0, %v948
        %950 = vmatmul.bf16.gmra.mxu0 %v906
        %v951 = vpop.f32.mrf.mxu0
        %v952 = vadd.f32 0.0, %v951
        %v953 = vpop.f32.mrf.mxu0
        %v954 = vadd.f32 0.0, %v953
        %955 = vmatmul.bf16.gmra.mxu0 %v909
        %v956 = vpop.f32.mrf.mxu0
        %v957 = vadd.f32 0.0, %v956
        %v958 = vpop.f32.mrf.mxu0
        %v959 = vadd.f32 0.0, %v958
        %960 = vmatmul.bf16.gmra.mxu0 %v912
        %v961 = vpop.f32.mrf.mxu0
        %v962 = vadd.f32 0.0, %v961
        %v963 = vpop.f32.mrf.mxu0
        %v964 = vadd.f32 0.0, %v963
        %965 = vmatmul.bf16.gmra.mxu0 %v915
        %v966 = vpop.f32.mrf.mxu0
        %v967 = vadd.f32 0.0, %v966
        %v968 = vpop.f32.mrf.mxu0
        %v969 = vadd.f32 0.0, %v968
        %970 = vdwg.mxu0
        %v971 = vmax.f32 %v808, %v927
        %v972 = vmax.f32 %v809, %v929
        %v973 = vmax.f32 %v810, %v932
        %v974 = vmax.f32 %v811, %v934
        %v975 = vmax.f32 %v812, %v937
        %v976 = vmax.f32 %v813, %v939
        %v977 = vmax.f32 %v814, %v942
        %v978 = vmax.f32 %v815, %v944
        %v979 = vmax.f32 %v816, %v947
        %v980 = vmax.f32 %v817, %v949
        %v981 = vmax.f32 %v818, %v952
        %v982 = vmax.f32 %v819, %v954
        %v983 = vmax.f32 %v820, %v957
        %v984 = vmax.f32 %v821, %v959
        %v985 = vmax.f32 %v822, %v962
        %v986 = vmax.f32 %v823, %v964
        %v987 = vmax.f32 %v824, %v967
        %v988 = vmax.f32 %v825, %v969
        %s989 = scalar_lea.vmem %s473, 216 [#allocation2]
        %v990 = vld [vmem:[%s989] sm:$0xf]
        %v991 = vld [vmem:[%s989 + $0x4] sm:$0xf]
        %v992 = vld [vmem:[%s989 + $0x8] sm:$0xf]
        %v993 = vld [vmem:[%s989 + $0xc] sm:$0xf]
        %v994 = vld [vmem:[%s989 + $0x10] sm:$0xf]
        %v995 = vld [vmem:[%s989 + $0x14] sm:$0xf]
        %v996 = vld [vmem:[%s989 + $0x18] sm:$0xf]
        %v997 = vld [vmem:[%s989 + $0x1c] sm:$0xf]
        %v998 = vld [vmem:[%s989 + $0x20] sm:$0xf]
        %v999 = vld [vmem:[%s989 + $0x24] sm:$0xf]
        %v1000 = vld [vmem:[%s989 + $0x28] sm:$0xf]
        %v1001 = vld [vmem:[%s989 + $0x2c] sm:$0xf]
        %v1002 = vld [vmem:[%s989 + $0x30] sm:$0xf]
        %v1003 = vld [vmem:[%s989 + $0x34] sm:$0xf]
        %v1004 = vld [vmem:[%s989 + $0x38] sm:$0xf]
        %v1005 = vld [vmem:[%s989 + $0x3c] sm:$0xf]
        %v1006 = vld [vmem:[%s989 + $0x40] sm:$0xf]
        %v1007 = vld [vmem:[%s989 + $0x44] sm:$0xf]
        %v1026 = vunpack.c.l.b16 %v990
        %v1027 = vunpack.c.l.b16 %v991
        %v1028 = vunpack.c.l.b16 %v992
        %v1029 = vunpack.c.l.b16 %v993
        %v1030 = vunpack.c.l.b16 %v994
        %v1031 = vunpack.c.l.b16 %v995
        %v1032 = vunpack.c.l.b16 %v996
        %v1033 = vunpack.c.l.b16 %v997
        %v1034 = vunpack.c.l.b16 %v998
        %v1035 = vunpack.c.l.b16 %v999
        %v1036 = vunpack.c.l.b16 %v1000
        %v1037 = vunpack.c.l.b16 %v1001
        %v1038 = vunpack.c.l.b16 %v1002
        %v1039 = vunpack.c.l.b16 %v1003
        %v1040 = vunpack.c.l.b16 %v1004
        %v1041 = vunpack.c.l.b16 %v1005
        %v1042 = vunpack.c.l.b16 %v1006
        %v1043 = vunpack.c.l.b16 %v1007
        %v1044 = vpack.c.b16 %v1027, %v1026
        %v1045 = vpack.c.b16 %v1029, %v1028
        %v1046 = vpack.c.b16 %v1031, %v1030
        %v1047 = vpack.c.b16 %v1033, %v1032
        %v1048 = vpack.c.b16 %v1035, %v1034
        %v1049 = vpack.c.b16 %v1037, %v1036
        %v1050 = vpack.c.b16 %v1039, %v1038
        %v1051 = vpack.c.b16 %v1041, %v1040
        %v1052 = vpack.c.b16 %v1043, %v1042
        %v1054 = vsel %vm581, %v1044, 0
        %v1057 = vsel %vm581, %v1045, 0
        %v1060 = vsel %vm581, %v1046, 0
        %v1063 = vsel %vm581, %v1047, 0
        %v1066 = vsel %vm581, %v1048, 0
        %v1069 = vsel %vm581, %v1049, 0
        %v1072 = vsel %vm581, %v1050, 0
        %v1075 = vsel %vm581, %v1051, 0
        %v1078 = vsel %vm581, %v1052, 0
        %1080 = vmatpush.bf16.msra.mxu0 0
        %1081 = vmatpush.bf16.msra.mxu0 0
        %1082 = vmatpush.bf16.msra.mxu0 0
        %1083 = vmatpush.bf16.msra.mxu0 0
        %1084 = vmatpush.bf16.msra.mxu0 0
        %1085 = vmatpush.bf16.msra.mxu0 0
        %1086 = vmatpush.bf16.msra.mxu0 %v578
        %1087 = vmatpush.bf16.msra.mxu0 %v577
        %1088 = vmatmul.bf16.gmra.mxu0 %v1054
        %v1089 = vpop.f32.mrf.mxu0
        %v1090 = vadd.f32 0.0, %v1089
        %v1091 = vpop.f32.mrf.mxu0
        %v1092 = vadd.f32 0.0, %v1091
        %1093 = vmatmul.bf16.gmra.mxu0 %v1057
        %v1094 = vpop.f32.mrf.mxu0
        %v1095 = vadd.f32 0.0, %v1094
        %v1096 = vpop.f32.mrf.mxu0
        %v1097 = vadd.f32 0.0, %v1096
        %1098 = vmatmul.bf16.gmra.mxu0 %v1060
        %v1099 = vpop.f32.mrf.mxu0
        %v1100 = vadd.f32 0.0, %v1099
        %v1101 = vpop.f32.mrf.mxu0
        %v1102 = vadd.f32 0.0, %v1101
        %1103 = vmatmul.bf16.gmra.mxu0 %v1063
        %v1104 = vpop.f32.mrf.mxu0
        %v1105 = vadd.f32 0.0, %v1104
        %v1106 = vpop.f32.mrf.mxu0
        %v1107 = vadd.f32 0.0, %v1106
        %1108 = vmatmul.bf16.gmra.mxu0 %v1066
        %v1109 = vpop.f32.mrf.mxu0
        %v1110 = vadd.f32 0.0, %v1109
        %v1111 = vpop.f32.mrf.mxu0
        %v1112 = vadd.f32 0.0, %v1111
        %1113 = vmatmul.bf16.gmra.mxu0 %v1069
        %v1114 = vpop.f32.mrf.mxu0
        %v1115 = vadd.f32 0.0, %v1114
        %v1116 = vpop.f32.mrf.mxu0
        %v1117 = vadd.f32 0.0, %v1116
        %1118 = vmatmul.bf16.gmra.mxu0 %v1072
        %v1119 = vpop.f32.mrf.mxu0
        %v1120 = vadd.f32 0.0, %v1119
        %v1121 = vpop.f32.mrf.mxu0
        %v1122 = vadd.f32 0.0, %v1121
        %1123 = vmatmul.bf16.gmra.mxu0 %v1075
        %v1124 = vpop.f32.mrf.mxu0
        %v1125 = vadd.f32 0.0, %v1124
        %v1126 = vpop.f32.mrf.mxu0
        %v1127 = vadd.f32 0.0, %v1126
        %1128 = vmatmul.bf16.gmra.mxu0 %v1078
        %v1129 = vpop.f32.mrf.mxu0
        %v1130 = vadd.f32 0.0, %v1129
        %v1131 = vpop.f32.mrf.mxu0
        %v1132 = vadd.f32 0.0, %v1131
        %1133 = vdwg.mxu0
        %v1134 = vmax.f32 %v971, %v1090
        %v1135 = vmax.f32 %v972, %v1092
        %v1136 = vmax.f32 %v973, %v1095
        %v1137 = vmax.f32 %v974, %v1097
        %v1138 = vmax.f32 %v975, %v1100
        %v1139 = vmax.f32 %v976, %v1102
        %v1140 = vmax.f32 %v977, %v1105
        %v1141 = vmax.f32 %v978, %v1107
        %v1142 = vmax.f32 %v979, %v1110
        %v1143 = vmax.f32 %v980, %v1112
        %v1144 = vmax.f32 %v981, %v1115
        %v1145 = vmax.f32 %v982, %v1117
        %v1146 = vmax.f32 %v983, %v1120
        %v1147 = vmax.f32 %v984, %v1122
        %v1148 = vmax.f32 %v985, %v1125
        %v1149 = vmax.f32 %v986, %v1127
        %v1150 = vmax.f32 %v987, %v1130
        %v1151 = vmax.f32 %v988, %v1132
        %v1152 = vld [vmem:[%s2] sm:$0x1]
        %v1154 = vperm.slane %v1152, 0
        %v1156 = vadd.f32 %v1134, %v1154
        %v1157 = vadd.f32 %v1135, %v1154
        %v1158 = vadd.f32 %v1136, %v1154
        %v1159 = vadd.f32 %v1137, %v1154
        %v1160 = vadd.f32 %v1138, %v1154
        %v1161 = vadd.f32 %v1139, %v1154
        %v1162 = vadd.f32 %v1140, %v1154
        %v1163 = vadd.f32 %v1141, %v1154
        %v1164 = vadd.f32 %v1142, %v1154
        %v1165 = vadd.f32 %v1143, %v1154
        %v1166 = vadd.f32 %v1144, %v1154
        %v1167 = vadd.f32 %v1145, %v1154
        %v1168 = vadd.f32 %v1146, %v1154
        %v1169 = vadd.f32 %v1147, %v1154
        %v1170 = vadd.f32 %v1148, %v1154
        %v1171 = vadd.f32 %v1149, %v1154
        %v1172 = vadd.f32 %v1150, %v1154
        %v1173 = vadd.f32 %v1151, %v1154
        %v1174 = vmax.f32 %v1156, 0.0
        %v1175 = vmax.f32 %v1157, 0.0
        %v1176 = vmax.f32 %v1158, 0.0
        %v1177 = vmax.f32 %v1159, 0.0
        %v1178 = vmax.f32 %v1160, 0.0
        %v1179 = vmax.f32 %v1161, 0.0
        %v1180 = vmax.f32 %v1162, 0.0
        %v1181 = vmax.f32 %v1163, 0.0
        %v1182 = vmax.f32 %v1164, 0.0
        %v1183 = vmax.f32 %v1165, 0.0
        %v1184 = vmax.f32 %v1166, 0.0
        %v1185 = vmax.f32 %v1167, 0.0
        %v1186 = vmax.f32 %v1168, 0.0
        %v1187 = vmax.f32 %v1169, 0.0
        %v1188 = vmax.f32 %v1170, 0.0
        %v1189 = vmax.f32 %v1171, 0.0
        %v1190 = vmax.f32 %v1172, 0.0
        %v1191 = vmax.f32 %v1173, 0.0
        %vm1192 = vcmask 64512
        %1193 = vst.msk [vmem:[%s499] sm:$0xff] %vm1192, %v1174
        %1194 = vst.msk [vmem:[%s499 + $0x8] sm:$0xff] %vm1192, %v1175
        %1195 = vst.msk [vmem:[%s499 + $0x10] sm:$0xff] %vm1192, %v1176
        %1196 = vst.msk [vmem:[%s499 + $0x18] sm:$0xff] %vm1192, %v1177
        %1197 = vst.msk [vmem:[%s499 + $0x20] sm:$0xff] %vm1192, %v1178
        %1198 = vst.msk [vmem:[%s499 + $0x28] sm:$0xff] %vm1192, %v1179
        %1199 = vst.msk [vmem:[%s499 + $0x30] sm:$0xff] %vm1192, %v1180
        %1200 = vst.msk [vmem:[%s499 + $0x38] sm:$0xff] %vm1192, %v1181
        %1201 = vst.msk [vmem:[%s499 + $0x40] sm:$0xff] %vm1192, %v1182
        %1202 = vst.msk [vmem:[%s499 + $0x48] sm:$0xff] %vm1192, %v1183
        %1203 = vst.msk [vmem:[%s499 + $0x50] sm:$0xff] %vm1192, %v1184
        %1204 = vst.msk [vmem:[%s499 + $0x58] sm:$0xff] %vm1192, %v1185
        %1205 = vst.msk [vmem:[%s499 + $0x60] sm:$0xff] %vm1192, %v1186
        %1206 = vst.msk [vmem:[%s499 + $0x68] sm:$0xff] %vm1192, %v1187
        %1207 = vst.msk [vmem:[%s499 + $0x70] sm:$0xff] %vm1192, %v1188
        %1208 = vst.msk [vmem:[%s499 + $0x78] sm:$0xff] %vm1192, %v1189
        %1209 = vst.msk [vmem:[%s499 + $0x80] sm:$0xff] %vm1192, %v1190
        %1210 = vst.msk [vmem:[%s499 + $0x88] sm:$0xff] %vm1192, %v1191
        %s1211 = smul.u32 18, %s14
        %p1212 = scmp.lt.s32.totalorder %s1211, 35
        %s1213 = scalar_select %p1212, %s1211, 35
        %s1214 = smul.addr %s1213, 8
        %s1215 = scalar_lea.vmem %s3, %s1214
        // Predicated region
        $region74: #{lenet_forward.2} parent=68 // pred_check
          %p1216 = pneg %p100
        $region75: #{lenet_forward.2} parent=68 // pred_check_branch
          %1218 = sbr.rel (%p1216) target = $region77
        $region76: #{lenet_forward.2} parent=68 // pred_region
          %s1219 = smul.u32 18, %s14
        $region77: #{lenet_forward.2} parent=68 // pred_fallthru
          _
      $region69: #{lenet_forward.2} parent=5 // pred_fallthru
        _
      %p1220 = scmp.le.s32.totalorder 2, %s9
      // Predicated region
      $region78: #{lenet_forward.2} parent=5 // pred_check
        %p1221 = pneg %p1220
      $region79: #{lenet_forward.2} parent=5 // pred_check_branch
        %1223 = sbr.rel (%p1221) target = $region81
      $region80: #{lenet_forward.2} parent=5 // pred_region
        %s1224 = ssub.s32 %s9, 2
        // Predicated region
        $region82: #{lenet_forward.2} parent=80 // pred_check
          %p1225 = pneg %p106
        $region83: #{lenet_forward.2} parent=80 // pred_check_branch
          %1227 = sbr.rel (%p1225) target = $region85
        $region84: #{lenet_forward.2} parent=80 // pred_region
          %s1228 = smul.u32 18, %s15
          %p1229 = scmp.lt.s32.totalorder %s1228, 35
          %s1230 = scalar_select %p1229, %s1228, 35
          %s1231 = smul.addr %s1230, 8
          %s1232 = scalar_lea.vmem %s3, %s1231
        $region85: #{lenet_forward.2} parent=80 // pred_fallthru
          _
      $region81: #{lenet_forward.2} parent=5 // pred_fallthru
        _
    $region6: #{lenet_forward.2} parent=1 // loop_footer
      %s13 = sadd.s32 1, %s9
    $region7: #{lenet_forward.2} parent=1 // loop_footer_branch
      %8 = sbr.rel target = $region3
    $region8: #{lenet_forward.2} parent=1 // loop_exit
      _

// kernel: lenet_forward.3
$region0: #{lenet_forward.3}
  #allocation0 [shape = 'u32[]', space=smem, size = 0x4, offset = 0x4, fixed_abs, tag = 'smem constant byte address 0x4 - core index']
  #allocation1 [shape = 'u32[72,128]{1,0:T(1,128)}', space=vmem, size = 0x9000, scoped, tag = 'internal scratch']
  %s0 = inlined_call_operand.vmem [shape: f32[288,8], index: 0, kind: input, shape index: {}]
  %s1 = inlined_call_operand.vmem [shape: bf16[25,8,16], index: 1, kind: input, shape index: {}]
  %s2 = inlined_call_operand.vmem [shape: f32[1,16], index: 2, kind: input, shape index: {}]
  %s3 = inlined_call_operand.vmem [shape: bf16[16,16,128], index: 3, kind: input, shape index: {}]
  %s4 = inlined_call_operand.vmem [shape: f32[1,128], index: 4, kind: input, shape index: {}]
  %s5 = inlined_call_operand.vmem [shape: bf16[128,128], index: 5, kind: input, shape index: {}]
  %s6 = inlined_call_operand.vmem [shape: f32[1,128], index: 6, kind: input, shape index: {}]
  %s7 = inlined_call_operand.vmem [shape: bf16[128,128], index: 7, kind: input, shape index: {}]
  %s8 = inlined_call_operand.vmem [shape: f32[1,128], index: 8, kind: input, shape index: {}]
  %s9 = inlined_call_operand.hbm [shape: f32[2,128], index: 9, kind: output, shape index: {}]
  %s10 = sld [smem:[#allocation0]]
  $region46: #{lenet_forward.3} parent=0
    _
  %s12 = ssub.s32 1, %s10
  %s13 = scalar_select 0, %s12, %s10
  $region1: #{lenet_forward.3} parent=0
    #allocation2 [shape = 'u8[1024]{0}', space=vmem, size = 0x400, scoped, tag = 'output window, operand 0, single buffered']
    #allocation3 [shape = 's32[1]{0}', space=sflag, size = 0x4, scoped, tag = 'scoped memory for lenet_forward.3']
    %14 = vsyncpa [#allocation3], 0
    // Predicated region
    $region2: #{lenet_forward.3} parent=1 // pred_check
      _
    $region3: #{lenet_forward.3} parent=1 // pred_check_branch
      %16 = sbr.rel (0) target = $region5
    $region4: #{lenet_forward.3} parent=1 // pred_region
      _
    $region5: #{lenet_forward.3} parent=1 // pred_fallthru
      _
    // Predicated region
    $region6: #{lenet_forward.3} parent=1 // pred_check
      _
    $region7: #{lenet_forward.3} parent=1 // pred_check_branch
      %18 = sbr.rel (0) target = $region9
    $region8: #{lenet_forward.3} parent=1 // pred_region
      _
    $region9: #{lenet_forward.3} parent=1 // pred_fallthru
      _
    // Predicated region
    $region10: #{lenet_forward.3} parent=1 // pred_check
      _
    $region11: #{lenet_forward.3} parent=1 // pred_check_branch
      %20 = sbr.rel (0) target = $region13
    $region12: #{lenet_forward.3} parent=1 // pred_region
      _
    $region13: #{lenet_forward.3} parent=1 // pred_fallthru
      _
    // Predicated region
    $region14: #{lenet_forward.3} parent=1 // pred_check
      _
    $region15: #{lenet_forward.3} parent=1 // pred_check_branch
      %22 = sbr.rel (0) target = $region17
    $region16: #{lenet_forward.3} parent=1 // pred_region
      _
    $region17: #{lenet_forward.3} parent=1 // pred_fallthru
      _
    // Predicated region
    $region18: #{lenet_forward.3} parent=1 // pred_check
      _
    $region19: #{lenet_forward.3} parent=1 // pred_check_branch
      %24 = sbr.rel (0) target = $region21
    $region20: #{lenet_forward.3} parent=1 // pred_region
      _
    $region21: #{lenet_forward.3} parent=1 // pred_fallthru
      _
    // Predicated region
    $region22: #{lenet_forward.3} parent=1 // pred_check
      _
    $region23: #{lenet_forward.3} parent=1 // pred_check_branch
      %26 = sbr.rel (0) target = $region25
    $region24: #{lenet_forward.3} parent=1 // pred_region
      _
    $region25: #{lenet_forward.3} parent=1 // pred_fallthru
      _
    // Predicated region
    $region26: #{lenet_forward.3} parent=1 // pred_check
      _
    $region27: #{lenet_forward.3} parent=1 // pred_check_branch
      %28 = sbr.rel (0) target = $region29
    $region28: #{lenet_forward.3} parent=1 // pred_region
      _
    $region29: #{lenet_forward.3} parent=1 // pred_fallthru
      _
    // Predicated region
    $region30: #{lenet_forward.3} parent=1 // pred_check
      _
    $region31: #{lenet_forward.3} parent=1 // pred_check_branch
      %30 = sbr.rel (0) target = $region33
    $region32: #{lenet_forward.3} parent=1 // pred_region
      _
    $region33: #{lenet_forward.3} parent=1 // pred_fallthru
      _
    // Predicated region
    $region34: #{lenet_forward.3} parent=1 // pred_check
      _
    $region35: #{lenet_forward.3} parent=1 // pred_check_branch
      %32 = sbr.rel (0) target = $region37
    $region36: #{lenet_forward.3} parent=1 // pred_region
      _
    $region37: #{lenet_forward.3} parent=1 // pred_fallthru
      _
    %v34 = vld [vmem:[%s0] sm:$0xff]
    %v35 = vld [vmem:[%s0 + $0x8] sm:$0xff]
    %v36 = vld [vmem:[%s0 + $0x10] sm:$0xff]
    %v37 = vld [vmem:[%s0 + $0x18] sm:$0xff]
    %v38 = vld [vmem:[%s0 + $0x20] sm:$0xff]
    %v39 = vld [vmem:[%s0 + $0x28] sm:$0xff]
    %v40 = vld [vmem:[%s0 + $0x30] sm:$0xff]
    %v41 = vld [vmem:[%s0 + $0x38] sm:$0xff]
    %v42 = vld [vmem:[%s0 + $0x40] sm:$0xff]
    %v43 = vld [vmem:[%s0 + $0x48] sm:$0xff]
    %v44 = vld [vmem:[%s0 + $0x50] sm:$0xff]
    %v45 = vld [vmem:[%s0 + $0x58] sm:$0xff]
    %v46 = vld [vmem:[%s0 + $0x60] sm:$0xff]
    %v47 = vld [vmem:[%s0 + $0x68] sm:$0xff]
    %v48 = vld [vmem:[%s0 + $0x70] sm:$0xff]
    %v49 = vld [vmem:[%s0 + $0x78] sm:$0xff]
    %v50 = vld [vmem:[%s0 + $0x80] sm:$0xff]
    %v51 = vld [vmem:[%s0 + $0x88] sm:$0xff]
    %v52 = vld [vmem:[%s0 + $0x90] sm:$0xff]
    %v53 = vld [vmem:[%s0 + $0x98] sm:$0xff]
    %v54 = vld [vmem:[%s0 + $0xa0] sm:$0xff]
    %v55 = vld [vmem:[%s0 + $0xa8] sm:$0xff]
    %v56 = vld [vmem:[%s0 + $0xb0] sm:$0xff]
    %v57 = vld [vmem:[%s0 + $0xb8] sm:$0xff]
    %v58 = vld [vmem:[%s0 + $0xc0] sm:$0xff]
    %v59 = vld [vmem:[%s0 + $0xc8] sm:$0xff]
    %v60 = vld [vmem:[%s0 + $0xd0] sm:$0xff]
    %v61 = vld [vmem:[%s0 + $0xd8] sm:$0xff]
    %v62 = vld [vmem:[%s0 + $0xe0] sm:$0xff]
    %v63 = vld [vmem:[%s0 + $0xe8] sm:$0xff]
    %v64 = vld [vmem:[%s0 + $0xf0] sm:$0xff]
    %v65 = vld [vmem:[%s0 + $0xf8] sm:$0xff]
    %v66 = vld [vmem:[%s0 + $0x100] sm:$0xff]
    %v67 = vld [vmem:[%s0 + $0x108] sm:$0xff]
    %v68 = vld [vmem:[%s0 + $0x110] sm:$0xff]
    %v69 = vld [vmem:[%s0 + $0x118] sm:$0xff]
    %vm72 = vcmask 1043456
    %v73 = vrot.slane %v35, 4
    %v74 = vrot.slane %v36, 4
    %v75 = vsel %vm72, %v73, %v74
    %v79 = vrot.slane %v38, 4
    %v80 = vrot.slane %v39, 4
    %v81 = vsel %vm72, %v79, %v80
    %v83 = vpack.c.bf16 %v34, %v34
    %v84 = vpack.c.bf16 %v75, %v75
    %v85 = vpack.c.bf16 %v37, %v37
    %v86 = vpack.c.bf16 %v81, %v81
    %v89 = vrot.slane %v44, 4
    %v90 = vrot.slane %v45, 4
    %v91 = vsel %vm72, %v89, %v90
    %v95 = vrot.slane %v47, 4
    %v96 = vrot.slane %v48, 4
    %v97 = vsel %vm72, %v95, %v96
    %v99 = vpack.c.bf16 %v43, %v43
    %v100 = vpack.c.bf16 %v91, %v91
    %v101 = vpack.c.bf16 %v46, %v46
    %v102 = vpack.c.bf16 %v97, %v97
    %vm104 = vcmask 1045504
    %v105 = vrot.slane %v34, 2
    %v106 = vrot.slane %v35, 2
    %v107 = vsel %vm104, %v105, %v106
    %vm109 = vcmask 1041408
    %v110 = vrot.slane %v35, 6
    %v111 = vrot.slane %v36, 6
    %v112 = vsel %vm109, %v110, %v111
    %v115 = vrot.slane %v37, 2
    %v116 = vrot.slane %v38, 2
    %v117 = vsel %vm104, %v115, %v116
    %v119 = vrot.slane %v38, 6
    %v120 = vrot.slane %v39, 6
    %v121 = vsel %vm109, %v119, %v120
    %v123 = vpack.c.bf16 %v107, %v107
    %v124 = vpack.c.bf16 %v112, %v112
    %v125 = vpack.c.bf16 %v117, %v117
    %v126 = vpack.c.bf16 %v121, %v121
    %v128 = vrot.slane %v43, 2
    %v129 = vrot.slane %v44, 2
    %v130 = vsel %vm104, %v128, %v129
    %v132 = vrot.slane %v44, 6
    %v133 = vrot.slane %v45, 6
    %v134 = vsel %vm109, %v132, %v133
    %v137 = vrot.slane %v46, 2
    %v138 = vrot.slane %v47, 2
    %v139 = vsel %vm104, %v137, %v138
    %v141 = vrot.slane %v47, 6
    %v142 = vrot.slane %v48, 6
    %v143 = vsel %vm109, %v141, %v142
    %v145 = vpack.c.bf16 %v130, %v130
    %v146 = vpack.c.bf16 %v134, %v134
    %v147 = vpack.c.bf16 %v139, %v139
    %v148 = vpack.c.bf16 %v143, %v143
    %v149 = vrot.slane %v34, 4
    %v150 = vsel %vm72, %v149, %v73
    %v152 = vrot.slane %v37, 4
    %v153 = vsel %vm72, %v152, %v79
    %v155 = vpack.c.bf16 %v150, %v150
    %v156 = vpack.c.bf16 %v36, %v36
    %v157 = vpack.c.bf16 %v153, %v153
    %v158 = vpack.c.bf16 %v39, %v39
    %v159 = vrot.slane %v43, 4
    %v160 = vsel %vm72, %v159, %v89
    %v162 = vrot.slane %v46, 4
    %v163 = vsel %vm72, %v162, %v95
    %v165 = vpack.c.bf16 %v160, %v160
    %v166 = vpack.c.bf16 %v45, %v45
    %v167 = vpack.c.bf16 %v163, %v163
    %v168 = vpack.c.bf16 %v48, %v48
    %v171 = vrot.slane %v53, 4
    %v172 = vrot.slane %v54, 4
    %v173 = vsel %vm72, %v171, %v172
    %v177 = vrot.slane %v56, 4
    %v178 = vrot.slane %v57, 4
    %v179 = vsel %vm72, %v177, %v178
    %v181 = vpack.c.bf16 %v52, %v52
    %v182 = vpack.c.bf16 %v173, %v173
    %v183 = vpack.c.bf16 %v55, %v55
    %v184 = vpack.c.bf16 %v179, %v179
    %v187 = vrot.slane %v62, 4
    %v188 = vrot.slane %v63, 4
    %v189 = vsel %vm72, %v187, %v188
    %v193 = vrot.slane %v65, 4
    %v194 = vrot.slane %v66, 4
    %v195 = vsel %vm72, %v193, %v194
    %v197 = vpack.c.bf16 %v61, %v61
    %v198 = vpack.c.bf16 %v189, %v189
    %v199 = vpack.c.bf16 %v64, %v64
    %v200 = vpack.c.bf16 %v195, %v195
    %v202 = vrot.slane %v52, 2
    %v203 = vrot.slane %v53, 2
    %v204 = vsel %vm104, %v202, %v203
    %v206 = vrot.slane %v53, 6
    %v207 = vrot.slane %v54, 6
    %v208 = vsel %vm109, %v206, %v207
    %v211 = vrot.slane %v55, 2
    %v212 = vrot.slane %v56, 2
    %v213 = vsel %vm104, %v211, %v212
    %v215 = vrot.slane %v56, 6
    %v216 = vrot.slane %v57, 6
    %v217 = vsel %vm109, %v215, %v216
    %v219 = vpack.c.bf16 %v204, %v204
    %v220 = vpack.c.bf16 %v208, %v208
    %v221 = vpack.c.bf16 %v213, %v213
    %v222 = vpack.c.bf16 %v217, %v217
    %v224 = vrot.slane %v61, 2
    %v225 = vrot.slane %v62, 2
    %v226 = vsel %vm104, %v224, %v225
    %v228 = vrot.slane %v62, 6
    %v229 = vrot.slane %v63, 6
    %v230 = vsel %vm109, %v228, %v229
    %v233 = vrot.slane %v64, 2
    %v234 = vrot.slane %v65, 2
    %v235 = vsel %vm104, %v233, %v234
    %v237 = vrot.slane %v65, 6
    %v238 = vrot.slane %v66, 6
    %v239 = vsel %vm109, %v237, %v238
    %v241 = vpack.c.bf16 %v226, %v226
    %v242 = vpack.c.bf16 %v230, %v230
    %v243 = vpack.c.bf16 %v235, %v235
    %v244 = vpack.c.bf16 %v239, %v239
    %v245 = vrot.slane %v52, 4
    %v246 = vsel %vm72, %v245, %v171
    %v248 = vrot.slane %v55, 4
    %v249 = vsel %vm72, %v248, %v177
    %v251 = vpack.c.bf16 %v246, %v246
    %v252 = vpack.c.bf16 %v54, %v54
    %v253 = vpack.c.bf16 %v249, %v249
    %v254 = vpack.c.bf16 %v57, %v57
    %v255 = vrot.slane %v61, 4
    %v256 = vsel %vm72, %v255, %v187
    %v258 = vrot.slane %v64, 4
    %v259 = vsel %vm72, %v258, %v193
    %v261 = vpack.c.bf16 %v256, %v256
    %v262 = vpack.c.bf16 %v63, %v63
    %v263 = vpack.c.bf16 %v259, %v259
    %v264 = vpack.c.bf16 %v66, %v66
    %v265 = vpack.c.bf16 %v40, %v40
    %v266 = vpack.c.bf16 %v49, %v49
    %v269 = vrot.slane %v40, 2
    %v270 = vrot.slane %v41, 2
    %v271 = vsel %vm104, %v269, %v270
    %v273 = vpack.c.bf16 %v271, %v271
    %v276 = vrot.slane %v49, 2
    %v277 = vrot.slane %v50, 2
    %v278 = vsel %vm104, %v276, %v277
    %v280 = vpack.c.bf16 %v278, %v278
    %v281 = vrot.slane %v40, 4
    %v282 = vrot.slane %v41, 4
    %v283 = vsel %vm72, %v281, %v282
    %v285 = vpack.c.bf16 %v283, %v283
    %v286 = vrot.slane %v49, 4
    %v287 = vrot.slane %v50, 4
    %v288 = vsel %vm72, %v286, %v287
    %v290 = vpack.c.bf16 %v288, %v288
    %v291 = vpack.c.bf16 %v58, %v58
    %v292 = vpack.c.bf16 %v67, %v67
    %v295 = vrot.slane %v58, 2
    %v296 = vrot.slane %v59, 2
    %v297 = vsel %vm104, %v295, %v296
    %v299 = vpack.c.bf16 %v297, %v297
    %v302 = vrot.slane %v67, 2
    %v303 = vrot.slane %v68, 2
    %v304 = vsel %vm104, %v302, %v303
    %v306 = vpack.c.bf16 %v304, %v304
    %v307 = vrot.slane %v58, 4
    %v308 = vrot.slane %v59, 4
    %v309 = vsel %vm72, %v307, %v308
    %v311 = vpack.c.bf16 %v309, %v309
    %v312 = vrot.slane %v67, 4
    %v313 = vrot.slane %v68, 4
    %v314 = vsel %vm72, %v312, %v313
    %v316 = vpack.c.bf16 %v314, %v314
    %v318 = vrot.slane %v42, 4
    %v319 = vsel %vm72, %v282, %v318
    %v321 = vpack.c.bf16 %v319, %v319
    %v323 = vrot.slane %v51, 4
    %v324 = vsel %vm72, %v287, %v323
    %v326 = vpack.c.bf16 %v324, %v324
    %v327 = vrot.slane %v41, 6
    %v328 = vrot.slane %v42, 6
    %v329 = vsel %vm109, %v327, %v328
    %v331 = vpack.c.bf16 %v329, %v329
    %v332 = vrot.slane %v50, 6
    %v333 = vrot.slane %v51, 6
    %v334 = vsel %vm109, %v332, %v333
    %v336 = vpack.c.bf16 %v334, %v334
    %v337 = vpack.c.bf16 %v42, %v42
    %v338 = vpack.c.bf16 %v51, %v51
    %v340 = vrot.slane %v60, 4
    %v341 = vsel %vm72, %v308, %v340
    %v343 = vpack.c.bf16 %v341, %v341
    %v345 = vrot.slane %v69, 4
    %v346 = vsel %vm72, %v313, %v345
    %v348 = vpack.c.bf16 %v346, %v346
    %v349 = vrot.slane %v59, 6
    %v350 = vrot.slane %v60, 6
    %v351 = vsel %vm109, %v349, %v350
    %v353 = vpack.c.bf16 %v351, %v351
    %v354 = vrot.slane %v68, 6
    %v355 = vrot.slane %v69, 6
    %v356 = vsel %vm109, %v354, %v355
    %v358 = vpack.c.bf16 %v356, %v356
    %v359 = vpack.c.bf16 %v60, %v60
    %v360 = vpack.c.bf16 %v69, %v69
    %v365 = vunpack.c.l.b16 %v83
    %v366 = vunpack.c.l.b16 %v84
    %v367 = vunpack.c.l.b16 %v85
    %v368 = vunpack.c.l.b16 %v86
    %v369 = vpack.c.b16 %v366, %v365
    %v370 = vpack.c.b16 %v368, %v367
    %v375 = vunpack.c.l.b16 %v99
    %v376 = vunpack.c.l.b16 %v100
    %v377 = vunpack.c.l.b16 %v101
    %v378 = vunpack.c.l.b16 %v102
    %v379 = vpack.c.b16 %v376, %v375
    %v380 = vpack.c.b16 %v378, %v377
    %v385 = vunpack.c.l.b16 %v181
    %v386 = vunpack.c.l.b16 %v182
    %v387 = vunpack.c.l.b16 %v183
    %v388 = vunpack.c.l.b16 %v184
    %v389 = vpack.c.b16 %v386, %v385
    %v390 = vpack.c.b16 %v388, %v387
    %v395 = vunpack.c.l.b16 %v197
    %v396 = vunpack.c.l.b16 %v198
    %v397 = vunpack.c.l.b16 %v199
    %v398 = vunpack.c.l.b16 %v200
    %v399 = vpack.c.b16 %v396, %v395
    %v400 = vpack.c.b16 %v398, %v397
    %v401 = vld [vmem:[%s1] sm:$0xf]
    %vm402 = vcmask 64512
    %v404 = vsel %vm402, %v369, 0
    %v407 = vsel %vm402, %v370, 0
    %v410 = vsel %vm402, %v379, 0
    %v413 = vsel %vm402, %v380, 0
    %v416 = vsel %vm402, %v389, 0
    %v419 = vsel %vm402, %v390, 0
    %v422 = vsel %vm402, %v399, 0
    %v425 = vsel %vm402, %v400, 0
    %v428 = vsel %vm72, %v401, 0
    %430 = vmatpush.bf16.msra.mxu0 0
    %431 = vmatpush.bf16.msra.mxu0 0
    %432 = vmatpush.bf16.msra.mxu0 0
    %433 = vmatpush.bf16.msra.mxu0 0
    %434 = vmatpush.bf16.msra.mxu0 0
    %435 = vmatpush.bf16.msra.mxu0 0
    %436 = vmatpush.bf16.msra.mxu0 0
    %437 = vmatpush.bf16.msra.mxu0 %v428
    %438 = vmatmul.bf16.gmra.mxu0 %v404
    %v439 = vpop.f32.mrf.mxu0
    %v440 = vadd.f32 0.0, %v439
    %v441 = vpop.f32.mrf.mxu0
    %v442 = vadd.f32 0.0, %v441
    %443 = vmatmul.bf16.gmra.mxu0 %v407
    %v444 = vpop.f32.mrf.mxu0
    %v445 = vadd.f32 0.0, %v444
    %v446 = vpop.f32.mrf.mxu0
    %v447 = vadd.f32 0.0, %v446
    %448 = vmatmul.bf16.gmra.mxu0 %v410
    %v449 = vpop.f32.mrf.mxu0
    %v450 = vadd.f32 0.0, %v449
    %v451 = vpop.f32.mrf.mxu0
    %v452 = vadd.f32 0.0, %v451
    %453 = vmatmul.bf16.gmra.mxu0 %v413
    %v454 = vpop.f32.mrf.mxu0
    %v455 = vadd.f32 0.0, %v454
    %v456 = vpop.f32.mrf.mxu0
    %v457 = vadd.f32 0.0, %v456
    %458 = vmatmul.bf16.gmra.mxu0 %v416
    %v459 = vpop.f32.mrf.mxu0
    %v460 = vadd.f32 0.0, %v459
    %v461 = vpop.f32.mrf.mxu0
    %v462 = vadd.f32 0.0, %v461
    %463 = vmatmul.bf16.gmra.mxu0 %v419
    %v464 = vpop.f32.mrf.mxu0
    %v465 = vadd.f32 0.0, %v464
    %v466 = vpop.f32.mrf.mxu0
    %v467 = vadd.f32 0.0, %v466
    %468 = vmatmul.bf16.gmra.mxu0 %v422
    %v469 = vpop.f32.mrf.mxu0
    %v470 = vadd.f32 0.0, %v469
    %v471 = vpop.f32.mrf.mxu0
    %v472 = vadd.f32 0.0, %v471
    %473 = vmatmul.bf16.gmra.mxu0 %v425
    %v474 = vpop.f32.mrf.mxu0
    %v475 = vadd.f32 0.0, %v474
    %v476 = vpop.f32.mrf.mxu0
    %v477 = vadd.f32 0.0, %v476
    %478 = vdwg.mxu0
    %v479 = vadd.f32 %v440, 0.0
    %v480 = vadd.f32 %v442, 0.0
    %v481 = vadd.f32 %v445, 0.0
    %v482 = vadd.f32 %v447, 0.0
    %v483 = vadd.f32 %v450, 0.0
    %v484 = vadd.f32 %v452, 0.0
    %v485 = vadd.f32 %v455, 0.0
    %v486 = vadd.f32 %v457, 0.0
    %v487 = vadd.f32 %v460, 0.0
    %v488 = vadd.f32 %v462, 0.0
    %v489 = vadd.f32 %v465, 0.0
    %v490 = vadd.f32 %v467, 0.0
    %v491 = vadd.f32 %v470, 0.0
    %v492 = vadd.f32 %v472, 0.0
    %v493 = vadd.f32 %v475, 0.0
    %v494 = vadd.f32 %v477, 0.0
    %v499 = vunpack.c.l.b16 %v123
    %v500 = vunpack.c.l.b16 %v124
    %v501 = vunpack.c.l.b16 %v125
    %v502 = vunpack.c.l.b16 %v126
    %v503 = vpack.c.b16 %v500, %v499
    %v504 = vpack.c.b16 %v502, %v501
    %v509 = vunpack.c.l.b16 %v219
    %v510 = vunpack.c.l.b16 %v220
    %v511 = vunpack.c.l.b16 %v221
    %v512 = vunpack.c.l.b16 %v222
    %v513 = vpack.c.b16 %v510, %v509
    %v514 = vpack.c.b16 %v512, %v511
    %s515 = scalar_lea.vmem %s1, 4
    %v516 = vld [vmem:[%s515] sm:$0xf]
    %v518 = vsel %vm402, %v503, 0
    %v521 = vsel %vm402, %v504, 0
    %v524 = vsel %vm402, %v513, 0
    %v527 = vsel %vm402, %v514, 0
    %v530 = vsel %vm72, %v516, 0
    %532 = vmatpush.bf16.msra.mxu0 0
    %533 = vmatpush.bf16.msra.mxu0 0
    %534 = vmatpush.bf16.msra.mxu0 0
    %535 = vmatpush.bf16.msra.mxu0 0
    %536 = vmatpush.bf16.msra.mxu0 0
    %537 = vmatpush.bf16.msra.mxu0 0
    %538 = vmatpush.bf16.msra.mxu0 0
    %539 = vmatpush.bf16.msra.mxu0 %v530
    %540 = vmatmul.bf16.gmra.mxu0 %v410
    %v541 = vpop.f32.mrf.mxu0
    %v542 = vadd.f32 0.0, %v541
    %v543 = vpop.f32.mrf.mxu0
    %v544 = vadd.f32 0.0, %v543
    %545 = vmatmul.bf16.gmra.mxu0 %v413
    %v546 = vpop.f32.mrf.mxu0
    %v547 = vadd.f32 0.0, %v546
    %v548 = vpop.f32.mrf.mxu0
    %v549 = vadd.f32 0.0, %v548
    %550 = vmatmul.bf16.gmra.mxu0 %v518
    %v551 = vpop.f32.mrf.mxu0
    %v552 = vadd.f32 0.0, %v551
    %v553 = vpop.f32.mrf.mxu0
    %v554 = vadd.f32 0.0, %v553
    %555 = vmatmul.bf16.gmra.mxu0 %v521
    %v556 = vpop.f32.mrf.mxu0
    %v557 = vadd.f32 0.0, %v556
    %v558 = vpop.f32.mrf.mxu0
    %v559 = vadd.f32 0.0, %v558
    %560 = vmatmul.bf16.gmra.mxu0 %v422
    %v561 = vpop.f32.mrf.mxu0
    %v562 = vadd.f32 0.0, %v561
    %v563 = vpop.f32.mrf.mxu0
    %v564 = vadd.f32 0.0, %v563
    %565 = vmatmul.bf16.gmra.mxu0 %v425
    %v566 = vpop.f32.mrf.mxu0
    %v567 = vadd.f32 0.0, %v566
    %v568 = vpop.f32.mrf.mxu0
    %v569 = vadd.f32 0.0, %v568
    %570 = vmatmul.bf16.gmra.mxu0 %v524
    %v571 = vpop.f32.mrf.mxu0
    %v572 = vadd.f32 0.0, %v571
    %v573 = vpop.f32.mrf.mxu0
    %v574 = vadd.f32 0.0, %v573
    %575 = vmatmul.bf16.gmra.mxu0 %v527
    %v576 = vpop.f32.mrf.mxu0
    %v577 = vadd.f32 0.0, %v576
    %v578 = vpop.f32.mrf.mxu0
    %v579 = vadd.f32 0.0, %v578
    %580 = vdwg.mxu0
    %v581 = vadd.f32 %v479, %v542
    %v582 = vadd.f32 %v480, %v544
    %v583 = vadd.f32 %v481, %v547
    %v584 = vadd.f32 %v482, %v549
    %v585 = vadd.f32 %v483, %v552
    %v586 = vadd.f32 %v484, %v554
    %v587 = vadd.f32 %v485, %v557
    %v588 = vadd.f32 %v486, %v559
    %v589 = vadd.f32 %v487, %v562
    %v590 = vadd.f32 %v488, %v564
    %v591 = vadd.f32 %v489, %v567
    %v592 = vadd.f32 %v490, %v569
    %v593 = vadd.f32 %v491, %v572
    %v594 = vadd.f32 %v492, %v574
    %v595 = vadd.f32 %v493, %v577
    %v596 = vadd.f32 %v494, %v579
    %v601 = vunpack.c.l.b16 %v145
    %v602 = vunpack.c.l.b16 %v146
    %v603 = vunpack.c.l.b16 %v147
    %v604 = vunpack.c.l.b16 %v148
    %v605 = vpack.c.b16 %v602, %v601
    %v606 = vpack.c.b16 %v604, %v603
    %v611 = vunpack.c.l.b16 %v241
    %v612 = vunpack.c.l.b16 %v242
    %v613 = vunpack.c.l.b16 %v243
    %v614 = vunpack.c.l.b16 %v244
    %v615 = vpack.c.b16 %v612, %v611
    %v616 = vpack.c.b16 %v614, %v613
    %s617 = scalar_lea.vmem %s1, 8
    %v618 = vld [vmem:[%s617] sm:$0xf]
    %v620 = vsel %vm402, %v605, 0
    %v623 = vsel %vm402, %v606, 0
    %v626 = vsel %vm402, %v615, 0
    %v629 = vsel %vm402, %v616, 0
    %v632 = vsel %vm72, %v618, 0
    %634 = vmatpush.bf16.msra.mxu0 0
    %635 = vmatpush.bf16.msra.mxu0 0
    %636 = vmatpush.bf16.msra.mxu0 0
    %637 = vmatpush.bf16.msra.mxu0 0
    %638 = vmatpush.bf16.msra.mxu0 0
    %639 = vmatpush.bf16.msra.mxu0 0
    %640 = vmatpush.bf16.msra.mxu0 0
    %641 = vmatpush.bf16.msra.mxu0 %v632
    %642 = vmatmul.bf16.gmra.mxu0 %v518
    %v643 = vpop.f32.mrf.mxu0
    %v644 = vadd.f32 0.0, %v643
    %v645 = vpop.f32.mrf.mxu0
    %v646 = vadd.f32 0.0, %v645
    %647 = vmatmul.bf16.gmra.mxu0 %v521
    %v648 = vpop.f32.mrf.mxu0
    %v649 = vadd.f32 0.0, %v648
    %v650 = vpop.f32.mrf.mxu0
    %v651 = vadd.f32 0.0, %v650
    %652 = vmatmul.bf16.gmra.mxu0 %v620
    %v653 = vpop.f32.mrf.mxu0
    %v654 = vadd.f32 0.0, %v653
    %v655 = vpop.f32.mrf.mxu0
    %v656 = vadd.f32 0.0, %v655
    %657 = vmatmul.bf16.gmra.mxu0 %v623
    %v658 = vpop.f32.mrf.mxu0
    %v659 = vadd.f32 0.0, %v658
    %v660 = vpop.f32.mrf.mxu0
    %v661 = vadd.f32 0.0, %v660
    %662 = vmatmul.bf16.gmra.mxu0 %v524
    %v663 = vpop.f32.mrf.mxu0
    %v664 = vadd.f32 0.0, %v663
    %v665 = vpop.f32.mrf.mxu0
    %v666 = vadd.f32 0.0, %v665
    %667 = vmatmul.bf16.gmra.mxu0 %v527
    %v668 = vpop.f32.mrf.mxu0
    %v669 = vadd.f32 0.0, %v668
    %v670 = vpop.f32.mrf.mxu0
    %v671 = vadd.f32 0.0, %v670
    %672 = vmatmul.bf16.gmra.mxu0 %v626
    %v673 = vpop.f32.mrf.mxu0
    %v674 = vadd.f32 0.0, %v673
    %v675 = vpop.f32.mrf.mxu0
    %v676 = vadd.f32 0.0, %v675
    %677 = vmatmul.bf16.gmra.mxu0 %v629
    %v678 = vpop.f32.mrf.mxu0
    %v679 = vadd.f32 0.0, %v678
    %v680 = vpop.f32.mrf.mxu0
    %v681 = vadd.f32 0.0, %v680
    %682 = vdwg.mxu0
    %v683 = vadd.f32 %v581, %v644
    %v684 = vadd.f32 %v582, %v646
    %v685 = vadd.f32 %v583, %v649
    %v686 = vadd.f32 %v584, %v651
    %v687 = vadd.f32 %v585, %v654
    %v688 = vadd.f32 %v586, %v656
    %v689 = vadd.f32 %v587, %v659
    %v690 = vadd.f32 %v588, %v661
    %v691 = vadd.f32 %v589, %v664
    %v692 = vadd.f32 %v590, %v666
    %v693 = vadd.f32 %v591, %v669
    %v694 = vadd.f32 %v592, %v671
    %v695 = vadd.f32 %v593, %v674
    %v696 = vadd.f32 %v594, %v676
    %v697 = vadd.f32 %v595, %v679
    %v698 = vadd.f32 %v596, %v681
    %v703 = vunpack.c.l.b16 %v155
    %v704 = vunpack.c.l.b16 %v156
    %v705 = vunpack.c.l.b16 %v157
    %v706 = vunpack.c.l.b16 %v158
    %v707 = vpack.c.b16 %v704, %v703
    %v708 = vpack.c.b16 %v706, %v705
    %v713 = vunpack.c.l.b16 %v251
    %v714 = vunpack.c.l.b16 %v252
    %v715 = vunpack.c.l.b16 %v253
    %v716 = vunpack.c.l.b16 %v254
    %v717 = vpack.c.b16 %v714, %v713
    %v718 = vpack.c.b16 %v716, %v715
    %s719 = scalar_lea.vmem %s1, 12
    %v720 = vld [vmem:[%s719] sm:$0xf]
    %v722 = vsel %vm402, %v707, 0
    %v725 = vsel %vm402, %v708, 0
    %v728 = vsel %vm402, %v717, 0
    %v731 = vsel %vm402, %v718, 0
    %v734 = vsel %vm72, %v720, 0
    %736 = vmatpush.bf16.msra.mxu0 0
    %737 = vmatpush.bf16.msra.mxu0 0
    %738 = vmatpush.bf16.msra.mxu0 0
    %739 = vmatpush.bf16.msra.mxu0 0
    %740 = vmatpush.bf16.msra.mxu0 0
    %741 = vmatpush.bf16.msra.mxu0 0
    %742 = vmatpush.bf16.msra.mxu0 0
    %743 = vmatpush.bf16.msra.mxu0 %v734
    %744 = vmatmul.bf16.gmra.mxu0 %v620
    %v745 = vpop.f32.mrf.mxu0
    %v746 = vadd.f32 0.0, %v745
    %v747 = vpop.f32.mrf.mxu0
    %v748 = vadd.f32 0.0, %v747
    %749 = vmatmul.bf16.gmra.mxu0 %v623
    %v750 = vpop.f32.mrf.mxu0
    %v751 = vadd.f32 0.0, %v750
    %v752 = vpop.f32.mrf.mxu0
    %v753 = vadd.f32 0.0, %v752
    %754 = vmatmul.bf16.gmra.mxu0 %v722
    %v755 = vpop.f32.mrf.mxu0
    %v756 = vadd.f32 0.0, %v755
    %v757 = vpop.f32.mrf.mxu0
    %v758 = vadd.f32 0.0, %v757
    %759 = vmatmul.bf16.gmra.mxu0 %v725
    %v760 = vpop.f32.mrf.mxu0
    %v761 = vadd.f32 0.0, %v760
    %v762 = vpop.f32.mrf.mxu0
    %v763 = vadd.f32 0.0, %v762
    %764 = vmatmul.bf16.gmra.mxu0 %v626
    %v765 = vpop.f32.mrf.mxu0
    %v766 = vadd.f32 0.0, %v765
    %v767 = vpop.f32.mrf.mxu0
    %v768 = vadd.f32 0.0, %v767
    %769 = vmatmul.bf16.gmra.mxu0 %v629
    %v770 = vpop.f32.mrf.mxu0
    %v771 = vadd.f32 0.0, %v770
    %v772 = vpop.f32.mrf.mxu0
    %v773 = vadd.f32 0.0, %v772
    %774 = vmatmul.bf16.gmra.mxu0 %v728
    %v775 = vpop.f32.mrf.mxu0
    %v776 = vadd.f32 0.0, %v775
    %v777 = vpop.f32.mrf.mxu0
    %v778 = vadd.f32 0.0, %v777
    %779 = vmatmul.bf16.gmra.mxu0 %v731
    %v780 = vpop.f32.mrf.mxu0
    %v781 = vadd.f32 0.0, %v780
    %v782 = vpop.f32.mrf.mxu0
    %v783 = vadd.f32 0.0, %v782
    %784 = vdwg.mxu0
    %v785 = vadd.f32 %v683, %v746
    %v786 = vadd.f32 %v684, %v748
    %v787 = vadd.f32 %v685, %v751
    %v788 = vadd.f32 %v686, %v753
    %v789 = vadd.f32 %v687, %v756
    %v790 = vadd.f32 %v688, %v758
    %v791 = vadd.f32 %v689, %v761
    %v792 = vadd.f32 %v690, %v763
    %v793 = vadd.f32 %v691, %v766
    %v794 = vadd.f32 %v692, %v768
    %v795 = vadd.f32 %v693, %v771
    %v796 = vadd.f32 %v694, %v773
    %v797 = vadd.f32 %v695, %v776
    %v798 = vadd.f32 %v696, %v778
    %v799 = vadd.f32 %v697, %v781
    %v800 = vadd.f32 %v698, %v783
    %v805 = vunpack.c.l.b16 %v165
    %v806 = vunpack.c.l.b16 %v166
    %v807 = vunpack.c.l.b16 %v167
    %v808 = vunpack.c.l.b16 %v168
    %v809 = vpack.c.b16 %v806, %v805
    %v810 = vpack.c.b16 %v808, %v807
    %v815 = vunpack.c.l.b16 %v261
    %v816 = vunpack.c.l.b16 %v262
    %v817 = vunpack.c.l.b16 %v263
    %v818 = vunpack.c.l.b16 %v264
    %v819 = vpack.c.b16 %v816, %v815
    %v820 = vpack.c.b16 %v818, %v817
    %s821 = scalar_lea.vmem %s1, 16
    %v822 = vld [vmem:[%s821] sm:$0xf]
    %v824 = vsel %vm402, %v809, 0
    %v827 = vsel %vm402, %v810, 0
    %v830 = vsel %vm402, %v819, 0
    %v833 = vsel %vm402, %v820, 0
    %v836 = vsel %vm72, %v822, 0
    %838 = vmatpush.bf16.msra.mxu0 0
    %839 = vmatpush.bf16.msra.mxu0 0
    %840 = vmatpush.bf16.msra.mxu0 0
    %841 = vmatpush.bf16.msra.mxu0 0
    %842 = vmatpush.bf16.msra.mxu0 0
    %843 = vmatpush.bf16.msra.mxu0 0
    %844 = vmatpush.bf16.msra.mxu0 0
    %845 = vmatpush.bf16.msra.mxu0 %v836
    %846 = vmatmul.bf16.gmra.mxu0 %v722
    %v847 = vpop.f32.mrf.mxu0
    %v848 = vadd.f32 0.0, %v847
    %v849 = vpop.f32.mrf.mxu0
    %v850 = vadd.f32 0.0, %v849
    %851 = vmatmul.bf16.gmra.mxu0 %v725
    %v852 = vpop.f32.mrf.mxu0
    %v853 = vadd.f32 0.0, %v852
    %v854 = vpop.f32.mrf.mxu0
    %v855 = vadd.f32 0.0, %v854
    %856 = vmatmul.bf16.gmra.mxu0 %v824
    %v857 = vpop.f32.mrf.mxu0
    %v858 = vadd.f32 0.0, %v857
    %v859 = vpop.f32.mrf.mxu0
    %v860 = vadd.f32 0.0, %v859
    %861 = vmatmul.bf16.gmra.mxu0 %v827
    %v862 = vpop.f32.mrf.mxu0
    %v863 = vadd.f32 0.0, %v862
    %v864 = vpop.f32.mrf.mxu0
    %v865 = vadd.f32 0.0, %v864
    %866 = vmatmul.bf16.gmra.mxu0 %v728
    %v867 = vpop.f32.mrf.mxu0
    %v868 = vadd.f32 0.0, %v867
    %v869 = vpop.f32.mrf.mxu0
    %v870 = vadd.f32 0.0, %v869
    %871 = vmatmul.bf16.gmra.mxu0 %v731
    %v872 = vpop.f32.mrf.mxu0
    %v873 = vadd.f32 0.0, %v872
    %v874 = vpop.f32.mrf.mxu0
    %v875 = vadd.f32 0.0, %v874
    %876 = vmatmul.bf16.gmra.mxu0 %v830
    %v877 = vpop.f32.mrf.mxu0
    %v878 = vadd.f32 0.0, %v877
    %v879 = vpop.f32.mrf.mxu0
    %v880 = vadd.f32 0.0, %v879
    %881 = vmatmul.bf16.gmra.mxu0 %v833
    %v882 = vpop.f32.mrf.mxu0
    %v883 = vadd.f32 0.0, %v882
    %v884 = vpop.f32.mrf.mxu0
    %v885 = vadd.f32 0.0, %v884
    %886 = vdwg.mxu0
    %v887 = vadd.f32 %v785, %v848
    %v888 = vadd.f32 %v786, %v850
    %v889 = vadd.f32 %v787, %v853
    %v890 = vadd.f32 %v788, %v855
    %v891 = vadd.f32 %v789, %v858
    %v892 = vadd.f32 %v790, %v860
    %v893 = vadd.f32 %v791, %v863
    %v894 = vadd.f32 %v792, %v865
    %v895 = vadd.f32 %v793, %v868
    %v896 = vadd.f32 %v794, %v870
    %v897 = vadd.f32 %v795, %v873
    %v898 = vadd.f32 %v796, %v875
    %v899 = vadd.f32 %v797, %v878
    %v900 = vadd.f32 %v798, %v880
    %v901 = vadd.f32 %v799, %v883
    %v902 = vadd.f32 %v800, %v885
    %v904 = vunpack.c.l.b16 %v265
    %v905 = vpack.c.b16 %v367, %v366
    %v906 = vpack.c.b16 %v904, %v368
    %v908 = vunpack.c.l.b16 %v266
    %v909 = vpack.c.b16 %v377, %v376
    %v910 = vpack.c.b16 %v908, %v378
    %s911 = scalar_lea.vmem %s1, 20
    %v912 = vld [vmem:[%s911] sm:$0xf]
    %v914 = vsel %vm402, %v905, 0
    %v917 = vsel %vm402, %v906, 0
    %v920 = vsel %vm402, %v909, 0
    %v923 = vsel %vm402, %v910, 0
    %v926 = vsel %vm72, %v912, 0
    %928 = vmatpush.bf16.msra.mxu0 0
    %929 = vmatpush.bf16.msra.mxu0 0
    %930 = vmatpush.bf16.msra.mxu0 0
    %931 = vmatpush.bf16.msra.mxu0 0
    %932 = vmatpush.bf16.msra.mxu0 0
    %933 = vmatpush.bf16.msra.mxu0 0
    %934 = vmatpush.bf16.msra.mxu0 0
    %935 = vmatpush.bf16.msra.mxu0 %v926
    %936 = vmatmul.bf16.gmra.mxu0 %v416
    %v937 = vpop.f32.mrf.mxu0
    %v938 = vadd.f32 0.0, %v937
    %v939 = vpop.f32.mrf.mxu0
    %v940 = vadd.f32 0.0, %v939
    %941 = vmatmul.bf16.gmra.mxu0 %v419
    %v942 = vpop.f32.mrf.mxu0
    %v943 = vadd.f32 0.0, %v942
    %v944 = vpop.f32.mrf.mxu0
    %v945 = vadd.f32 0.0, %v944
    %946 = vmatmul.bf16.gmra.mxu0 %v422
    %v947 = vpop.f32.mrf.mxu0
    %v948 = vadd.f32 0.0, %v947
    %v949 = vpop.f32.mrf.mxu0
    %v950 = vadd.f32 0.0, %v949
    %951 = vmatmul.bf16.gmra.mxu0 %v425
    %v952 = vpop.f32.mrf.mxu0
    %v953 = vadd.f32 0.0, %v952
    %v954 = vpop.f32.mrf.mxu0
    %v955 = vadd.f32 0.0, %v954
    %956 = vmatmul.bf16.gmra.mxu0 %v914
    %v957 = vpop.f32.mrf.mxu0
    %v958 = vadd.f32 0.0, %v957
    %v959 = vpop.f32.mrf.mxu0
    %v960 = vadd.f32 0.0, %v959
    %961 = vmatmul.bf16.gmra.mxu0 %v917
    %v962 = vpop.f32.mrf.mxu0
    %v963 = vadd.f32 0.0, %v962
    %v964 = vpop.f32.mrf.mxu0
    %v965 = vadd.f32 0.0, %v964
    %966 = vmatmul.bf16.gmra.mxu0 %v920
    %v967 = vpop.f32.mrf.mxu0
    %v968 = vadd.f32 0.0, %v967
    %v969 = vpop.f32.mrf.mxu0
    %v970 = vadd.f32 0.0, %v969
    %971 = vmatmul.bf16.gmra.mxu0 %v923
    %v972 = vpop.f32.mrf.mxu0
    %v973 = vadd.f32 0.0, %v972
    %v974 = vpop.f32.mrf.mxu0
    %v975 = vadd.f32 0.0, %v974
    %976 = vdwg.mxu0
    %v977 = vadd.f32 %v887, %v938
    %v978 = vadd.f32 %v888, %v940
    %v979 = vadd.f32 %v889, %v943
    %v980 = vadd.f32 %v890, %v945
    %v981 = vadd.f32 %v891, %v948
    %v982 = vadd.f32 %v892, %v950
    %v983 = vadd.f32 %v893, %v953
    %v984 = vadd.f32 %v894, %v955
    %v985 = vadd.f32 %v895, %v958
    %v986 = vadd.f32 %v896, %v960
    %v987 = vadd.f32 %v897, %v963
    %v988 = vadd.f32 %v898, %v965
    %v989 = vadd.f32 %v899, %v968
    %v990 = vadd.f32 %v900, %v970
    %v991 = vadd.f32 %v901, %v973
    %v992 = vadd.f32 %v902, %v975
    %v994 = vunpack.c.l.b16 %v273
    %v995 = vpack.c.b16 %v501, %v500
    %v996 = vpack.c.b16 %v994, %v502
    %s997 = scalar_lea.vmem %s1, 24
    %v998 = vld [vmem:[%s997] sm:$0xf]
    %v1000 = vsel %vm402, %v995, 0
    %v1003 = vsel %vm402, %v996, 0
    %v1006 = vsel %vm72, %v998, 0
    %1008 = vmatpush.bf16.msra.mxu0 0
    %1009 = vmatpush.bf16.msra.mxu0 0
    %1010 = vmatpush.bf16.msra.mxu0 0
    %1011 = vmatpush.bf16.msra.mxu0 0
    %1012 = vmatpush.bf16.msra.mxu0 0
    %1013 = vmatpush.bf16.msra.mxu0 0
    %1014 = vmatpush.bf16.msra.mxu0 0
    %1015 = vmatpush.bf16.msra.mxu0 %v1006
    %1016 = vmatmul.bf16.gmra.mxu0 %v422
    %v1017 = vpop.f32.mrf.mxu0
    %v1018 = vadd.f32 0.0, %v1017
    %v1019 = vpop.f32.mrf.mxu0
    %v1020 = vadd.f32 0.0, %v1019
    %1021 = vmatmul.bf16.gmra.mxu0 %v425
    %v1022 = vpop.f32.mrf.mxu0
    %v1023 = vadd.f32 0.0, %v1022
    %v1024 = vpop.f32.mrf.mxu0
    %v1025 = vadd.f32 0.0, %v1024
    %1026 = vmatmul.bf16.gmra.mxu0 %v524
    %v1027 = vpop.f32.mrf.mxu0
    %v1028 = vadd.f32 0.0, %v1027
    %v1029 = vpop.f32.mrf.mxu0
    %v1030 = vadd.f32 0.0, %v1029
    %1031 = vmatmul.bf16.gmra.mxu0 %v527
    %v1032 = vpop.f32.mrf.mxu0
    %v1033 = vadd.f32 0.0, %v1032
    %v1034 = vpop.f32.mrf.mxu0
    %v1035 = vadd.f32 0.0, %v1034
    %1036 = vmatmul.bf16.gmra.mxu0 %v920
    %v1037 = vpop.f32.mrf.mxu0
    %v1038 = vadd.f32 0.0, %v1037
    %v1039 = vpop.f32.mrf.mxu0
    %v1040 = vadd.f32 0.0, %v1039
    %1041 = vmatmul.bf16.gmra.mxu0 %v923
    %v1042 = vpop.f32.mrf.mxu0
    %v1043 = vadd.f32 0.0, %v1042
    %v1044 = vpop.f32.mrf.mxu0
    %v1045 = vadd.f32 0.0, %v1044
    %1046 = vmatmul.bf16.gmra.mxu0 %v1000
    %v1047 = vpop.f32.mrf.mxu0
    %v1048 = vadd.f32 0.0, %v1047
    %v1049 = vpop.f32.mrf.mxu0
    %v1050 = vadd.f32 0.0, %v1049
    %1051 = vmatmul.bf16.gmra.mxu0 %v1003
    %v1052 = vpop.f32.mrf.mxu0
    %v1053 = vadd.f32 0.0, %v1052
    %v1054 = vpop.f32.mrf.mxu0
    %v1055 = vadd.f32 0.0, %v1054
    %1056 = vdwg.mxu0
    %v1057 = vadd.f32 %v977, %v1018
    %v1058 = vadd.f32 %v978, %v1020
    %v1059 = vadd.f32 %v979, %v1023
    %v1060 = vadd.f32 %v980, %v1025
    %v1061 = vadd.f32 %v981, %v1028
    %v1062 = vadd.f32 %v982, %v1030
    %v1063 = vadd.f32 %v983, %v1033
    %v1064 = vadd.f32 %v984, %v1035
    %v1065 = vadd.f32 %v985, %v1038
    %v1066 = vadd.f32 %v986, %v1040
    %v1067 = vadd.f32 %v987, %v1043
    %v1068 = vadd.f32 %v988, %v1045
    %v1069 = vadd.f32 %v989, %v1048
    %v1070 = vadd.f32 %v990, %v1050
    %v1071 = vadd.f32 %v991, %v1053
    %v1072 = vadd.f32 %v992, %v1055
    %v1074 = vunpack.c.l.b16 %v280
    %v1075 = vpack.c.b16 %v603, %v602
    %v1076 = vpack.c.b16 %v1074, %v604
    %s1077 = scalar_lea.vmem %s1, 28
    %v1078 = vld [vmem:[%s1077] sm:$0xf]
    %v1080 = vsel %vm402, %v1075, 0
    %v1083 = vsel %vm402, %v1076, 0
    %v1086 = vsel %vm72, %v1078, 0
    %1088 = vmatpush.bf16.msra.mxu0 0
    %1089 = vmatpush.bf16.msra.mxu0 0
    %1090 = vmatpush.bf16.msra.mxu0 0
    %1091 = vmatpush.bf16.msra.mxu0 0
    %1092 = vmatpush.bf16.msra.mxu0 0
    %1093 = vmatpush.bf16.msra.mxu0 0
    %1094 = vmatpush.bf16.msra.mxu0 0
    %1095 = vmatpush.bf16.msra.mxu0 %v1086
    %1096 = vmatmul.bf16.gmra.mxu0 %v524
    %v1097 = vpop.f32.mrf.mxu0
    %v1098 = vadd.f32 0.0, %v1097
    %v1099 = vpop.f32.mrf.mxu0
    %v1100 = vadd.f32 0.0, %v1099
    %1101 = vmatmul.bf16.gmra.mxu0 %v527
    %v1102 = vpop.f32.mrf.mxu0
    %v1103 = vadd.f32 0.0, %v1102
    %v1104 = vpop.f32.mrf.mxu0
    %v1105 = vadd.f32 0.0, %v1104
    %1106 = vmatmul.bf16.gmra.mxu0 %v626
    %v1107 = vpop.f32.mrf.mxu0
    %v1108 = vadd.f32 0.0, %v1107
    %v1109 = vpop.f32.mrf.mxu0
    %v1110 = vadd.f32 0.0, %v1109
    %1111 = vmatmul.bf16.gmra.mxu0 %v629
    %v1112 = vpop.f32.mrf.mxu0
    %v1113 = vadd.f32 0.0, %v1112
    %v1114 = vpop.f32.mrf.mxu0
    %v1115 = vadd.f32 0.0, %v1114
    %1116 = vmatmul.bf16.gmra.mxu0 %v1000
    %v1117 = vpop.f32.mrf.mxu0
    %v1118 = vadd.f32 0.0, %v1117
    %v1119 = vpop.f32.mrf.mxu0
    %v1120 = vadd.f32 0.0, %v1119
    %1121 = vmatmul.bf16.gmra.mxu0 %v1003
    %v1122 = vpop.f32.mrf.mxu0
    %v1123 = vadd.f32 0.0, %v1122
    %v1124 = vpop.f32.mrf.mxu0
    %v1125 = vadd.f32 0.0, %v1124
    %1126 = vmatmul.bf16.gmra.mxu0 %v1080
    %v1127 = vpop.f32.mrf.mxu0
    %v1128 = vadd.f32 0.0, %v1127
    %v1129 = vpop.f32.mrf.mxu0
    %v1130 = vadd.f32 0.0, %v1129
    %1131 = vmatmul.bf16.gmra.mxu0 %v1083
    %v1132 = vpop.f32.mrf.mxu0
    %v1133 = vadd.f32 0.0, %v1132
    %v1134 = vpop.f32.mrf.mxu0
    %v1135 = vadd.f32 0.0, %v1134
    %1136 = vdwg.mxu0
    %v1137 = vadd.f32 %v1057, %v1098
    %v1138 = vadd.f32 %v1058, %v1100
    %v1139 = vadd.f32 %v1059, %v1103
    %v1140 = vadd.f32 %v1060, %v1105
    %v1141 = vadd.f32 %v1061, %v1108
    %v1142 = vadd.f32 %v1062, %v1110
    %v1143 = vadd.f32 %v1063, %v1113
    %v1144 = vadd.f32 %v1064, %v1115
    %v1145 = vadd.f32 %v1065, %v1118
    %v1146 = vadd.f32 %v1066, %v1120
    %v1147 = vadd.f32 %v1067, %v1123
    %v1148 = vadd.f32 %v1068, %v1125
    %v1149 = vadd.f32 %v1069, %v1128
    %v1150 = vadd.f32 %v1070, %v1130
    %v1151 = vadd.f32 %v1071, %v1133
    %v1152 = vadd.f32 %v1072, %v1135
    %v1154 = vunpack.c.l.b16 %v285
    %v1155 = vpack.c.b16 %v705, %v704
    %v1156 = vpack.c.b16 %v1154, %v706
    %s1157 = scalar_lea.vmem %s1, 32
    %v1158 = vld [vmem:[%s1157] sm:$0xf]
    %v1160 = vsel %vm402, %v1155, 0
    %v1163 = vsel %vm402, %v1156, 0
    %v1166 = vsel %vm72, %v1158, 0
    %1168 = vmatpush.bf16.msra.mxu0 0
    %1169 = vmatpush.bf16.msra.mxu0 0
    %1170 = vmatpush.bf16.msra.mxu0 0
    %1171 = vmatpush.bf16.msra.mxu0 0
    %1172 = vmatpush.bf16.msra.mxu0 0
    %1173 = vmatpush.bf16.msra.mxu0 0
    %1174 = vmatpush.bf16.msra.mxu0 0
    %1175 = vmatpush.bf16.msra.mxu0 %v1166
    %1176 = vmatmul.bf16.gmra.mxu0 %v626
    %v1177 = vpop.f32.mrf.mxu0
    %v1178 = vadd.f32 0.0, %v1177
    %v1179 = vpop.f32.mrf.mxu0
    %v1180 = vadd.f32 0.0, %v1179
    %1181 = vmatmul.bf16.gmra.mxu0 %v629
    %v1182 = vpop.f32.mrf.mxu0
    %v1183 = vadd.f32 0.0, %v1182
    %v1184 = vpop.f32.mrf.mxu0
    %v1185 = vadd.f32 0.0, %v1184
    %1186 = vmatmul.bf16.gmra.mxu0 %v728
    %v1187 = vpop.f32.mrf.mxu0
    %v1188 = vadd.f32 0.0, %v1187
    %v1189 = vpop.f32.mrf.mxu0
    %v1190 = vadd.f32 0.0, %v1189
    %1191 = vmatmul.bf16.gmra.mxu0 %v731
    %v1192 = vpop.f32.mrf.mxu0
    %v1193 = vadd.f32 0.0, %v1192
    %v1194 = vpop.f32.mrf.mxu0
    %v1195 = vadd.f32 0.0, %v1194
    %1196 = vmatmul.bf16.gmra.mxu0 %v1080
    %v1197 = vpop.f32.mrf.mxu0
    %v1198 = vadd.f32 0.0, %v1197
    %v1199 = vpop.f32.mrf.mxu0
    %v1200 = vadd.f32 0.0, %v1199
    %1201 = vmatmul.bf16.gmra.mxu0 %v1083
    %v1202 = vpop.f32.mrf.mxu0
    %v1203 = vadd.f32 0.0, %v1202
    %v1204 = vpop.f32.mrf.mxu0
    %v1205 = vadd.f32 0.0, %v1204
    %1206 = vmatmul.bf16.gmra.mxu0 %v1160
    %v1207 = vpop.f32.mrf.mxu0
    %v1208 = vadd.f32 0.0, %v1207
    %v1209 = vpop.f32.mrf.mxu0
    %v1210 = vadd.f32 0.0, %v1209
    %1211 = vmatmul.bf16.gmra.mxu0 %v1163
    %v1212 = vpop.f32.mrf.mxu0
    %v1213 = vadd.f32 0.0, %v1212
    %v1214 = vpop.f32.mrf.mxu0
    %v1215 = vadd.f32 0.0, %v1214
    %1216 = vdwg.mxu0
    %v1217 = vadd.f32 %v1137, %v1178
    %v1218 = vadd.f32 %v1138, %v1180
    %v1219 = vadd.f32 %v1139, %v1183
    %v1220 = vadd.f32 %v1140, %v1185
    %v1221 = vadd.f32 %v1141, %v1188
    %v1222 = vadd.f32 %v1142, %v1190
    %v1223 = vadd.f32 %v1143, %v1193
    %v1224 = vadd.f32 %v1144, %v1195
    %v1225 = vadd.f32 %v1145, %v1198
    %v1226 = vadd.f32 %v1146, %v1200
    %v1227 = vadd.f32 %v1147, %v1203
    %v1228 = vadd.f32 %v1148, %v1205
    %v1229 = vadd.f32 %v1149, %v1208
    %v1230 = vadd.f32 %v1150, %v1210
    %v1231 = vadd.f32 %v1151, %v1213
    %v1232 = vadd.f32 %v1152, %v1215
    %v1234 = vunpack.c.l.b16 %v290
    %v1235 = vpack.c.b16 %v807, %v806
    %v1236 = vpack.c.b16 %v1234, %v808
    %s1237 = scalar_lea.vmem %s1, 36
    %v1238 = vld [vmem:[%s1237] sm:$0xf]
    %v1240 = vsel %vm402, %v1235, 0
    %v1243 = vsel %vm402, %v1236, 0
    %v1246 = vsel %vm72, %v1238, 0
    %1248 = vmatpush.bf16.msra.mxu0 0
    %1249 = vmatpush.bf16.msra.mxu0 0
    %1250 = vmatpush.bf16.msra.mxu0 0
    %1251 = vmatpush.bf16.msra.mxu0 0
    %1252 = vmatpush.bf16.msra.mxu0 0
    %1253 = vmatpush.bf16.msra.mxu0 0
    %1254 = vmatpush.bf16.msra.mxu0 0
    %1255 = vmatpush.bf16.msra.mxu0 %v1246
    %1256 = vmatmul.bf16.gmra.mxu0 %v728
    %v1257 = vpop.f32.mrf.mxu0
    %v1258 = vadd.f32 0.0, %v1257
    %v1259 = vpop.f32.mrf.mxu0
    %v1260 = vadd.f32 0.0, %v1259
    %1261 = vmatmul.bf16.gmra.mxu0 %v731
    %v1262 = vpop.f32.mrf.mxu0
    %v1263 = vadd.f32 0.0, %v1262
    %v1264 = vpop.f32.mrf.mxu0
    %v1265 = vadd.f32 0.0, %v1264
    %1266 = vmatmul.bf16.gmra.mxu0 %v830
    %v1267 = vpop.f32.mrf.mxu0
    %v1268 = vadd.f32 0.0, %v1267
    %v1269 = vpop.f32.mrf.mxu0
    %v1270 = vadd.f32 0.0, %v1269
    %1271 = vmatmul.bf16.gmra.mxu0 %v833
    %v1272 = vpop.f32.mrf.mxu0
    %v1273 = vadd.f32 0.0, %v1272
    %v1274 = vpop.f32.mrf.mxu0
    %v1275 = vadd.f32 0.0, %v1274
    %1276 = vmatmul.bf16.gmra.mxu0 %v1160
    %v1277 = vpop.f32.mrf.mxu0
    %v1278 = vadd.f32 0.0, %v1277
    %v1279 = vpop.f32.mrf.mxu0
    %v1280 = vadd.f32 0.0, %v1279
    %1281 = vmatmul.bf16.gmra.mxu0 %v1163
    %v1282 = vpop.f32.mrf.mxu0
    %v1283 = vadd.f32 0.0, %v1282
    %v1284 = vpop.f32.mrf.mxu0
    %v1285 = vadd.f32 0.0, %v1284
    %1286 = vmatmul.bf16.gmra.mxu0 %v1240
    %v1287 = vpop.f32.mrf.mxu0
    %v1288 = vadd.f32 0.0, %v1287
    %v1289 = vpop.f32.mrf.mxu0
    %v1290 = vadd.f32 0.0, %v1289
    %1291 = vmatmul.bf16.gmra.mxu0 %v1243
    %v1292 = vpop.f32.mrf.mxu0
    %v1293 = vadd.f32 0.0, %v1292
    %v1294 = vpop.f32.mrf.mxu0
    %v1295 = vadd.f32 0.0, %v1294
    %1296 = vdwg.mxu0
    %v1297 = vadd.f32 %v1217, %v1258
    %v1298 = vadd.f32 %v1218, %v1260
    %v1299 = vadd.f32 %v1219, %v1263
    %v1300 = vadd.f32 %v1220, %v1265
    %v1301 = vadd.f32 %v1221, %v1268
    %v1302 = vadd.f32 %v1222, %v1270
    %v1303 = vadd.f32 %v1223, %v1273
    %v1304 = vadd.f32 %v1224, %v1275
    %v1305 = vadd.f32 %v1225, %v1278
    %v1306 = vadd.f32 %v1226, %v1280
    %v1307 = vadd.f32 %v1227, %v1283
    %v1308 = vadd.f32 %v1228, %v1285
    %v1309 = vadd.f32 %v1229, %v1288
    %v1310 = vadd.f32 %v1230, %v1290
    %v1311 = vadd.f32 %v1231, %v1293
    %v1312 = vadd.f32 %v1232, %v1295
    %v1314 = vunpack.c.l.b16 %v291
    %v1315 = vpack.c.b16 %v387, %v386
    %v1316 = vpack.c.b16 %v1314, %v388
    %v1318 = vunpack.c.l.b16 %v292
    %v1319 = vpack.c.b16 %v397, %v396
    %v1320 = vpack.c.b16 %v1318, %v398
    %s1321 = scalar_lea.vmem %s1, 40
    %v1322 = vld [vmem:[%s1321] sm:$0xf]
    %v1324 = vsel %vm402, %v1315, 0
    %v1327 = vsel %vm402, %v1316, 0
    %v1330 = vsel %vm402, %v1319, 0
    %v1333 = vsel %vm402, %v1320, 0
    %v1336 = vsel %vm72, %v1322, 0
    %1338 = vmatpush.bf16.msra.mxu0 0
    %1339 = vmatpush.bf16.msra.mxu0 0
    %1340 = vmatpush.bf16.msra.mxu0 0
    %1341 = vmatpush.bf16.msra.mxu0 0
    %1342 = vmatpush.bf16.msra.mxu0 0
    %1343 = vmatpush.bf16.msra.mxu0 0
    %1344 = vmatpush.bf16.msra.mxu0 0
    %1345 = vmatpush.bf16.msra.mxu0 %v1336
    %1346 = vmatmul.bf16.gmra.mxu0 %v914
    %v1347 = vpop.f32.mrf.mxu0
    %v1348 = vadd.f32 0.0, %v1347
    %v1349 = vpop.f32.mrf.mxu0
    %v1350 = vadd.f32 0.0, %v1349
    %1351 = vmatmul.bf16.gmra.mxu0 %v917
    %v1352 = vpop.f32.mrf.mxu0
    %v1353 = vadd.f32 0.0, %v1352
    %v1354 = vpop.f32.mrf.mxu0
    %v1355 = vadd.f32 0.0, %v1354
    %1356 = vmatmul.bf16.gmra.mxu0 %v920
    %v1357 = vpop.f32.mrf.mxu0
    %v1358 = vadd.f32 0.0, %v1357
    %v1359 = vpop.f32.mrf.mxu0
    %v1360 = vadd.f32 0.0, %v1359
    %1361 = vmatmul.bf16.gmra.mxu0 %v923
    %v1362 = vpop.f32.mrf.mxu0
    %v1363 = vadd.f32 0.0, %v1362
    %v1364 = vpop.f32.mrf.mxu0
    %v1365 = vadd.f32 0.0, %v1364
    %1366 = vmatmul.bf16.gmra.mxu0 %v1324
    %v1367 = vpop.f32.mrf.mxu0
    %v1368 = vadd.f32 0.0, %v1367
    %v1369 = vpop.f32.mrf.mxu0
    %v1370 = vadd.f32 0.0, %v1369
    %1371 = vmatmul.bf16.gmra.mxu0 %v1327
    %v1372 = vpop.f32.mrf.mxu0
    %v1373 = vadd.f32 0.0, %v1372
    %v1374 = vpop.f32.mrf.mxu0
    %v1375 = vadd.f32 0.0, %v1374
    %1376 = vmatmul.bf16.gmra.mxu0 %v1330
    %v1377 = vpop.f32.mrf.mxu0
    %v1378 = vadd.f32 0.0, %v1377
    %v1379 = vpop.f32.mrf.mxu0
    %v1380 = vadd.f32 0.0, %v1379
    %1381 = vmatmul.bf16.gmra.mxu0 %v1333
    %v1382 = vpop.f32.mrf.mxu0
    %v1383 = vadd.f32 0.0, %v1382
    %v1384 = vpop.f32.mrf.mxu0
    %v1385 = vadd.f32 0.0, %v1384
    %1386 = vdwg.mxu0
    %v1387 = vadd.f32 %v1297, %v1348
    %v1388 = vadd.f32 %v1298, %v1350
    %v1389 = vadd.f32 %v1299, %v1353
    %v1390 = vadd.f32 %v1300, %v1355
    %v1391 = vadd.f32 %v1301, %v1358
    %v1392 = vadd.f32 %v1302, %v1360
    %v1393 = vadd.f32 %v1303, %v1363
    %v1394 = vadd.f32 %v1304, %v1365
    %v1395 = vadd.f32 %v1305, %v1368
    %v1396 = vadd.f32 %v1306, %v1370
    %v1397 = vadd.f32 %v1307, %v1373
    %v1398 = vadd.f32 %v1308, %v1375
    %v1399 = vadd.f32 %v1309, %v1378
    %v1400 = vadd.f32 %v1310, %v1380
    %v1401 = vadd.f32 %v1311, %v1383
    %v1402 = vadd.f32 %v1312, %v1385
    %v1404 = vunpack.c.l.b16 %v299
    %v1405 = vpack.c.b16 %v511, %v510
    %v1406 = vpack.c.b16 %v1404, %v512
    %s1407 = scalar_lea.vmem %s1, 44
    %v1408 = vld [vmem:[%s1407] sm:$0xf]
    %v1410 = vsel %vm402, %v1405, 0
    %v1413 = vsel %vm402, %v1406, 0
    %v1416 = vsel %vm72, %v1408, 0
    %1418 = vmatpush.bf16.msra.mxu0 0
    %1419 = vmatpush.bf16.msra.mxu0 0
    %1420 = vmatpush.bf16.msra.mxu0 0
    %1421 = vmatpush.bf16.msra.mxu0 0
    %1422 = vmatpush.bf16.msra.mxu0 0
    %1423 = vmatpush.bf16.msra.mxu0 0
    %1424 = vmatpush.bf16.msra.mxu0 0
    %1425 = vmatpush.bf16.msra.mxu0 %v1416
    %1426 = vmatmul.bf16.gmra.mxu0 %v920
    %v1427 = vpop.f32.mrf.mxu0
    %v1428 = vadd.f32 0.0, %v1427
    %v1429 = vpop.f32.mrf.mxu0
    %v1430 = vadd.f32 0.0, %v1429
    %1431 = vmatmul.bf16.gmra.mxu0 %v923
    %v1432 = vpop.f32.mrf.mxu0
    %v1433 = vadd.f32 0.0, %v1432
    %v1434 = vpop.f32.mrf.mxu0
    %v1435 = vadd.f32 0.0, %v1434
    %1436 = vmatmul.bf16.gmra.mxu0 %v1000
    %v1437 = vpop.f32.mrf.mxu0
    %v1438 = vadd.f32 0.0, %v1437
    %v1439 = vpop.f32.mrf.mxu0
    %v1440 = vadd.f32 0.0, %v1439
    %1441 = vmatmul.bf16.gmra.mxu0 %v1003
    %v1442 = vpop.f32.mrf.mxu0
    %v1443 = vadd.f32 0.0, %v1442
    %v1444 = vpop.f32.mrf.mxu0
    %v1445 = vadd.f32 0.0, %v1444
    %1446 = vmatmul.bf16.gmra.mxu0 %v1330
    %v1447 = vpop.f32.mrf.mxu0
    %v1448 = vadd.f32 0.0, %v1447
    %v1449 = vpop.f32.mrf.mxu0
    %v1450 = vadd.f32 0.0, %v1449
    %1451 = vmatmul.bf16.gmra.mxu0 %v1333
    %v1452 = vpop.f32.mrf.mxu0
    %v1453 = vadd.f32 0.0, %v1452
    %v1454 = vpop.f32.mrf.mxu0
    %v1455 = vadd.f32 0.0, %v1454
    %1456 = vmatmul.bf16.gmra.mxu0 %v1410
    %v1457 = vpop.f32.mrf.mxu0
    %v1458 = vadd.f32 0.0, %v1457
    %v1459 = vpop.f32.mrf.mxu0
    %v1460 = vadd.f32 0.0, %v1459
    %1461 = vmatmul.bf16.gmra.mxu0 %v1413
    %v1462 = vpop.f32.mrf.mxu0
    %v1463 = vadd.f32 0.0, %v1462
    %v1464 = vpop.f32.mrf.mxu0
    %v1465 = vadd.f32 0.0, %v1464
    %1466 = vdwg.mxu0
    %v1467 = vadd.f32 %v1387, %v1428
    %v1468 = vadd.f32 %v1388, %v1430
    %v1469 = vadd.f32 %v1389, %v1433
    %v1470 = vadd.f32 %v1390, %v1435
    %v1471 = vadd.f32 %v1391, %v1438
    %v1472 = vadd.f32 %v1392, %v1440
    %v1473 = vadd.f32 %v1393, %v1443
    %v1474 = vadd.f32 %v1394, %v1445
    %v1475 = vadd.f32 %v1395, %v1448
    %v1476 = vadd.f32 %v1396, %v1450
    %v1477 = vadd.f32 %v1397, %v1453
    %v1478 = vadd.f32 %v1398, %v1455
    %v1479 = vadd.f32 %v1399, %v1458
    %v1480 = vadd.f32 %v1400, %v1460
    %v1481 = vadd.f32 %v1401, %v1463
    %v1482 = vadd.f32 %v1402, %v1465
    %v1484 = vunpack.c.l.b16 %v306
    %v1485 = vpack.c.b16 %v613, %v612
    %v1486 = vpack.c.b16 %v1484, %v614
    %s1487 = scalar_lea.vmem %s1, 48
    %v1488 = vld [vmem:[%s1487] sm:$0xf]
    %v1490 = vsel %vm402, %v1485, 0
    %v1493 = vsel %vm402, %v1486, 0
    %v1496 = vsel %vm72, %v1488, 0
    %1498 = vmatpush.bf16.msra.mxu0 0
    %1499 = vmatpush.bf16.msra.mxu0 0
    %1500 = vmatpush.bf16.msra.mxu0 0
    %1501 = vmatpush.bf16.msra.mxu0 0
    %1502 = vmatpush.bf16.msra.mxu0 0
    %1503 = vmatpush.bf16.msra.mxu0 0
    %1504 = vmatpush.bf16.msra.mxu0 0
    %1505 = vmatpush.bf16.msra.mxu0 %v1496
    %1506 = vmatmul.bf16.gmra.mxu0 %v1000
    %v1507 = vpop.f32.mrf.mxu0
    %v1508 = vadd.f32 0.0, %v1507
    %v1509 = vpop.f32.mrf.mxu0
    %v1510 = vadd.f32 0.0, %v1509
    %1511 = vmatmul.bf16.gmra.mxu0 %v1003
    %v1512 = vpop.f32.mrf.mxu0
    %v1513 = vadd.f32 0.0, %v1512
    %v1514 = vpop.f32.mrf.mxu0
    %v1515 = vadd.f32 0.0, %v1514
    %1516 = vmatmul.bf16.gmra.mxu0 %v1080
    %v1517 = vpop.f32.mrf.mxu0
    %v1518 = vadd.f32 0.0, %v1517
    %v1519 = vpop.f32.mrf.mxu0
    %v1520 = vadd.f32 0.0, %v1519
    %1521 = vmatmul.bf16.gmra.mxu0 %v1083
    %v1522 = vpop.f32.mrf.mxu0
    %v1523 = vadd.f32 0.0, %v1522
    %v1524 = vpop.f32.mrf.mxu0
    %v1525 = vadd.f32 0.0, %v1524
    %1526 = vmatmul.bf16.gmra.mxu0 %v1410
    %v1527 = vpop.f32.mrf.mxu0
    %v1528 = vadd.f32 0.0, %v1527
    %v1529 = vpop.f32.mrf.mxu0
    %v1530 = vadd.f32 0.0, %v1529
    %1531 = vmatmul.bf16.gmra.mxu0 %v1413
    %v1532 = vpop.f32.mrf.mxu0
    %v1533 = vadd.f32 0.0, %v1532
    %v1534 = vpop.f32.mrf.mxu0
    %v1535 = vadd.f32 0.0, %v1534
    %1536 = vmatmul.bf16.gmra.mxu0 %v1490
    %v1537 = vpop.f32.mrf.mxu0
    %v1538 = vadd.f32 0.0, %v1537
    %v1539 = vpop.f32.mrf.mxu0
    %v1540 = vadd.f32 0.0, %v1539
    %1541 = vmatmul.bf16.gmra.mxu0 %v1493
    %v1542 = vpop.f32.mrf.mxu0
    %v1543 = vadd.f32 0.0, %v1542
    %v1544 = vpop.f32.mrf.mxu0
    %v1545 = vadd.f32 0.0, %v1544
    %1546 = vdwg.mxu0
    %v1547 = vadd.f32 %v1467, %v1508
    %v1548 = vadd.f32 %v1468, %v1510
    %v1549 = vadd.f32 %v1469, %v1513
    %v1550 = vadd.f32 %v1470, %v1515
    %v1551 = vadd.f32 %v1471, %v1518
    %v1552 = vadd.f32 %v1472, %v1520
    %v1553 = vadd.f32 %v1473, %v1523
    %v1554 = vadd.f32 %v1474, %v1525
    %v1555 = vadd.f32 %v1475, %v1528
    %v1556 = vadd.f32 %v1476, %v1530
    %v1557 = vadd.f32 %v1477, %v1533
    %v1558 = vadd.f32 %v1478, %v1535
    %v1559 = vadd.f32 %v1479, %v1538
    %v1560 = vadd.f32 %v1480, %v1540
    %v1561 = vadd.f32 %v1481, %v1543
    %v1562 = vadd.f32 %v1482, %v1545
    %v1564 = vunpack.c.l.b16 %v311
    %v1565 = vpack.c.b16 %v715, %v714
    %v1566 = vpack.c.b16 %v1564, %v716
    %s1567 = scalar_lea.vmem %s1, 52
    %v1568 = vld [vmem:[%s1567] sm:$0xf]
    %v1570 = vsel %vm402, %v1565, 0
    %v1573 = vsel %vm402, %v1566, 0
    %v1576 = vsel %vm72, %v1568, 0
    %1578 = vmatpush.bf16.msra.mxu0 0
    %1579 = vmatpush.bf16.msra.mxu0 0
    %1580 = vmatpush.bf16.msra.mxu0 0
    %1581 = vmatpush.bf16.msra.mxu0 0
    %1582 = vmatpush.bf16.msra.mxu0 0
    %1583 = vmatpush.bf16.msra.mxu0 0
    %1584 = vmatpush.bf16.msra.mxu0 0
    %1585 = vmatpush.bf16.msra.mxu0 %v1576
    %1586 = vmatmul.bf16.gmra.mxu0 %v1080
    %v1587 = vpop.f32.mrf.mxu0
    %v1588 = vadd.f32 0.0, %v1587
    %v1589 = vpop.f32.mrf.mxu0
    %v1590 = vadd.f32 0.0, %v1589
    %1591 = vmatmul.bf16.gmra.mxu0 %v1083
    %v1592 = vpop.f32.mrf.mxu0
    %v1593 = vadd.f32 0.0, %v1592
    %v1594 = vpop.f32.mrf.mxu0
    %v1595 = vadd.f32 0.0, %v1594
    %1596 = vmatmul.bf16.gmra.mxu0 %v1160
    %v1597 = vpop.f32.mrf.mxu0
    %v1598 = vadd.f32 0.0, %v1597
    %v1599 = vpop.f32.mrf.mxu0
    %v1600 = vadd.f32 0.0, %v1599
    %1601 = vmatmul.bf16.gmra.mxu0 %v1163
    %v1602 = vpop.f32.mrf.mxu0
    %v1603 = vadd.f32 0.0, %v1602
    %v1604 = vpop.f32.mrf.mxu0
    %v1605 = vadd.f32 0.0, %v1604
    %1606 = vmatmul.bf16.gmra.mxu0 %v1490
    %v1607 = vpop.f32.mrf.mxu0
    %v1608 = vadd.f32 0.0, %v1607
    %v1609 = vpop.f32.mrf.mxu0
    %v1610 = vadd.f32 0.0, %v1609
    %1611 = vmatmul.bf16.gmra.mxu0 %v1493
    %v1612 = vpop.f32.mrf.mxu0
    %v1613 = vadd.f32 0.0, %v1612
    %v1614 = vpop.f32.mrf.mxu0
    %v1615 = vadd.f32 0.0, %v1614
    %1616 = vmatmul.bf16.gmra.mxu0 %v1570
    %v1617 = vpop.f32.mrf.mxu0
    %v1618 = vadd.f32 0.0, %v1617
    %v1619 = vpop.f32.mrf.mxu0
    %v1620 = vadd.f32 0.0, %v1619
    %1621 = vmatmul.bf16.gmra.mxu0 %v1573
    %v1622 = vpop.f32.mrf.mxu0
    %v1623 = vadd.f32 0.0, %v1622
    %v1624 = vpop.f32.mrf.mxu0
    %v1625 = vadd.f32 0.0, %v1624
    %1626 = vdwg.mxu0
    %v1627 = vadd.f32 %v1547, %v1588
    %v1628 = vadd.f32 %v1548, %v1590
    %v1629 = vadd.f32 %v1549, %v1593
    %v1630 = vadd.f32 %v1550, %v1595
    %v1631 = vadd.f32 %v1551, %v1598
    %v1632 = vadd.f32 %v1552, %v1600
    %v1633 = vadd.f32 %v1553, %v1603
    %v1634 = vadd.f32 %v1554, %v1605
    %v1635 = vadd.f32 %v1555, %v1608
    %v1636 = vadd.f32 %v1556, %v1610
    %v1637 = vadd.f32 %v1557, %v1613
    %v1638 = vadd.f32 %v1558, %v1615
    %v1639 = vadd.f32 %v1559, %v1618
    %v1640 = vadd.f32 %v1560, %v1620
    %v1641 = vadd.f32 %v1561, %v1623
    %v1642 = vadd.f32 %v1562, %v1625
    %v1644 = vunpack.c.l.b16 %v316
    %v1645 = vpack.c.b16 %v817, %v816
    %v1646 = vpack.c.b16 %v1644, %v818
    %s1647 = scalar_lea.vmem %s1, 56
    %v1648 = vld [vmem:[%s1647] sm:$0xf]
    %v1650 = vsel %vm402, %v1645, 0
    %v1653 = vsel %vm402, %v1646, 0
    %v1656 = vsel %vm72, %v1648, 0
    %1658 = vmatpush.bf16.msra.mxu0 0
    %1659 = vmatpush.bf16.msra.mxu0 0
    %1660 = vmatpush.bf16.msra.mxu0 0
    %1661 = vmatpush.bf16.msra.mxu0 0
    %1662 = vmatpush.bf16.msra.mxu0 0
    %1663 = vmatpush.bf16.msra.mxu0 0
    %1664 = vmatpush.bf16.msra.mxu0 0
    %1665 = vmatpush.bf16.msra.mxu0 %v1656
    %1666 = vmatmul.bf16.gmra.mxu0 %v1160
    %v1667 = vpop.f32.mrf.mxu0
    %v1668 = vadd.f32 0.0, %v1667
    %v1669 = vpop.f32.mrf.mxu0
    %v1670 = vadd.f32 0.0, %v1669
    %1671 = vmatmul.bf16.gmra.mxu0 %v1163
    %v1672 = vpop.f32.mrf.mxu0
    %v1673 = vadd.f32 0.0, %v1672
    %v1674 = vpop.f32.mrf.mxu0
    %v1675 = vadd.f32 0.0, %v1674
    %1676 = vmatmul.bf16.gmra.mxu0 %v1240
    %v1677 = vpop.f32.mrf.mxu0
    %v1678 = vadd.f32 0.0, %v1677
    %v1679 = vpop.f32.mrf.mxu0
    %v1680 = vadd.f32 0.0, %v1679
    %1681 = vmatmul.bf16.gmra.mxu0 %v1243
    %v1682 = vpop.f32.mrf.mxu0
    %v1683 = vadd.f32 0.0, %v1682
    %v1684 = vpop.f32.mrf.mxu0
    %v1685 = vadd.f32 0.0, %v1684
    %1686 = vmatmul.bf16.gmra.mxu0 %v1570
    %v1687 = vpop.f32.mrf.mxu0
    %v1688 = vadd.f32 0.0, %v1687
    %v1689 = vpop.f32.mrf.mxu0
    %v1690 = vadd.f32 0.0, %v1689
    %1691 = vmatmul.bf16.gmra.mxu0 %v1573
    %v1692 = vpop.f32.mrf.mxu0
    %v1693 = vadd.f32 0.0, %v1692
    %v1694 = vpop.f32.mrf.mxu0
    %v1695 = vadd.f32 0.0, %v1694
    %1696 = vmatmul.bf16.gmra.mxu0 %v1650
    %v1697 = vpop.f32.mrf.mxu0
    %v1698 = vadd.f32 0.0, %v1697
    %v1699 = vpop.f32.mrf.mxu0
    %v1700 = vadd.f32 0.0, %v1699
    %1701 = vmatmul.bf16.gmra.mxu0 %v1653
    %v1702 = vpop.f32.mrf.mxu0
    %v1703 = vadd.f32 0.0, %v1702
    %v1704 = vpop.f32.mrf.mxu0
    %v1705 = vadd.f32 0.0, %v1704
    %1706 = vdwg.mxu0
    %v1707 = vadd.f32 %v1627, %v1668
    %v1708 = vadd.f32 %v1628, %v1670
    %v1709 = vadd.f32 %v1629, %v1673
    %v1710 = vadd.f32 %v1630, %v1675
    %v1711 = vadd.f32 %v1631, %v1678
    %v1712 = vadd.f32 %v1632, %v1680
    %v1713 = vadd.f32 %v1633, %v1683
    %v1714 = vadd.f32 %v1634, %v1685
    %v1715 = vadd.f32 %v1635, %v1688
    %v1716 = vadd.f32 %v1636, %v1690
    %v1717 = vadd.f32 %v1637, %v1693
    %v1718 = vadd.f32 %v1638, %v1695
    %v1719 = vadd.f32 %v1639, %v1698
    %v1720 = vadd.f32 %v1640, %v1700
    %v1721 = vadd.f32 %v1641, %v1703
    %v1722 = vadd.f32 %v1642, %v1705
    %v1724 = vunpack.c.l.b16 %v321
    %v1725 = vpack.c.b16 %v1724, %v904
    %v1727 = vunpack.c.l.b16 %v326
    %v1728 = vpack.c.b16 %v1727, %v908
    %s1729 = scalar_lea.vmem %s1, 60
    %v1730 = vld [vmem:[%s1729] sm:$0xf]
    %v1732 = vsel %vm402, %v1725, 0
    %v1735 = vsel %vm402, %v1728, 0
    %v1738 = vsel %vm72, %v1730, 0
    %1740 = vmatpush.bf16.msra.mxu0 0
    %1741 = vmatpush.bf16.msra.mxu0 0
    %1742 = vmatpush.bf16.msra.mxu0 0
    %1743 = vmatpush.bf16.msra.mxu0 0
    %1744 = vmatpush.bf16.msra.mxu0 0
    %1745 = vmatpush.bf16.msra.mxu0 0
    %1746 = vmatpush.bf16.msra.mxu0 0
    %1747 = vmatpush.bf16.msra.mxu0 %v1738
    %1748 = vmatmul.bf16.gmra.mxu0 %v1324
    %v1749 = vpop.f32.mrf.mxu0
    %v1750 = vadd.f32 0.0, %v1749
    %v1751 = vpop.f32.mrf.mxu0
    %v1752 = vadd.f32 0.0, %v1751
    %1753 = vmatmul.bf16.gmra.mxu0 %v1327
    %v1754 = vpop.f32.mrf.mxu0
    %v1755 = vadd.f32 0.0, %v1754
    %v1756 = vpop.f32.mrf.mxu0
    %v1757 = vadd.f32 0.0, %v1756
    %1758 = vmatmul.bf16.gmra.mxu0 %v1330
    %v1759 = vpop.f32.mrf.mxu0
    %v1760 = vadd.f32 0.0, %v1759
    %v1761 = vpop.f32.mrf.mxu0
    %v1762 = vadd.f32 0.0, %v1761
    %1763 = vmatmul.bf16.gmra.mxu0 %v1333
    %v1764 = vpop.f32.mrf.mxu0
    %v1765 = vadd.f32 0.0, %v1764
    %v1766 = vpop.f32.mrf.mxu0
    %v1767 = vadd.f32 0.0, %v1766
    %1768 = vmatmul.bf16.gmra.mxu0 %v407
    %v1769 = vpop.f32.mrf.mxu0
    %v1770 = vadd.f32 0.0, %v1769
    %v1771 = vpop.f32.mrf.mxu0
    %v1772 = vadd.f32 0.0, %v1771
    %1773 = vmatmul.bf16.gmra.mxu0 %v1732
    %v1774 = vpop.f32.mrf.mxu0
    %v1775 = vadd.f32 0.0, %v1774
    %v1776 = vpop.f32.mrf.mxu0
    %v1777 = vadd.f32 0.0, %v1776
    %1778 = vmatmul.bf16.gmra.mxu0 %v413
    %v1779 = vpop.f32.mrf.mxu0
    %v1780 = vadd.f32 0.0, %v1779
    %v1781 = vpop.f32.mrf.mxu0
    %v1782 = vadd.f32 0.0, %v1781
    %1783 = vmatmul.bf16.gmra.mxu0 %v1735
    %v1784 = vpop.f32.mrf.mxu0
    %v1785 = vadd.f32 0.0, %v1784
    %v1786 = vpop.f32.mrf.mxu0
    %v1787 = vadd.f32 0.0, %v1786
    %1788 = vdwg.mxu0
    %v1789 = vadd.f32 %v1707, %v1750
    %v1790 = vadd.f32 %v1708, %v1752
    %v1791 = vadd.f32 %v1709, %v1755
    %v1792 = vadd.f32 %v1710, %v1757
    %v1793 = vadd.f32 %v1711, %v1760
    %v1794 = vadd.f32 %v1712, %v1762
    %v1795 = vadd.f32 %v1713, %v1765
    %v1796 = vadd.f32 %v1714, %v1767
    %v1797 = vadd.f32 %v1715, %v1770
    %v1798 = vadd.f32 %v1716, %v1772
    %v1799 = vadd.f32 %v1717, %v1775
    %v1800 = vadd.f32 %v1718, %v1777
    %v1801 = vadd.f32 %v1719, %v1780
    %v1802 = vadd.f32 %v1720, %v1782
    %v1803 = vadd.f32 %v1721, %v1785
    %v1804 = vadd.f32 %v1722, %v1787
    %v1806 = vunpack.c.l.b16 %v331
    %v1807 = vpack.c.b16 %v1806, %v994
    %s1808 = scalar_lea.vmem %s1, 64
    %v1809 = vld [vmem:[%s1808] sm:$0xf]
    %v1811 = vsel %vm402, %v1807, 0
    %v1814 = vsel %vm72, %v1809, 0
    %1816 = vmatpush.bf16.msra.mxu0 0
    %1817 = vmatpush.bf16.msra.mxu0 0
    %1818 = vmatpush.bf16.msra.mxu0 0
    %1819 = vmatpush.bf16.msra.mxu0 0
    %1820 = vmatpush.bf16.msra.mxu0 0
    %1821 = vmatpush.bf16.msra.mxu0 0
    %1822 = vmatpush.bf16.msra.mxu0 0
    %1823 = vmatpush.bf16.msra.mxu0 %v1814
    %1824 = vmatmul.bf16.gmra.mxu0 %v1330
    %v1825 = vpop.f32.mrf.mxu0
    %v1826 = vadd.f32 0.0, %v1825
    %v1827 = vpop.f32.mrf.mxu0
    %v1828 = vadd.f32 0.0, %v1827
    %1829 = vmatmul.bf16.gmra.mxu0 %v1333
    %v1830 = vpop.f32.mrf.mxu0
    %v1831 = vadd.f32 0.0, %v1830
    %v1832 = vpop.f32.mrf.mxu0
    %v1833 = vadd.f32 0.0, %v1832
    %1834 = vmatmul.bf16.gmra.mxu0 %v1410
    %v1835 = vpop.f32.mrf.mxu0
    %v1836 = vadd.f32 0.0, %v1835
    %v1837 = vpop.f32.mrf.mxu0
    %v1838 = vadd.f32 0.0, %v1837
    %1839 = vmatmul.bf16.gmra.mxu0 %v1413
    %v1840 = vpop.f32.mrf.mxu0
    %v1841 = vadd.f32 0.0, %v1840
    %v1842 = vpop.f32.mrf.mxu0
    %v1843 = vadd.f32 0.0, %v1842
    %1844 = vmatmul.bf16.gmra.mxu0 %v413
    %v1845 = vpop.f32.mrf.mxu0
    %v1846 = vadd.f32 0.0, %v1845
    %v1847 = vpop.f32.mrf.mxu0
    %v1848 = vadd.f32 0.0, %v1847
    %1849 = vmatmul.bf16.gmra.mxu0 %v1735
    %v1850 = vpop.f32.mrf.mxu0
    %v1851 = vadd.f32 0.0, %v1850
    %v1852 = vpop.f32.mrf.mxu0
    %v1853 = vadd.f32 0.0, %v1852
    %1854 = vmatmul.bf16.gmra.mxu0 %v521
    %v1855 = vpop.f32.mrf.mxu0
    %v1856 = vadd.f32 0.0, %v1855
    %v1857 = vpop.f32.mrf.mxu0
    %v1858 = vadd.f32 0.0, %v1857
    %1859 = vmatmul.bf16.gmra.mxu0 %v1811
    %v1860 = vpop.f32.mrf.mxu0
    %v1861 = vadd.f32 0.0, %v1860
    %v1862 = vpop.f32.mrf.mxu0
    %v1863 = vadd.f32 0.0, %v1862
    %1864 = vdwg.mxu0
    %v1865 = vadd.f32 %v1789, %v1826
    %v1866 = vadd.f32 %v1790, %v1828
    %v1867 = vadd.f32 %v1791, %v1831
    %v1868 = vadd.f32 %v1792, %v1833
    %v1869 = vadd.f32 %v1793, %v1836
    %v1870 = vadd.f32 %v1794, %v1838
    %v1871 = vadd.f32 %v1795, %v1841
    %v1872 = vadd.f32 %v1796, %v1843
    %v1873 = vadd.f32 %v1797, %v1846
    %v1874 = vadd.f32 %v1798, %v1848
    %v1875 = vadd.f32 %v1799, %v1851
    %v1876 = vadd.f32 %v1800, %v1853
    %v1877 = vadd.f32 %v1801, %v1856
    %v1878 = vadd.f32 %v1802, %v1858
    %v1879 = vadd.f32 %v1803, %v1861
    %v1880 = vadd.f32 %v1804, %v1863
    %v1882 = vunpack.c.l.b16 %v336
    %v1883 = vpack.c.b16 %v1882, %v1074
    %s1884 = scalar_lea.vmem %s1, 68
    %v1885 = vld [vmem:[%s1884] sm:$0xf]
    %v1887 = vsel %vm402, %v1883, 0
    %v1890 = vsel %vm72, %v1885, 0
    %1892 = vmatpush.bf16.msra.mxu0 0
    %1893 = vmatpush.bf16.msra.mxu0 0
    %1894 = vmatpush.bf16.msra.mxu0 0
    %1895 = vmatpush.bf16.msra.mxu0 0
    %1896 = vmatpush.bf16.msra.mxu0 0
    %1897 = vmatpush.bf16.msra.mxu0 0
    %1898 = vmatpush.bf16.msra.mxu0 0
    %1899 = vmatpush.bf16.msra.mxu0 %v1890
    %1900 = vmatmul.bf16.gmra.mxu0 %v1410
    %v1901 = vpop.f32.mrf.mxu0
    %v1902 = vadd.f32 0.0, %v1901
    %v1903 = vpop.f32.mrf.mxu0
    %v1904 = vadd.f32 0.0, %v1903
    %1905 = vmatmul.bf16.gmra.mxu0 %v1413
    %v1906 = vpop.f32.mrf.mxu0
    %v1907 = vadd.f32 0.0, %v1906
    %v1908 = vpop.f32.mrf.mxu0
    %v1909 = vadd.f32 0.0, %v1908
    %1910 = vmatmul.bf16.gmra.mxu0 %v1490
    %v1911 = vpop.f32.mrf.mxu0
    %v1912 = vadd.f32 0.0, %v1911
    %v1913 = vpop.f32.mrf.mxu0
    %v1914 = vadd.f32 0.0, %v1913
    %1915 = vmatmul.bf16.gmra.mxu0 %v1493
    %v1916 = vpop.f32.mrf.mxu0
    %v1917 = vadd.f32 0.0, %v1916
    %v1918 = vpop.f32.mrf.mxu0
    %v1919 = vadd.f32 0.0, %v1918
    %1920 = vmatmul.bf16.gmra.mxu0 %v521
    %v1921 = vpop.f32.mrf.mxu0
    %v1922 = vadd.f32 0.0, %v1921
    %v1923 = vpop.f32.mrf.mxu0
    %v1924 = vadd.f32 0.0, %v1923
    %1925 = vmatmul.bf16.gmra.mxu0 %v1811
    %v1926 = vpop.f32.mrf.mxu0
    %v1927 = vadd.f32 0.0, %v1926
    %v1928 = vpop.f32.mrf.mxu0
    %v1929 = vadd.f32 0.0, %v1928
    %1930 = vmatmul.bf16.gmra.mxu0 %v623
    %v1931 = vpop.f32.mrf.mxu0
    %v1932 = vadd.f32 0.0, %v1931
    %v1933 = vpop.f32.mrf.mxu0
    %v1934 = vadd.f32 0.0, %v1933
    %1935 = vmatmul.bf16.gmra.mxu0 %v1887
    %v1936 = vpop.f32.mrf.mxu0
    %v1937 = vadd.f32 0.0, %v1936
    %v1938 = vpop.f32.mrf.mxu0
    %v1939 = vadd.f32 0.0, %v1938
    %1940 = vdwg.mxu0
    %v1941 = vadd.f32 %v1865, %v1902
    %v1942 = vadd.f32 %v1866, %v1904
    %v1943 = vadd.f32 %v1867, %v1907
    %v1944 = vadd.f32 %v1868, %v1909
    %v1945 = vadd.f32 %v1869, %v1912
    %v1946 = vadd.f32 %v1870, %v1914
    %v1947 = vadd.f32 %v1871, %v1917
    %v1948 = vadd.f32 %v1872, %v1919
    %v1949 = vadd.f32 %v1873, %v1922
    %v1950 = vadd.f32 %v1874, %v1924
    %v1951 = vadd.f32 %v1875, %v1927
    %v1952 = vadd.f32 %v1876, %v1929
    %v1953 = vadd.f32 %v1877, %v1932
    %v1954 = vadd.f32 %v1878, %v1934
    %v1955 = vadd.f32 %v1879, %v1937
    %v1956 = vadd.f32 %v1880, %v1939
    %v1958 = vunpack.c.l.b16 %v337
    %v1959 = vpack.c.b16 %v1958, %v1154
    %s1960 = scalar_lea.vmem %s1, 72
    %v1961 = vld [vmem:[%s1960] sm:$0xf]
    %v1963 = vsel %vm402, %v1959, 0
    %v1966 = vsel %vm72, %v1961, 0
    %1968 = vmatpush.bf16.msra.mxu0 0
    %1969 = vmatpush.bf16.msra.mxu0 0
    %1970 = vmatpush.bf16.msra.mxu0 0
    %1971 = vmatpush.bf16.msra.mxu0 0
    %1972 = vmatpush.bf16.msra.mxu0 0
    %1973 = vmatpush.bf16.msra.mxu0 0
    %1974 = vmatpush.bf16.msra.mxu0 0
    %1975 = vmatpush.bf16.msra.mxu0 %v1966
    %1976 = vmatmul.bf16.gmra.mxu0 %v1490
    %v1977 = vpop.f32.mrf.mxu0
    %v1978 = vadd.f32 0.0, %v1977
    %v1979 = vpop.f32.mrf.mxu0
    %v1980 = vadd.f32 0.0, %v1979
    %1981 = vmatmul.bf16.gmra.mxu0 %v1493
    %v1982 = vpop.f32.mrf.mxu0
    %v1983 = vadd.f32 0.0, %v1982
    %v1984 = vpop.f32.mrf.mxu0
    %v1985 = vadd.f32 0.0, %v1984
    %1986 = vmatmul.bf16.gmra.mxu0 %v1570
    %v1987 = vpop.f32.mrf.mxu0
    %v1988 = vadd.f32 0.0, %v1987
    %v1989 = vpop.f32.mrf.mxu0
    %v1990 = vadd.f32 0.0, %v1989
    %1991 = vmatmul.bf16.gmra.mxu0 %v1573
    %v1992 = vpop.f32.mrf.mxu0
    %v1993 = vadd.f32 0.0, %v1992
    %v1994 = vpop.f32.mrf.mxu0
    %v1995 = vadd.f32 0.0, %v1994
    %1996 = vmatmul.bf16.gmra.mxu0 %v623
    %v1997 = vpop.f32.mrf.mxu0
    %v1998 = vadd.f32 0.0, %v1997
    %v1999 = vpop.f32.mrf.mxu0
    %v2000 = vadd.f32 0.0, %v1999
    %2001 = vmatmul.bf16.gmra.mxu0 %v1887
    %v2002 = vpop.f32.mrf.mxu0
    %v2003 = vadd.f32 0.0, %v2002
    %v2004 = vpop.f32.mrf.mxu0
    %v2005 = vadd.f32 0.0, %v2004
    %2006 = vmatmul.bf16.gmra.mxu0 %v725
    %v2007 = vpop.f32.mrf.mxu0
    %v2008 = vadd.f32 0.0, %v2007
    %v2009 = vpop.f32.mrf.mxu0
    %v2010 = vadd.f32 0.0, %v2009
    %2011 = vmatmul.bf16.gmra.mxu0 %v1963
    %v2012 = vpop.f32.mrf.mxu0
    %v2013 = vadd.f32 0.0, %v2012
    %v2014 = vpop.f32.mrf.mxu0
    %v2015 = vadd.f32 0.0, %v2014
    %2016 = vdwg.mxu0
    %v2017 = vadd.f32 %v1941, %v1978
    %v2018 = vadd.f32 %v1942, %v1980
    %v2019 = vadd.f32 %v1943, %v1983
    %v2020 = vadd.f32 %v1944, %v1985
    %v2021 = vadd.f32 %v1945, %v1988
    %v2022 = vadd.f32 %v1946, %v1990
    %v2023 = vadd.f32 %v1947, %v1993
    %v2024 = vadd.f32 %v1948, %v1995
    %v2025 = vadd.f32 %v1949, %v1998
    %v2026 = vadd.f32 %v1950, %v2000
    %v2027 = vadd.f32 %v1951, %v2003
    %v2028 = vadd.f32 %v1952, %v2005
    %v2029 = vadd.f32 %v1953, %v2008
    %v2030 = vadd.f32 %v1954, %v2010
    %v2031 = vadd.f32 %v1955, %v2013
    %v2032 = vadd.f32 %v1956, %v2015
    %v2034 = vunpack.c.l.b16 %v338
    %v2035 = vpack.c.b16 %v2034, %v1234
    %s2036 = scalar_lea.vmem %s1, 76
    %v2037 = vld [vmem:[%s2036] sm:$0xf]
    %v2039 = vsel %vm402, %v2035, 0
    %v2042 = vsel %vm72, %v2037, 0
    %2044 = vmatpush.bf16.msra.mxu0 0
    %2045 = vmatpush.bf16.msra.mxu0 0
    %2046 = vmatpush.bf16.msra.mxu0 0
    %2047 = vmatpush.bf16.msra.mxu0 0
    %2048 = vmatpush.bf16.msra.mxu0 0
    %2049 = vmatpush.bf16.msra.mxu0 0
    %2050 = vmatpush.bf16.msra.mxu0 0
    %2051 = vmatpush.bf16.msra.mxu0 %v2042
    %2052 = vmatmul.bf16.gmra.mxu0 %v1570
    %v2053 = vpop.f32.mrf.mxu0
    %v2054 = vadd.f32 0.0, %v2053
    %v2055 = vpop.f32.mrf.mxu0
    %v2056 = vadd.f32 0.0, %v2055
    %2057 = vmatmul.bf16.gmra.mxu0 %v1573
    %v2058 = vpop.f32.mrf.mxu0
    %v2059 = vadd.f32 0.0, %v2058
    %v2060 = vpop.f32.mrf.mxu0
    %v2061 = vadd.f32 0.0, %v2060
    %2062 = vmatmul.bf16.gmra.mxu0 %v1650
    %v2063 = vpop.f32.mrf.mxu0
    %v2064 = vadd.f32 0.0, %v2063
    %v2065 = vpop.f32.mrf.mxu0
    %v2066 = vadd.f32 0.0, %v2065
    %2067 = vmatmul.bf16.gmra.mxu0 %v1653
    %v2068 = vpop.f32.mrf.mxu0
    %v2069 = vadd.f32 0.0, %v2068
    %v2070 = vpop.f32.mrf.mxu0
    %v2071 = vadd.f32 0.0, %v2070
    %2072 = vmatmul.bf16.gmra.mxu0 %v725
    %v2073 = vpop.f32.mrf.mxu0
    %v2074 = vadd.f32 0.0, %v2073
    %v2075 = vpop.f32.mrf.mxu0
    %v2076 = vadd.f32 0.0, %v2075
    %2077 = vmatmul.bf16.gmra.mxu0 %v1963
    %v2078 = vpop.f32.mrf.mxu0
    %v2079 = vadd.f32 0.0, %v2078
    %v2080 = vpop.f32.mrf.mxu0
    %v2081 = vadd.f32 0.0, %v2080
    %2082 = vmatmul.bf16.gmra.mxu0 %v827
    %v2083 = vpop.f32.mrf.mxu0
    %v2084 = vadd.f32 0.0, %v2083
    %v2085 = vpop.f32.mrf.mxu0
    %v2086 = vadd.f32 0.0, %v2085
    %2087 = vmatmul.bf16.gmra.mxu0 %v2039
    %v2088 = vpop.f32.mrf.mxu0
    %v2089 = vadd.f32 0.0, %v2088
    %v2090 = vpop.f32.mrf.mxu0
    %v2091 = vadd.f32 0.0, %v2090
    %2092 = vdwg.mxu0
    %v2093 = vadd.f32 %v2017, %v2054
    %v2094 = vadd.f32 %v2018, %v2056
    %v2095 = vadd.f32 %v2019, %v2059
    %v2096 = vadd.f32 %v2020, %v2061
    %v2097 = vadd.f32 %v2021, %v2064
    %v2098 = vadd.f32 %v2022, %v2066
    %v2099 = vadd.f32 %v2023, %v2069
    %v2100 = vadd.f32 %v2024, %v2071
    %v2101 = vadd.f32 %v2025, %v2074
    %v2102 = vadd.f32 %v2026, %v2076
    %v2103 = vadd.f32 %v2027, %v2079
    %v2104 = vadd.f32 %v2028, %v2081
    %v2105 = vadd.f32 %v2029, %v2084
    %v2106 = vadd.f32 %v2030, %v2086
    %v2107 = vadd.f32 %v2031, %v2089
    %v2108 = vadd.f32 %v2032, %v2091
    %v2110 = vunpack.c.l.b16 %v343
    %v2111 = vpack.c.b16 %v2110, %v1314
    %v2113 = vunpack.c.l.b16 %v348
    %v2114 = vpack.c.b16 %v2113, %v1318
    %s2115 = scalar_lea.vmem %s1, 80
    %v2116 = vld [vmem:[%s2115] sm:$0xf]
    %v2118 = vsel %vm402, %v2111, 0
    %v2121 = vsel %vm402, %v2114, 0
    %v2124 = vsel %vm72, %v2116, 0
    %2126 = vmatpush.bf16.msra.mxu0 0
    %2127 = vmatpush.bf16.msra.mxu0 0
    %2128 = vmatpush.bf16.msra.mxu0 0
    %2129 = vmatpush.bf16.msra.mxu0 0
    %2130 = vmatpush.bf16.msra.mxu0 0
    %2131 = vmatpush.bf16.msra.mxu0 0
    %2132 = vmatpush.bf16.msra.mxu0 0
    %2133 = vmatpush.bf16.msra.mxu0 %v2124
    %2134 = vmatmul.bf16.gmra.mxu0 %v407
    %v2135 = vpop.f32.mrf.mxu0
    %v2136 = vadd.f32 0.0, %v2135
    %v2137 = vpop.f32.mrf.mxu0
    %v2138 = vadd.f32 0.0, %v2137
    %2139 = vmatmul.bf16.gmra.mxu0 %v1732
    %v2140 = vpop.f32.mrf.mxu0
    %v2141 = vadd.f32 0.0, %v2140
    %v2142 = vpop.f32.mrf.mxu0
    %v2143 = vadd.f32 0.0, %v2142
    %2144 = vmatmul.bf16.gmra.mxu0 %v413
    %v2145 = vpop.f32.mrf.mxu0
    %v2146 = vadd.f32 0.0, %v2145
    %v2147 = vpop.f32.mrf.mxu0
    %v2148 = vadd.f32 0.0, %v2147
    %2149 = vmatmul.bf16.gmra.mxu0 %v1735
    %v2150 = vpop.f32.mrf.mxu0
    %v2151 = vadd.f32 0.0, %v2150
    %v2152 = vpop.f32.mrf.mxu0
    %v2153 = vadd.f32 0.0, %v2152
    %2154 = vmatmul.bf16.gmra.mxu0 %v419
    %v2155 = vpop.f32.mrf.mxu0
    %v2156 = vadd.f32 0.0, %v2155
    %v2157 = vpop.f32.mrf.mxu0
    %v2158 = vadd.f32 0.0, %v2157
    %2159 = vmatmul.bf16.gmra.mxu0 %v2118
    %v2160 = vpop.f32.mrf.mxu0
    %v2161 = vadd.f32 0.0, %v2160
    %v2162 = vpop.f32.mrf.mxu0
    %v2163 = vadd.f32 0.0, %v2162
    %2164 = vmatmul.bf16.gmra.mxu0 %v425
    %v2165 = vpop.f32.mrf.mxu0
    %v2166 = vadd.f32 0.0, %v2165
    %v2167 = vpop.f32.mrf.mxu0
    %v2168 = vadd.f32 0.0, %v2167
    %2169 = vmatmul.bf16.gmra.mxu0 %v2121
    %v2170 = vpop.f32.mrf.mxu0
    %v2171 = vadd.f32 0.0, %v2170
    %v2172 = vpop.f32.mrf.mxu0
    %v2173 = vadd.f32 0.0, %v2172
    %2174 = vdwg.mxu0
    %v2175 = vadd.f32 %v2093, %v2136
    %v2176 = vadd.f32 %v2094, %v2138
    %v2177 = vadd.f32 %v2095, %v2141
    %v2178 = vadd.f32 %v2096, %v2143
    %v2179 = vadd.f32 %v2097, %v2146
    %v2180 = vadd.f32 %v2098, %v2148
    %v2181 = vadd.f32 %v2099, %v2151
    %v2182 = vadd.f32 %v2100, %v2153
    %v2183 = vadd.f32 %v2101, %v2156
    %v2184 = vadd.f32 %v2102, %v2158
    %v2185 = vadd.f32 %v2103, %v2161
    %v2186 = vadd.f32 %v2104, %v2163
    %v2187 = vadd.f32 %v2105, %v2166
    %v2188 = vadd.f32 %v2106, %v2168
    %v2189 = vadd.f32 %v2107, %v2171
    %v2190 = vadd.f32 %v2108, %v2173
    %v2192 = vunpack.c.l.b16 %v353
    %v2193 = vpack.c.b16 %v2192, %v1404
    %s2194 = scalar_lea.vmem %s1, 84
    %v2195 = vld [vmem:[%s2194] sm:$0xf]
    %v2197 = vsel %vm402, %v2193, 0
    %v2200 = vsel %vm72, %v2195, 0
    %2202 = vmatpush.bf16.msra.mxu0 0
    %2203 = vmatpush.bf16.msra.mxu0 0
    %2204 = vmatpush.bf16.msra.mxu0 0
    %2205 = vmatpush.bf16.msra.mxu0 0
    %2206 = vmatpush.bf16.msra.mxu0 0
    %2207 = vmatpush.bf16.msra.mxu0 0
    %2208 = vmatpush.bf16.msra.mxu0 0
    %2209 = vmatpush.bf16.msra.mxu0 %v2200
    %2210 = vmatmul.bf16.gmra.mxu0 %v413
    %v2211 = vpop.f32.mrf.mxu0
    %v2212 = vadd.f32 0.0, %v2211
    %v2213 = vpop.f32.mrf.mxu0
    %v2214 = vadd.f32 0.0, %v2213
    %2215 = vmatmul.bf16.gmra.mxu0 %v1735
    %v2216 = vpop.f32.mrf.mxu0
    %v2217 = vadd.f32 0.0, %v2216
    %v2218 = vpop.f32.mrf.mxu0
    %v2219 = vadd.f32 0.0, %v2218
    %2220 = vmatmul.bf16.gmra.mxu0 %v521
    %v2221 = vpop.f32.mrf.mxu0
    %v2222 = vadd.f32 0.0, %v2221
    %v2223 = vpop.f32.mrf.mxu0
    %v2224 = vadd.f32 0.0, %v2223
    %2225 = vmatmul.bf16.gmra.mxu0 %v1811
    %v2226 = vpop.f32.mrf.mxu0
    %v2227 = vadd.f32 0.0, %v2226
    %v2228 = vpop.f32.mrf.mxu0
    %v2229 = vadd.f32 0.0, %v2228
    %2230 = vmatmul.bf16.gmra.mxu0 %v425
    %v2231 = vpop.f32.mrf.mxu0
    %v2232 = vadd.f32 0.0, %v2231
    %v2233 = vpop.f32.mrf.mxu0
    %v2234 = vadd.f32 0.0, %v2233
    %2235 = vmatmul.bf16.gmra.mxu0 %v2121
    %v2236 = vpop.f32.mrf.mxu0
    %v2237 = vadd.f32 0.0, %v2236
    %v2238 = vpop.f32.mrf.mxu0
    %v2239 = vadd.f32 0.0, %v2238
    %2240 = vmatmul.bf16.gmra.mxu0 %v527
    %v2241 = vpop.f32.mrf.mxu0
    %v2242 = vadd.f32 0.0, %v2241
    %v2243 = vpop.f32.mrf.mxu0
    %v2244 = vadd.f32 0.0, %v2243
    %2245 = vmatmul.bf16.gmra.mxu0 %v2197
    %v2246 = vpop.f32.mrf.mxu0
    %v2247 = vadd.f32 0.0, %v2246
    %v2248 = vpop.f32.mrf.mxu0
    %v2249 = vadd.f32 0.0, %v2248
    %2250 = vdwg.mxu0
    %v2251 = vadd.f32 %v2175, %v2212
    %v2252 = vadd.f32 %v2176, %v2214
    %v2253 = vadd.f32 %v2177, %v2217
    %v2254 = vadd.f32 %v2178, %v2219
    %v2255 = vadd.f32 %v2179, %v2222
    %v2256 = vadd.f32 %v2180, %v2224
    %v2257 = vadd.f32 %v2181, %v2227
    %v2258 = vadd.f32 %v2182, %v2229
    %v2259 = vadd.f32 %v2183, %v2232
    %v2260 = vadd.f32 %v2184, %v2234
    %v2261 = vadd.f32 %v2185, %v2237
    %v2262 = vadd.f32 %v2186, %v2239
    %v2263 = vadd.f32 %v2187, %v2242
    %v2264 = vadd.f32 %v2188, %v2244
    %v2265 = vadd.f32 %v2189, %v2247
    %v2266 = vadd.f32 %v2190, %v2249
    %v2268 = vunpack.c.l.b16 %v358
    %v2269 = vpack.c.b16 %v2268, %v1484
    %s2270 = scalar_lea.vmem %s1, 88
    %v2271 = vld [vmem:[%s2270] sm:$0xf]
    %v2273 = vsel %vm402, %v2269, 0
    %v2276 = vsel %vm72, %v2271, 0
    %2278 = vmatpush.bf16.msra.mxu0 0
    %2279 = vmatpush.bf16.msra.mxu0 0
    %2280 = vmatpush.bf16.msra.mxu0 0
    %2281 = vmatpush.bf16.msra.mxu0 0
    %2282 = vmatpush.bf16.msra.mxu0 0
    %2283 = vmatpush.bf16.msra.mxu0 0
    %2284 = vmatpush.bf16.msra.mxu0 0
    %2285 = vmatpush.bf16.msra.mxu0 %v2276
    %2286 = vmatmul.bf16.gmra.mxu0 %v521
    %v2287 = vpop.f32.mrf.mxu0
    %v2288 = vadd.f32 0.0, %v2287
    %v2289 = vpop.f32.mrf.mxu0
    %v2290 = vadd.f32 0.0, %v2289
    %2291 = vmatmul.bf16.gmra.mxu0 %v1811
    %v2292 = vpop.f32.mrf.mxu0
    %v2293 = vadd.f32 0.0, %v2292
    %v2294 = vpop.f32.mrf.mxu0
    %v2295 = vadd.f32 0.0, %v2294
    %2296 = vmatmul.bf16.gmra.mxu0 %v623
    %v2297 = vpop.f32.mrf.mxu0
    %v2298 = vadd.f32 0.0, %v2297
    %v2299 = vpop.f32.mrf.mxu0
    %v2300 = vadd.f32 0.0, %v2299
    %2301 = vmatmul.bf16.gmra.mxu0 %v1887
    %v2302 = vpop.f32.mrf.mxu0
    %v2303 = vadd.f32 0.0, %v2302
    %v2304 = vpop.f32.mrf.mxu0
    %v2305 = vadd.f32 0.0, %v2304
    %2306 = vmatmul.bf16.gmra.mxu0 %v527
    %v2307 = vpop.f32.mrf.mxu0
    %v2308 = vadd.f32 0.0, %v2307
    %v2309 = vpop.f32.mrf.mxu0
    %v2310 = vadd.f32 0.0, %v2309
    %2311 = vmatmul.bf16.gmra.mxu0 %v2197
    %v2312 = vpop.f32.mrf.mxu0
    %v2313 = vadd.f32 0.0, %v2312
    %v2314 = vpop.f32.mrf.mxu0
    %v2315 = vadd.f32 0.0, %v2314
    %2316 = vmatmul.bf16.gmra.mxu0 %v629
    %v2317 = vpop.f32.mrf.mxu0
    %v2318 = vadd.f32 0.0, %v2317
    %v2319 = vpop.f32.mrf.mxu0
    %v2320 = vadd.f32 0.0, %v2319
    %2321 = vmatmul.bf16.gmra.mxu0 %v2273
    %v2322 = vpop.f32.mrf.mxu0
    %v2323 = vadd.f32 0.0, %v2322
    %v2324 = vpop.f32.mrf.mxu0
    %v2325 = vadd.f32 0.0, %v2324
    %2326 = vdwg.mxu0
    %v2327 = vadd.f32 %v2251, %v2288
    %v2328 = vadd.f32 %v2252, %v2290
    %v2329 = vadd.f32 %v2253, %v2293
    %v2330 = vadd.f32 %v2254, %v2295
    %v2331 = vadd.f32 %v2255, %v2298
    %v2332 = vadd.f32 %v2256, %v2300
    %v2333 = vadd.f32 %v2257, %v2303
    %v2334 = vadd.f32 %v2258, %v2305
    %v2335 = vadd.f32 %v2259, %v2308
    %v2336 = vadd.f32 %v2260, %v2310
    %v2337 = vadd.f32 %v2261, %v2313
    %v2338 = vadd.f32 %v2262, %v2315
    %v2339 = vadd.f32 %v2263, %v2318
    %v2340 = vadd.f32 %v2264, %v2320
    %v2341 = vadd.f32 %v2265, %v2323
    %v2342 = vadd.f32 %v2266, %v2325
    %v2344 = vunpack.c.l.b16 %v359
    %v2345 = vpack.c.b16 %v2344, %v1564
    %s2346 = scalar_lea.vmem %s1, 92
    %v2347 = vld [vmem:[%s2346] sm:$0xf]
    %v2349 = vsel %vm402, %v2345, 0
    %v2352 = vsel %vm72, %v2347, 0
    %2354 = vmatpush.bf16.msra.mxu0 0
    %2355 = vmatpush.bf16.msra.mxu0 0
    %2356 = vmatpush.bf16.msra.mxu0 0
    %2357 = vmatpush.bf16.msra.mxu0 0
    %2358 = vmatpush.bf16.msra.mxu0 0
    %2359 = vmatpush.bf16.msra.mxu0 0
    %2360 = vmatpush.bf16.msra.mxu0 0
    %2361 = vmatpush.bf16.msra.mxu0 %v2352
    %2362 = vmatmul.bf16.gmra.mxu0 %v623
    %v2363 = vpop.f32.mrf.mxu0
    %v2364 = vadd.f32 0.0, %v2363
    %v2365 = vpop.f32.mrf.mxu0
    %v2366 = vadd.f32 0.0, %v2365
    %2367 = vmatmul.bf16.gmra.mxu0 %v1887
    %v2368 = vpop.f32.mrf.mxu0
    %v2369 = vadd.f32 0.0, %v2368
    %v2370 = vpop.f32.mrf.mxu0
    %v2371 = vadd.f32 0.0, %v2370
    %2372 = vmatmul.bf16.gmra.mxu0 %v725
    %v2373 = vpop.f32.mrf.mxu0
    %v2374 = vadd.f32 0.0, %v2373
    %v2375 = vpop.f32.mrf.mxu0
    %v2376 = vadd.f32 0.0, %v2375
    %2377 = vmatmul.bf16.gmra.mxu0 %v1963
    %v2378 = vpop.f32.mrf.mxu0
    %v2379 = vadd.f32 0.0, %v2378
    %v2380 = vpop.f32.mrf.mxu0
    %v2381 = vadd.f32 0.0, %v2380
    %2382 = vmatmul.bf16.gmra.mxu0 %v629
    %v2383 = vpop.f32.mrf.mxu0
    %v2384 = vadd.f32 0.0, %v2383
    %v2385 = vpop.f32.mrf.mxu0
    %v2386 = vadd.f32 0.0, %v2385
    %2387 = vmatmul.bf16.gmra.mxu0 %v2273
    %v2388 = vpop.f32.mrf.mxu0
    %v2389 = vadd.f32 0.0, %v2388
    %v2390 = vpop.f32.mrf.mxu0
    %v2391 = vadd.f32 0.0, %v2390
    %2392 = vmatmul.bf16.gmra.mxu0 %v731
    %v2393 = vpop.f32.mrf.mxu0
    %v2394 = vadd.f32 0.0, %v2393
    %v2395 = vpop.f32.mrf.mxu0
    %v2396 = vadd.f32 0.0, %v2395
    %2397 = vmatmul.bf16.gmra.mxu0 %v2349
    %v2398 = vpop.f32.mrf.mxu0
    %v2399 = vadd.f32 0.0, %v2398
    %v2400 = vpop.f32.mrf.mxu0
    %v2401 = vadd.f32 0.0, %v2400
    %2402 = vdwg.mxu0
    %v2403 = vadd.f32 %v2327, %v2364
    %v2404 = vadd.f32 %v2328, %v2366
    %v2405 = vadd.f32 %v2329, %v2369
    %v2406 = vadd.f32 %v2330, %v2371
    %v2407 = vadd.f32 %v2331, %v2374
    %v2408 = vadd.f32 %v2332, %v2376
    %v2409 = vadd.f32 %v2333, %v2379
    %v2410 = vadd.f32 %v2334, %v2381
    %v2411 = vadd.f32 %v2335, %v2384
    %v2412 = vadd.f32 %v2336, %v2386
    %v2413 = vadd.f32 %v2337, %v2389
    %v2414 = vadd.f32 %v2338, %v2391
    %v2415 = vadd.f32 %v2339, %v2394
    %v2416 = vadd.f32 %v2340, %v2396
    %v2417 = vadd.f32 %v2341, %v2399
    %v2418 = vadd.f32 %v2342, %v2401
    %v2420 = vunpack.c.l.b16 %v360
    %v2421 = vpack.c.b16 %v2420, %v1644
    %s2422 = scalar_lea.vmem %s1, 96
    %v2423 = vld [vmem:[%s2422] sm:$0xf]
    %v2425 = vsel %vm402, %v2421, 0
    %v2428 = vsel %vm72, %v2423, 0
    %2430 = vmatpush.bf16.msra.mxu0 0
    %2431 = vmatpush.bf16.msra.mxu0 0
    %2432 = vmatpush.bf16.msra.mxu0 0
    %2433 = vmatpush.bf16.msra.mxu0 0
    %2434 = vmatpush.bf16.msra.mxu0 0
    %2435 = vmatpush.bf16.msra.mxu0 0
    %2436 = vmatpush.bf16.msra.mxu0 0
    %2437 = vmatpush.bf16.msra.mxu0 %v2428
    %2438 = vmatmul.bf16.gmra.mxu0 %v725
    %v2439 = vpop.f32.mrf.mxu0
    %v2440 = vadd.f32 0.0, %v2439
    %v2441 = vpop.f32.mrf.mxu0
    %v2442 = vadd.f32 0.0, %v2441
    %2443 = vmatmul.bf16.gmra.mxu0 %v1963
    %v2444 = vpop.f32.mrf.mxu0
    %v2445 = vadd.f32 0.0, %v2444
    %v2446 = vpop.f32.mrf.mxu0
    %v2447 = vadd.f32 0.0, %v2446
    %2448 = vmatmul.bf16.gmra.mxu0 %v827
    %v2449 = vpop.f32.mrf.mxu0
    %v2450 = vadd.f32 0.0, %v2449
    %v2451 = vpop.f32.mrf.mxu0
    %v2452 = vadd.f32 0.0, %v2451
    %2453 = vmatmul.bf16.gmra.mxu0 %v2039
    %v2454 = vpop.f32.mrf.mxu0
    %v2455 = vadd.f32 0.0, %v2454
    %v2456 = vpop.f32.mrf.mxu0
    %v2457 = vadd.f32 0.0, %v2456
    %2458 = vmatmul.bf16.gmra.mxu0 %v731
    %v2459 = vpop.f32.mrf.mxu0
    %v2460 = vadd.f32 0.0, %v2459
    %v2461 = vpop.f32.mrf.mxu0
    %v2462 = vadd.f32 0.0, %v2461
    %2463 = vmatmul.bf16.gmra.mxu0 %v2349
    %v2464 = vpop.f32.mrf.mxu0
    %v2465 = vadd.f32 0.0, %v2464
    %v2466 = vpop.f32.mrf.mxu0
    %v2467 = vadd.f32 0.0, %v2466
    %2468 = vmatmul.bf16.gmra.mxu0 %v833
    %v2469 = vpop.f32.mrf.mxu0
    %v2470 = vadd.f32 0.0, %v2469
    %v2471 = vpop.f32.mrf.mxu0
    %v2472 = vadd.f32 0.0, %v2471
    %2473 = vmatmul.bf16.gmra.mxu0 %v2425
    %v2474 = vpop.f32.mrf.mxu0
    %v2475 = vadd.f32 0.0, %v2474
    %v2476 = vpop.f32.mrf.mxu0
    %v2477 = vadd.f32 0.0, %v2476
    %2478 = vdwg.mxu0
    %v2479 = vadd.f32 %v2403, %v2440
    %v2480 = vadd.f32 %v2404, %v2442
    %v2481 = vadd.f32 %v2405, %v2445
    %v2482 = vadd.f32 %v2406, %v2447
    %v2483 = vadd.f32 %v2407, %v2450
    %v2484 = vadd.f32 %v2408, %v2452
    %v2485 = vadd.f32 %v2409, %v2455
    %v2486 = vadd.f32 %v2410, %v2457
    %v2487 = vadd.f32 %v2411, %v2460
    %v2488 = vadd.f32 %v2412, %v2462
    %v2489 = vadd.f32 %v2413, %v2465
    %v2490 = vadd.f32 %v2414, %v2467
    %v2491 = vadd.f32 %v2415, %v2470
    %v2492 = vadd.f32 %v2416, %v2472
    %v2493 = vadd.f32 %v2417, %v2475
    %v2494 = vadd.f32 %v2418, %v2477
    %v2495 = vmax.f32 %v2479, %v2483
    %v2496 = vmax.f32 %v2480, %v2484
    %v2497 = vmax.f32 %v2481, %v2485
    %v2498 = vmax.f32 %v2482, %v2486
    %v2499 = vmax.f32 %v2487, %v2491
    %v2500 = vmax.f32 %v2488, %v2492
    %v2501 = vmax.f32 %v2489, %v2493
    %v2502 = vmax.f32 %v2490, %v2494
    %v2503 = vmax.f32 %v2495, %v2499
    %v2504 = vmax.f32 %v2496, %v2500
    %v2505 = vmax.f32 %v2497, %v2501
    %v2506 = vmax.f32 %v2498, %v2502
    %v2507 = vld [vmem:[%s2] sm:$0x1]
    %v2509 = vperm.slane %v2507, 0
    %v2511 = vadd.f32 %v2503, %v2509
    %v2512 = vadd.f32 %v2504, %v2509
    %v2513 = vadd.f32 %v2505, %v2509
    %v2514 = vadd.f32 %v2506, %v2509
    %v2515 = vmax.f32 %v2511, 0.0
    %v2516 = vmax.f32 %v2512, 0.0
    %v2517 = vmax.f32 %v2513, 0.0
    %v2518 = vmax.f32 %v2514, 0.0
    %v2519 = vpack.c.bf16 %v2515, %v2515
    %v2520 = vld [vmem:[%s3] sm:$0xf]
    %v2521 = vld [vmem:[%s3 + $0x4] sm:$0xf]
    %s2522 = scalar_lea.vmem %s3, 8
    %v2523 = vld [vmem:[%s2522] sm:$0xf]
    %v2524 = vld [vmem:[%s2522 + $0x4] sm:$0xf]
    %v2526 = vrot.slane %v2519, 1
    %v2529 = vunpack.c.l.b16 %v2523
    %v2530 = vunpack.c.l.b16 %v2524
    %v2531 = vpack.c.b16 %v2530, %v2529
    %vm2533 = vcmask 130048
    %v2535 = vsel %vm2533, %v2526, 0
    %2537 = vmatpush.bf16.msra.mxu0 0
    %2538 = vmatpush.bf16.msra.mxu0 0
    %2539 = vmatpush.bf16.msra.mxu0 0
    %2540 = vmatpush.bf16.msra.mxu0 0
    %2541 = vmatpush.bf16.msra.mxu0 0
    %2542 = vmatpush.bf16.msra.mxu0 0
    %2543 = vmatpush.bf16.msra.mxu0 0
    %2544 = vmatpush.bf16.msra.mxu0 %v2531
    %2545 = vmatmul.bf16.gmra.mxu0 %v2535
    %v2546 = vpop.f32.mrf.mxu0
    %v2547 = vadd.f32 0.0, %v2546
    %v2548 = vpop.f32.mrf.mxu0
    %2549 = vdwg.mxu0
    %v2552 = vunpack.c.l.b16 %v2520
    %v2553 = vunpack.c.l.b16 %v2521
    %v2554 = vpack.c.b16 %v2553, %v2552
    %v2557 = vsel %vm2533, %v2519, 0
    %2559 = vmatpush.bf16.msra.mxu0 0
    %2560 = vmatpush.bf16.msra.mxu0 0
    %2561 = vmatpush.bf16.msra.mxu0 0
    %2562 = vmatpush.bf16.msra.mxu0 0
    %2563 = vmatpush.bf16.msra.mxu0 0
    %2564 = vmatpush.bf16.msra.mxu0 0
    %2565 = vmatpush.bf16.msra.mxu0 0
    %2566 = vmatpush.bf16.msra.mxu0 %v2554
    %2567 = vmatmul.bf16.gmra.mxu0 %v2557
    %v2568 = vpop.f32.mrf.mxu0
    %v2569 = vadd.f32 %v2547, %v2568
    %v2570 = vpop.f32.mrf.mxu0
    %2571 = vdwg.mxu0
    %s2572 = scalar_lea.vmem %s3, 16
    %v2573 = vld [vmem:[%s2572] sm:$0xf]
    %v2574 = vld [vmem:[%s2572 + $0x4] sm:$0xf]
    %v2575 = vrot.slane %v2519, 2
    %v2578 = vunpack.c.l.b16 %v2573
    %v2579 = vunpack.c.l.b16 %v2574
    %v2580 = vpack.c.b16 %v2579, %v2578
    %v2583 = vsel %vm2533, %v2575, 0
    %2585 = vmatpush.bf16.msra.mxu0 0
    %2586 = vmatpush.bf16.msra.mxu0 0
    %2587 = vmatpush.bf16.msra.mxu0 0
    %2588 = vmatpush.bf16.msra.mxu0 0
    %2589 = vmatpush.bf16.msra.mxu0 0
    %2590 = vmatpush.bf16.msra.mxu0 0
    %2591 = vmatpush.bf16.msra.mxu0 0
    %2592 = vmatpush.bf16.msra.mxu0 %v2580
    %2593 = vmatmul.bf16.gmra.mxu0 %v2583
    %v2594 = vpop.f32.mrf.mxu0
    %v2595 = vadd.f32 0.0, %v2594
    %v2596 = vpop.f32.mrf.mxu0
    %2597 = vdwg.mxu0
    %v2598 = vadd.f32 %v2569, %v2595
    %s2599 = scalar_lea.vmem %s3, 24
    %v2600 = vld [vmem:[%s2599] sm:$0xf]
    %v2601 = vld [vmem:[%s2599 + $0x4] sm:$0xf]
    %v2602 = vrot.slane %v2519, 3
    %v2605 = vunpack.c.l.b16 %v2600
    %v2606 = vunpack.c.l.b16 %v2601
    %v2607 = vpack.c.b16 %v2606, %v2605
    %v2610 = vsel %vm2533, %v2602, 0
    %2612 = vmatpush.bf16.msra.mxu0 0
    %2613 = vmatpush.bf16.msra.mxu0 0
    %2614 = vmatpush.bf16.msra.mxu0 0
    %2615 = vmatpush.bf16.msra.mxu0 0
    %2616 = vmatpush.bf16.msra.mxu0 0
    %2617 = vmatpush.bf16.msra.mxu0 0
    %2618 = vmatpush.bf16.msra.mxu0 0
    %2619 = vmatpush.bf16.msra.mxu0 %v2607
    %2620 = vmatmul.bf16.gmra.mxu0 %v2610
    %v2621 = vpop.f32.mrf.mxu0
    %v2622 = vadd.f32 0.0, %v2621
    %v2623 = vpop.f32.mrf.mxu0
    %2624 = vdwg.mxu0
    %v2625 = vadd.f32 %v2598, %v2622
    %v2626 = vpack.c.bf16 %v2516, %v2516
    %s2627 = scalar_lea.vmem %s3, 32
    %v2628 = vld [vmem:[%s2627] sm:$0xf]
    %v2629 = vld [vmem:[%s2627 + $0x4] sm:$0xf]
    %v2632 = vunpack.c.l.b16 %v2628
    %v2633 = vunpack.c.l.b16 %v2629
    %v2634 = vpack.c.b16 %v2633, %v2632
    %v2637 = vsel %vm2533, %v2626, 0
    %2639 = vmatpush.bf16.msra.mxu0 0
    %2640 = vmatpush.bf16.msra.mxu0 0
    %2641 = vmatpush.bf16.msra.mxu0 0
    %2642 = vmatpush.bf16.msra.mxu0 0
    %2643 = vmatpush.bf16.msra.mxu0 0
    %2644 = vmatpush.bf16.msra.mxu0 0
    %2645 = vmatpush.bf16.msra.mxu0 0
    %2646 = vmatpush.bf16.msra.mxu0 %v2634
    %2647 = vmatmul.bf16.gmra.mxu0 %v2637
    %v2648 = vpop.f32.mrf.mxu0
    %v2649 = vadd.f32 0.0, %v2648
    %v2650 = vpop.f32.mrf.mxu0
    %2651 = vdwg.mxu0
    %v2652 = vadd.f32 %v2625, %v2649
    %s2653 = scalar_lea.vmem %s3, 40
    %v2654 = vld [vmem:[%s2653] sm:$0xf]
    %v2655 = vld [vmem:[%s2653 + $0x4] sm:$0xf]
    %v2657 = vrot.slane %v2626, 1
    %v2660 = vunpack.c.l.b16 %v2654
    %v2661 = vunpack.c.l.b16 %v2655
    %v2662 = vpack.c.b16 %v2661, %v2660
    %v2665 = vsel %vm2533, %v2657, 0
    %2667 = vmatpush.bf16.msra.mxu0 0
    %2668 = vmatpush.bf16.msra.mxu0 0
    %2669 = vmatpush.bf16.msra.mxu0 0
    %2670 = vmatpush.bf16.msra.mxu0 0
    %2671 = vmatpush.bf16.msra.mxu0 0
    %2672 = vmatpush.bf16.msra.mxu0 0
    %2673 = vmatpush.bf16.msra.mxu0 0
    %2674 = vmatpush.bf16.msra.mxu0 %v2662
    %2675 = vmatmul.bf16.gmra.mxu0 %v2665
    %v2676 = vpop.f32.mrf.mxu0
    %v2677 = vadd.f32 0.0, %v2676
    %v2678 = vpop.f32.mrf.mxu0
    %2679 = vdwg.mxu0
    %v2680 = vadd.f32 %v2652, %v2677
    %s2681 = scalar_lea.vmem %s3, 48
    %v2682 = vld [vmem:[%s2681] sm:$0xf]
    %v2683 = vld [vmem:[%s2681 + $0x4] sm:$0xf]
    %v2684 = vrot.slane %v2626, 2
    %v2687 = vunpack.c.l.b16 %v2682
    %v2688 = vunpack.c.l.b16 %v2683
    %v2689 = vpack.c.b16 %v2688, %v2687
    %v2692 = vsel %vm2533, %v2684, 0
    %2694 = vmatpush.bf16.msra.mxu0 0
    %2695 = vmatpush.bf16.msra.mxu0 0
    %2696 = vmatpush.bf16.msra.mxu0 0
    %2697 = vmatpush.bf16.msra.mxu0 0
    %2698 = vmatpush.bf16.msra.mxu0 0
    %2699 = vmatpush.bf16.msra.mxu0 0
    %2700 = vmatpush.bf16.msra.mxu0 0
    %2701 = vmatpush.bf16.msra.mxu0 %v2689
    %2702 = vmatmul.bf16.gmra.mxu0 %v2692
    %v2703 = vpop.f32.mrf.mxu0
    %v2704 = vadd.f32 0.0, %v2703
    %v2705 = vpop.f32.mrf.mxu0
    %2706 = vdwg.mxu0
    %v2707 = vadd.f32 %v2680, %v2704
    %s2708 = scalar_lea.vmem %s3, 56
    %v2709 = vld [vmem:[%s2708] sm:$0xf]
    %v2710 = vld [vmem:[%s2708 + $0x4] sm:$0xf]
    %v2711 = vrot.slane %v2626, 3
    %v2714 = vunpack.c.l.b16 %v2709
    %v2715 = vunpack.c.l.b16 %v2710
    %v2716 = vpack.c.b16 %v2715, %v2714
    %v2719 = vsel %vm2533, %v2711, 0
    %2721 = vmatpush.bf16.msra.mxu0 0
    %2722 = vmatpush.bf16.msra.mxu0 0
    %2723 = vmatpush.bf16.msra.mxu0 0
    %2724 = vmatpush.bf16.msra.mxu0 0
    %2725 = vmatpush.bf16.msra.mxu0 0
    %2726 = vmatpush.bf16.msra.mxu0 0
    %2727 = vmatpush.bf16.msra.mxu0 0
    %2728 = vmatpush.bf16.msra.mxu0 %v2716
    %2729 = vmatmul.bf16.gmra.mxu0 %v2719
    %v2730 = vpop.f32.mrf.mxu0
    %v2731 = vadd.f32 0.0, %v2730
    %v2732 = vpop.f32.mrf.mxu0
    %2733 = vdwg.mxu0
    %v2734 = vadd.f32 %v2707, %v2731
    %v2735 = vpack.c.bf16 %v2517, %v2517
    %s2736 = scalar_lea.vmem %s3, 64
    %v2737 = vld [vmem:[%s2736] sm:$0xf]
    %v2738 = vld [vmem:[%s2736 + $0x4] sm:$0xf]
    %v2741 = vunpack.c.l.b16 %v2737
    %v2742 = vunpack.c.l.b16 %v2738
    %v2743 = vpack.c.b16 %v2742, %v2741
    %v2746 = vsel %vm2533, %v2735, 0
    %2748 = vmatpush.bf16.msra.mxu0 0
    %2749 = vmatpush.bf16.msra.mxu0 0
    %2750 = vmatpush.bf16.msra.mxu0 0
    %2751 = vmatpush.bf16.msra.mxu0 0
    %2752 = vmatpush.bf16.msra.mxu0 0
    %2753 = vmatpush.bf16.msra.mxu0 0
    %2754 = vmatpush.bf16.msra.mxu0 0
    %2755 = vmatpush.bf16.msra.mxu0 %v2743
    %2756 = vmatmul.bf16.gmra.mxu0 %v2746
    %v2757 = vpop.f32.mrf.mxu0
    %v2758 = vadd.f32 0.0, %v2757
    %v2759 = vpop.f32.mrf.mxu0
    %2760 = vdwg.mxu0
    %v2761 = vadd.f32 %v2734, %v2758
    %s2762 = scalar_lea.vmem %s3, 72
    %v2763 = vld [vmem:[%s2762] sm:$0xf]
    %v2764 = vld [vmem:[%s2762 + $0x4] sm:$0xf]
    %v2766 = vrot.slane %v2735, 1
    %v2769 = vunpack.c.l.b16 %v2763
    %v2770 = vunpack.c.l.b16 %v2764
    %v2771 = vpack.c.b16 %v2770, %v2769
    %v2774 = vsel %vm2533, %v2766, 0
    %2776 = vmatpush.bf16.msra.mxu0 0
    %2777 = vmatpush.bf16.msra.mxu0 0
    %2778 = vmatpush.bf16.msra.mxu0 0
    %2779 = vmatpush.bf16.msra.mxu0 0
    %2780 = vmatpush.bf16.msra.mxu0 0
    %2781 = vmatpush.bf16.msra.mxu0 0
    %2782 = vmatpush.bf16.msra.mxu0 0
    %2783 = vmatpush.bf16.msra.mxu0 %v2771
    %2784 = vmatmul.bf16.gmra.mxu0 %v2774
    %v2785 = vpop.f32.mrf.mxu0
    %v2786 = vadd.f32 0.0, %v2785
    %v2787 = vpop.f32.mrf.mxu0
    %2788 = vdwg.mxu0
    %v2789 = vadd.f32 %v2761, %v2786
    %s2790 = scalar_lea.vmem %s3, 80
    %v2791 = vld [vmem:[%s2790] sm:$0xf]
    %v2792 = vld [vmem:[%s2790 + $0x4] sm:$0xf]
    %v2793 = vrot.slane %v2735, 2
    %v2796 = vunpack.c.l.b16 %v2791
    %v2797 = vunpack.c.l.b16 %v2792
    %v2798 = vpack.c.b16 %v2797, %v2796
    %v2801 = vsel %vm2533, %v2793, 0
    %2803 = vmatpush.bf16.msra.mxu0 0
    %2804 = vmatpush.bf16.msra.mxu0 0
    %2805 = vmatpush.bf16.msra.mxu0 0
    %2806 = vmatpush.bf16.msra.mxu0 0
    %2807 = vmatpush.bf16.msra.mxu0 0
    %2808 = vmatpush.bf16.msra.mxu0 0
    %2809 = vmatpush.bf16.msra.mxu0 0
    %2810 = vmatpush.bf16.msra.mxu0 %v2798
    %2811 = vmatmul.bf16.gmra.mxu0 %v2801
    %v2812 = vpop.f32.mrf.mxu0
    %v2813 = vadd.f32 0.0, %v2812
    %v2814 = vpop.f32.mrf.mxu0
    %2815 = vdwg.mxu0
    %v2816 = vadd.f32 %v2789, %v2813
    %s2817 = scalar_lea.vmem %s3, 88
    %v2818 = vld [vmem:[%s2817] sm:$0xf]
    %v2819 = vld [vmem:[%s2817 + $0x4] sm:$0xf]
    %v2820 = vrot.slane %v2735, 3
    %v2823 = vunpack.c.l.b16 %v2818
    %v2824 = vunpack.c.l.b16 %v2819
    %v2825 = vpack.c.b16 %v2824, %v2823
    %v2828 = vsel %vm2533, %v2820, 0
    %2830 = vmatpush.bf16.msra.mxu0 0
    %2831 = vmatpush.bf16.msra.mxu0 0
    %2832 = vmatpush.bf16.msra.mxu0 0
    %2833 = vmatpush.bf16.msra.mxu0 0
    %2834 = vmatpush.bf16.msra.mxu0 0
    %2835 = vmatpush.bf16.msra.mxu0 0
    %2836 = vmatpush.bf16.msra.mxu0 0
    %2837 = vmatpush.bf16.msra.mxu0 %v2825
    %2838 = vmatmul.bf16.gmra.mxu0 %v2828
    %v2839 = vpop.f32.mrf.mxu0
    %v2840 = vadd.f32 0.0, %v2839
    %v2841 = vpop.f32.mrf.mxu0
    %2842 = vdwg.mxu0
    %v2843 = vadd.f32 %v2816, %v2840
    %v2844 = vpack.c.bf16 %v2518, %v2518
    %s2845 = scalar_lea.vmem %s3, 96
    %v2846 = vld [vmem:[%s2845] sm:$0xf]
    %v2847 = vld [vmem:[%s2845 + $0x4] sm:$0xf]
    %v2850 = vunpack.c.l.b16 %v2846
    %v2851 = vunpack.c.l.b16 %v2847
    %v2852 = vpack.c.b16 %v2851, %v2850
    %v2855 = vsel %vm2533, %v2844, 0
    %2857 = vmatpush.bf16.msra.mxu0 0
    %2858 = vmatpush.bf16.msra.mxu0 0
    %2859 = vmatpush.bf16.msra.mxu0 0
    %2860 = vmatpush.bf16.msra.mxu0 0
    %2861 = vmatpush.bf16.msra.mxu0 0
    %2862 = vmatpush.bf16.msra.mxu0 0
    %2863 = vmatpush.bf16.msra.mxu0 0
    %2864 = vmatpush.bf16.msra.mxu0 %v2852
    %2865 = vmatmul.bf16.gmra.mxu0 %v2855
    %v2866 = vpop.f32.mrf.mxu0
    %v2867 = vadd.f32 0.0, %v2866
    %v2868 = vpop.f32.mrf.mxu0
    %2869 = vdwg.mxu0
    %v2870 = vadd.f32 %v2843, %v2867
    %s2871 = scalar_lea.vmem %s3, 104
    %v2872 = vld [vmem:[%s2871] sm:$0xf]
    %v2873 = vld [vmem:[%s2871 + $0x4] sm:$0xf]
    %v2875 = vrot.slane %v2844, 1
    %v2878 = vunpack.c.l.b16 %v2872
    %v2879 = vunpack.c.l.b16 %v2873
    %v2880 = vpack.c.b16 %v2879, %v2878
    %v2883 = vsel %vm2533, %v2875, 0
    %2885 = vmatpush.bf16.msra.mxu0 0
    %2886 = vmatpush.bf16.msra.mxu0 0
    %2887 = vmatpush.bf16.msra.mxu0 0
    %2888 = vmatpush.bf16.msra.mxu0 0
    %2889 = vmatpush.bf16.msra.mxu0 0
    %2890 = vmatpush.bf16.msra.mxu0 0
    %2891 = vmatpush.bf16.msra.mxu0 0
    %2892 = vmatpush.bf16.msra.mxu0 %v2880
    %2893 = vmatmul.bf16.gmra.mxu0 %v2883
    %v2894 = vpop.f32.mrf.mxu0
    %v2895 = vadd.f32 0.0, %v2894
    %v2896 = vpop.f32.mrf.mxu0
    %2897 = vdwg.mxu0
    %v2898 = vadd.f32 %v2870, %v2895
    %s2899 = scalar_lea.vmem %s3, 112
    %v2900 = vld [vmem:[%s2899] sm:$0xf]
    %v2901 = vld [vmem:[%s2899 + $0x4] sm:$0xf]
    %v2902 = vrot.slane %v2844, 2
    %v2905 = vunpack.c.l.b16 %v2900
    %v2906 = vunpack.c.l.b16 %v2901
    %v2907 = vpack.c.b16 %v2906, %v2905
    %v2910 = vsel %vm2533, %v2902, 0
    %2912 = vmatpush.bf16.msra.mxu0 0
    %2913 = vmatpush.bf16.msra.mxu0 0
    %2914 = vmatpush.bf16.msra.mxu0 0
    %2915 = vmatpush.bf16.msra.mxu0 0
    %2916 = vmatpush.bf16.msra.mxu0 0
    %2917 = vmatpush.bf16.msra.mxu0 0
    %2918 = vmatpush.bf16.msra.mxu0 0
    %2919 = vmatpush.bf16.msra.mxu0 %v2907
    %2920 = vmatmul.bf16.gmra.mxu0 %v2910
    %v2921 = vpop.f32.mrf.mxu0
    %v2922 = vadd.f32 0.0, %v2921
    %v2923 = vpop.f32.mrf.mxu0
    %2924 = vdwg.mxu0
    %v2925 = vadd.f32 %v2898, %v2922
    %s2926 = scalar_lea.vmem %s3, 120
    %v2927 = vld [vmem:[%s2926] sm:$0xf]
    %v2928 = vld [vmem:[%s2926 + $0x4] sm:$0xf]
    %v2929 = vrot.slane %v2844, 3
    %v2932 = vunpack.c.l.b16 %v2927
    %v2933 = vunpack.c.l.b16 %v2928
    %v2934 = vpack.c.b16 %v2933, %v2932
    %v2937 = vsel %vm2533, %v2929, 0
    %2939 = vmatpush.bf16.msra.mxu0 0
    %2940 = vmatpush.bf16.msra.mxu0 0
    %2941 = vmatpush.bf16.msra.mxu0 0
    %2942 = vmatpush.bf16.msra.mxu0 0
    %2943 = vmatpush.bf16.msra.mxu0 0
    %2944 = vmatpush.bf16.msra.mxu0 0
    %2945 = vmatpush.bf16.msra.mxu0 0
    %2946 = vmatpush.bf16.msra.mxu0 %v2934
    %2947 = vmatmul.bf16.gmra.mxu0 %v2937
    %v2948 = vpop.f32.mrf.mxu0
    %v2949 = vadd.f32 0.0, %v2948
    %v2950 = vpop.f32.mrf.mxu0
    %2951 = vdwg.mxu0
    %v2952 = vadd.f32 %v2925, %v2949
    %v2953 = vld [vmem:[%s4] sm:$0x1]
    %v2955 = vperm.slane %v2953, 0
    %v2957 = vadd.f32 %v2952, %v2955
    %v2958 = vmax.f32 %v2957, 0.0
    %v2959 = vpack.c.bf16 %v2958, %v2958
    %v2960 = vld [vmem:[%s5] sm:$0xf]
    %v2961 = vld [vmem:[%s5 + $0x4] sm:$0xf]
    %v2962 = vld [vmem:[%s5 + $0x8] sm:$0xf]
    %v2963 = vld [vmem:[%s5 + $0xc] sm:$0xf]
    %v2964 = vld [vmem:[%s5 + $0x10] sm:$0xf]
    %v2965 = vld [vmem:[%s5 + $0x14] sm:$0xf]
    %v2966 = vld [vmem:[%s5 + $0x18] sm:$0xf]
    %v2967 = vld [vmem:[%s5 + $0x1c] sm:$0xf]
    %v2968 = vld [vmem:[%s5 + $0x20] sm:$0xf]
    %v2969 = vld [vmem:[%s5 + $0x24] sm:$0xf]
    %v2970 = vld [vmem:[%s5 + $0x28] sm:$0xf]
    %v2971 = vld [vmem:[%s5 + $0x2c] sm:$0xf]
    %v2972 = vld [vmem:[%s5 + $0x30] sm:$0xf]
    %v2973 = vld [vmem:[%s5 + $0x34] sm:$0xf]
    %v2974 = vld [vmem:[%s5 + $0x38] sm:$0xf]
    %v2975 = vld [vmem:[%s5 + $0x3c] sm:$0xf]
    %v2976 = vld [vmem:[%s6] sm:$0x1]
    %v2978 = vperm.slane %v2976, 0
    %v2996 = vunpack.c.l.b16 %v2960
    %v2997 = vunpack.c.l.b16 %v2961
    %v2998 = vunpack.c.l.b16 %v2962
    %v2999 = vunpack.c.l.b16 %v2963
    %v3000 = vunpack.c.l.b16 %v2964
    %v3001 = vunpack.c.l.b16 %v2965
    %v3002 = vunpack.c.l.b16 %v2966
    %v3003 = vunpack.c.l.b16 %v2967
    %v3004 = vunpack.c.l.b16 %v2968
    %v3005 = vunpack.c.l.b16 %v2969
    %v3006 = vunpack.c.l.b16 %v2970
    %v3007 = vunpack.c.l.b16 %v2971
    %v3008 = vunpack.c.l.b16 %v2972
    %v3009 = vunpack.c.l.b16 %v2973
    %v3010 = vunpack.c.l.b16 %v2974
    %v3011 = vunpack.c.l.b16 %v2975
    %v3012 = vpack.c.b16 %v2997, %v2996
    %v3013 = vpack.c.b16 %v2999, %v2998
    %v3014 = vpack.c.b16 %v3001, %v3000
    %v3015 = vpack.c.b16 %v3003, %v3002
    %v3016 = vpack.c.b16 %v3005, %v3004
    %v3017 = vpack.c.b16 %v3007, %v3006
    %v3018 = vpack.c.b16 %v3009, %v3008
    %v3019 = vpack.c.b16 %v3011, %v3010
    %3028 = vmatpush.bf16.msra.mxu0 %v3019
    %3029 = vmatpush.bf16.msra.mxu0 %v3018
    %3030 = vmatpush.bf16.msra.mxu0 %v3017
    %3031 = vmatpush.bf16.msra.mxu0 %v3016
    %3032 = vmatpush.bf16.msra.mxu0 %v3015
    %3033 = vmatpush.bf16.msra.mxu0 %v3014
    %3034 = vmatpush.bf16.msra.mxu0 %v3013
    %3035 = vmatpush.bf16.msra.mxu0 %v3012
    %3036 = vmatmul.bf16.gmra.mxu0 %v2959
    %v3037 = vpop.f32.mrf.mxu0
    %v3038 = vadd.f32 %v2978, %v3037
    %v3039 = vpop.f32.mrf.mxu0
    %3040 = vdwg.mxu0
    %v3041 = vmax.f32 %v3038, 0.0
    %v3042 = vpack.c.bf16 %v3041, %v3041
    %v3043 = vld [vmem:[%s7] sm:$0xf]
    %v3044 = vld [vmem:[%s7 + $0x4] sm:$0xf]
    %v3045 = vld [vmem:[%s7 + $0x8] sm:$0xf]
    %v3046 = vld [vmem:[%s7 + $0xc] sm:$0xf]
    %v3047 = vld [vmem:[%s7 + $0x10] sm:$0xf]
    %v3048 = vld [vmem:[%s7 + $0x14] sm:$0xf]
    %v3049 = vld [vmem:[%s7 + $0x18] sm:$0xf]
    %v3050 = vld [vmem:[%s7 + $0x1c] sm:$0xf]
    %v3051 = vld [vmem:[%s7 + $0x20] sm:$0xf]
    %v3052 = vld [vmem:[%s7 + $0x24] sm:$0xf]
    %v3053 = vld [vmem:[%s7 + $0x28] sm:$0xf]
    %v3054 = vld [vmem:[%s7 + $0x2c] sm:$0xf]
    %v3055 = vld [vmem:[%s7 + $0x30] sm:$0xf]
    %v3056 = vld [vmem:[%s7 + $0x34] sm:$0xf]
    %v3057 = vld [vmem:[%s7 + $0x38] sm:$0xf]
    %v3058 = vld [vmem:[%s7 + $0x3c] sm:$0xf]
    %v3059 = vld [vmem:[%s8] sm:$0x1]
    %v3061 = vperm.slane %v3059, 0
    %v3079 = vunpack.c.l.b16 %v3043
    %v3080 = vunpack.c.l.b16 %v3044
    %v3081 = vunpack.c.l.b16 %v3045
    %v3082 = vunpack.c.l.b16 %v3046
    %v3083 = vunpack.c.l.b16 %v3047
    %v3084 = vunpack.c.l.b16 %v3048
    %v3085 = vunpack.c.l.b16 %v3049
    %v3086 = vunpack.c.l.b16 %v3050
    %v3087 = vunpack.c.l.b16 %v3051
    %v3088 = vunpack.c.l.b16 %v3052
    %v3089 = vunpack.c.l.b16 %v3053
    %v3090 = vunpack.c.l.b16 %v3054
    %v3091 = vunpack.c.l.b16 %v3055
    %v3092 = vunpack.c.l.b16 %v3056
    %v3093 = vunpack.c.l.b16 %v3057
    %v3094 = vunpack.c.l.b16 %v3058
    %v3095 = vpack.c.b16 %v3080, %v3079
    %v3096 = vpack.c.b16 %v3082, %v3081
    %v3097 = vpack.c.b16 %v3084, %v3083
    %v3098 = vpack.c.b16 %v3086, %v3085
    %v3099 = vpack.c.b16 %v3088, %v3087
    %v3100 = vpack.c.b16 %v3090, %v3089
    %v3101 = vpack.c.b16 %v3092, %v3091
    %v3102 = vpack.c.b16 %v3094, %v3093
    %3111 = vmatpush.bf16.msra.mxu0 %v3102
    %3112 = vmatpush.bf16.msra.mxu0 %v3101
    %3113 = vmatpush.bf16.msra.mxu0 %v3100
    %3114 = vmatpush.bf16.msra.mxu0 %v3099
    %3115 = vmatpush.bf16.msra.mxu0 %v3098
    %3116 = vmatpush.bf16.msra.mxu0 %v3097
    %3117 = vmatpush.bf16.msra.mxu0 %v3096
    %3118 = vmatpush.bf16.msra.mxu0 %v3095
    %3119 = vmatmul.bf16.gmra.mxu0 %v3042
    %v3120 = vpop.f32.mrf.mxu0
    %v3121 = vadd.f32 %v3061, %v3120
    %v3122 = vpop.f32.mrf.mxu0
    %3123 = vdwg.mxu0
    %3124 = vst [vmem:[#allocation2] sm:$0x3] %v3121
    // Predicated region
    $region38: #{lenet_forward.3} parent=1 // pred_check
      _
    $region39: #{lenet_forward.3} parent=1 // pred_check_branch
      %3126 = sbr.rel (0) target = $region41
    $region40: #{lenet_forward.3} parent=1 // pred_region
      %3128 = vsyncadd [#allocation3], 0
      %s3130 = sshll.u32 [#allocation2], 4
      %s3131 = int_to_ptr.vmem [resolvable:$true] %s3130
      %s3132 = sshll.u32 %s9, 4
      %s3133 = int_to_ptr.hbm [resolvable:$true] %s3132
      %3135 = dma.vmem_to_hbm [thread:$0]  %s3131, 32, %s3133, [#allocation3]
    $region41: #{lenet_forward.3} parent=1 // pred_fallthru
      _
    // Predicated region
    $region42: #{lenet_forward.3} parent=1 // pred_check
      _
    $region43: #{lenet_forward.3} parent=1 // pred_check_branch
      %3137 = sbr.rel (0) target = $region45
    $region44: #{lenet_forward.3} parent=1 // pred_region
      %3139 = dma.done [#allocation3], 32
    $region45: #{lenet_forward.3} parent=1 // pred_fallthru
      _
    %3140 = vsyncpa [#allocation3], 1

</llo_original>
